<compile_context>
chip_gen: v5e
topology: v5e:2x2
jax: 0.10.0
libtpu: 0.0.40
codegen_flags: <defaults>
</compile_context>

<pallas_src>
import functools

import jax
import jax.numpy as jnp
from jax import lax
from jax.experimental import pallas as pl
from jax.experimental.pallas import tpu as pltpu


def _vq_kernel(x_ref, e_ref, esq_ref, q_ref, idx_ref, enc_ref, sse_ref, *,
               num_embeddings, n_rows, tile_n, use_bf16_matmul):
    """One N-tile of vector quantization.

    x_ref:   [TN, D]    inputs tile
    e_ref:   [K,  D]    full codebook (grid-invariant)
    esq_ref: [1,  K]    precomputed ||e||^2 (grid-invariant)
    q_ref:   [TN, D]    quantized outputs
    idx_ref: [TN, 1]    int32 nearest-code indices
    enc_ref: [1, 1, K]  per-tile column sums of the one-hot encodings
    sse_ref: [1, 1, D]  per-tile partial sums of (q - x)^2
    """
    x = x_ref[...]                                            # [TN, D] f32
    e = e_ref[...]                                            # [K, D]  f32
    e_sq = esq_ref[...]                                       # [1, K]

    # distances up to the row-constant ||x||^2 term (argmin-invariant):
    #   d = ||e||^2 - 2 * x @ e.T
    # dot_general contracts the last dims of both operands -> MXU-native,
    # no per-iteration transpose of the codebook.
    if use_bf16_matmul:
        dots = lax.dot_general(
            x.astype(jnp.bfloat16), e.astype(jnp.bfloat16),
            dimension_numbers=(((1,), (1,)), ((), ())),
            preferred_element_type=jnp.float32)
    else:
        dots = lax.dot_general(
            x, e,
            dimension_numbers=(((1,), (1,)), ((), ())),
            preferred_element_type=jnp.float32)
    d = e_sq - 2.0 * dots                                     # [TN, K]

    # argmin over K (first occurrence on ties, like jnp/torch argmin)
    d_min = jnp.min(d, axis=1, keepdims=True)                 # [TN, 1]
    iota_k = lax.broadcasted_iota(jnp.int32, d.shape, 1)      # [TN, K]
    cand = jnp.where(d == d_min, iota_k, num_embeddings)      # [TN, K]
    idx = jnp.min(cand, axis=1, keepdims=True)                # [TN, 1] int32

    # one-hot encodings and re-quantization (kept f32 so quantized rows are
    # exact codebook rows regardless of the bf16 distance flag)
    onehot = (iota_k == idx).astype(jnp.float32)              # [TN, K]
    q = jnp.dot(onehot, e, preferred_element_type=jnp.float32)  # [TN, D]

    # validity mask for a possibly-partial last tile
    row0 = pl.program_id(0) * tile_n
    rows = row0 + lax.broadcasted_iota(jnp.int32, (tile_n, 1), 0)
    valid = rows < n_rows                                     # [TN, 1] bool

    q_ref[...] = q
    idx_ref[...] = idx

    # fused per-tile partial reductions (tiny outputs; the wrapper never
    # re-reads [N, K] or [N, D] arrays from HBM for the scalar results)
    onehot_v = jnp.where(valid, onehot, 0.0)
    enc_ref[...] = jnp.sum(onehot_v, axis=0, keepdims=True)[None]   # [1, 1, K]
    dq = q - x
    diff2 = jnp.where(valid, dq * dq, 0.0)
    sse_ref[...] = jnp.sum(diff2, axis=0, keepdims=True)[None]      # [1, 1, D]


def vector_quantizer_forward(inputs, embedding_weight, commitment_cost, *,
                             tile_n=512, use_bf16_matmul=False):
    """Eval-mode forward of VectorQuantizerEMA.

    inputs:           [N, D] float32 (channels-last flattened activations)
    embedding_weight: [K, D] float32
    Returns (loss, quantized, perplexity, encoding_indices) matching the
    PyTorch module (encoding_indices has shape [N, 1], int32).
    """
    N, D = inputs.shape
    K, D2 = embedding_weight.shape
    assert D == D2
    assert N >= 8

    # clamp tile to the problem; sublane dim must stay a multiple of 8
    tile_n = max(8, min(int(tile_n), N))
    tile_n -= tile_n % 8
    num_tiles = (N + tile_n - 1) // tile_n

    # ||e||^2 hoisted out of the grid loop (grid-invariant)
    e_sq = jnp.sum(embedding_weight * embedding_weight, axis=1)[None, :]  # [1,K]

    kernel = functools.partial(
        _vq_kernel, num_embeddings=K, n_rows=N, tile_n=tile_n,
        use_bf16_matmul=use_bf16_matmul)

    # explicit VMEM budget: double-buffered ins/outs + [TN, K] temporaries,
    # capped comfortably below the 64 MiB per-core VMEM of v7x.
    est_bytes = 4 * (2 * (tile_n * D + K * D + K)         # inputs (double buffered)
                     + 2 * (tile_n * D + tile_n + K + D)  # outputs
                     + 4 * tile_n * K)                    # d / cand / onehot temps
    vmem_limit = int(min(max(8 * 2**20, 2 * est_bytes), 48 * 2**20))

    quantized, indices, enc_sums, sse_partials = pl.pallas_call(
        kernel,
        out_shape=(
            jax.ShapeDtypeStruct((N, D), jnp.float32),
            jax.ShapeDtypeStruct((N, 1), jnp.int32),
            jax.ShapeDtypeStruct((num_tiles, 1, K), jnp.float32),
            jax.ShapeDtypeStruct((num_tiles, 1, D), jnp.float32),
        ),
        grid_spec=pltpu.PrefetchScalarGridSpec(
            num_scalar_prefetch=0,
            grid=(num_tiles,),
            in_specs=[
                pl.BlockSpec((tile_n, D), lambda i: (i, 0)),   # x tile
                pl.BlockSpec((K, D), lambda i: (0, 0)),        # codebook (invariant)
                pl.BlockSpec((1, K), lambda i: (0, 0)),        # ||e||^2 (invariant)
            ],
            out_specs=[
                pl.BlockSpec((tile_n, D), lambda i: (i, 0)),
                pl.BlockSpec((tile_n, 1), lambda i: (i, 0)),
                pl.BlockSpec((1, 1, K), lambda i: (i, 0, 0)),
                pl.BlockSpec((1, 1, D), lambda i: (i, 0, 0)),
            ],
        ),
        compiler_params=pltpu.CompilerParams(
            dimension_semantics=("parallel",),
            vmem_limit_bytes=vmem_limit),
    )(inputs, embedding_weight, e_sq)

    # --- cheap scalar glue on the tiny per-tile partials ---
    counts = jnp.sum(enc_sums, axis=(0, 1))                # [K] code-usage counts
    avg_probs = counts / N
    perplexity = jnp.exp(-jnp.sum(avg_probs * jnp.log(avg_probs + 1e-10)))

    e_latent_loss = jnp.sum(sse_partials) / (N * D)        # mse(quantized, inputs)
    loss = commitment_cost * e_latent_loss

    # straight-through estimator: forward value equals `quantized`
    quantized_st = inputs + lax.stop_gradient(quantized - inputs)
    return loss, quantized_st, perplexity, indices


def _reference_forward(inputs, embedding_weight, commitment_cost):
    """Pure-JAX reference mirroring the PyTorch eval forward."""
    d = (jnp.sum(inputs ** 2, axis=1, keepdims=True)
         + jnp.sum(embedding_weight ** 2, axis=1)
         - 2.0 * inputs @ embedding_weight.T)
    idx = jnp.argmin(d, axis=1)
    enc = jax.nn.one_hot(idx, embedding_weight.shape[0], dtype=jnp.float32)
    q = enc @ embedding_weight
    loss = commitment_cost * jnp.mean((q - inputs) ** 2)
    avg_probs = jnp.mean(enc, axis=0)
    perplexity = jnp.exp(-jnp.sum(avg_probs * jnp.log(avg_probs + 1e-10)))
    return loss, q, perplexity, idx[:, None].astype(jnp.int32)


if __name__ == "__main__":
    # Module hyperparameters (synthetic, deterministic init).
    num_embeddings = 128      # K
    embedding_dim = 64        # D  (matches indices2quantized's view(..., 64))
    commitment_cost = 0.25
    # decay / epsilon only matter for the (unimplemented) training EMA path.

    # Inputs: batch=2, spatial 16x16 feature map with embedding_dim channels,
    # flattened channels-last -> N = 2*16*16 = 512 rows of dimension D.
    batch, h, w = 2, 16, 16
    key = jax.random.PRNGKey(0)
    k_x, k_e = jax.random.split(key)
    x_nchw = jax.random.normal(k_x, (batch, embedding_dim, h, w), jnp.float32)
    inputs = jnp.transpose(x_nchw, (0, 2, 3, 1)).reshape(-1, embedding_dim)
    embedding_weight = jax.random.normal(
        k_e, (num_embeddings, embedding_dim), jnp.float32)  # weight.data.normal_()

    r_loss, r_q, r_ppl, r_idx = _reference_forward(
        inputs, embedding_weight, commitment_cost)

    # full-tile, multi-tile, and ragged-last-tile (masking) configurations
    for tn in (512, 128, 200):
        out = vector_quantizer_forward(
            inputs, embedding_weight, commitment_cost, tile_n=tn)
        jax.block_until_ready(out)
        loss, quantized, perplexity, indices = out
        assert jnp.allclose(loss, r_loss, atol=1e-4, rtol=1e-4), (tn, loss, r_loss)
        assert jnp.allclose(quantized, r_q, atol=1e-4), tn
        assert jnp.allclose(perplexity, r_ppl, atol=1e-3, rtol=1e-3), (
            tn, perplexity, r_ppl)
        assert jnp.array_equal(indices, r_idx), tn

    print("KERNEL_OK")
</pallas_src>

<mosaic_0001>
module attributes {stable_mosaic.version = 11 : i64} {
  func.func @_vq_kernel(%arg0: i32, %arg1: memref<512x64xf32, #tpu.memory_space<vmem>>, %arg2: memref<128x64xf32, #tpu.memory_space<vmem>>, %arg3: memref<1x128xf32, #tpu.memory_space<vmem>>, %arg4: memref<512x64xf32, #tpu.memory_space<vmem>>, %arg5: memref<512x1xi32, #tpu.memory_space<vmem>>, %arg6: memref<1x1x128xf32, #tpu.memory_space<vmem>>, %arg7: memref<1x1x64xf32, #tpu.memory_space<vmem>>) attributes {dimension_semantics = [#tpu.dimension_semantics<parallel>], iteration_bounds = array<i64: 1>, scalar_prefetch = 0 : i64, scratch_operands = 0 : i64, tpu.core_type = #tpu.core_type<tc>, window_params = [{transform_indices = @transform_0, window_bounds = array<i64: 512, 64>}, {pipeline_mode = #tpu.pipeline_mode<synchronous>, transform_indices = @transform_1, window_bounds = array<i64: 128, 64>}, {pipeline_mode = #tpu.pipeline_mode<synchronous>, transform_indices = @transform_2, window_bounds = array<i64: 1, 128>}, {transform_indices = @transform_3, window_bounds = array<i64: 512, 64>}, {transform_indices = @transform_4, window_bounds = array<i64: 512, 1>}, {transform_indices = @transform_5, window_bounds = array<i64: 1, 1, 128>}, {transform_indices = @transform_6, window_bounds = array<i64: 1, 1, 64>}]} {
    %c0 = arith.constant 0 : index
    %c0_0 = arith.constant 0 : index
    %0 = vector.load %arg1[%c0, %c0_0] : memref<512x64xf32, #tpu.memory_space<vmem>>, vector<512x64xf32>
    %c0_1 = arith.constant 0 : index
    %c0_2 = arith.constant 0 : index
    %1 = vector.load %arg2[%c0_1, %c0_2] : memref<128x64xf32, #tpu.memory_space<vmem>>, vector<128x64xf32>
    %c0_3 = arith.constant 0 : index
    %c0_4 = arith.constant 0 : index
    %2 = vector.load %arg3[%c0_3, %c0_4] : memref<1x128xf32, #tpu.memory_space<vmem>>, vector<1x128xf32>
    %cst = arith.constant dense<0.000000e+00> : vector<512x128xf32>
    %3 = tpu.matmul %0, %1, %cst {dimension_numbers = #tpu.dot_dimension_numbers<[1], [1], [0], [0], [0, 0, 1, 0], [], []>} : vector<512x64xf32>, vector<128x64xf32>, vector<512x128xf32> -> vector<512x128xf32>
    %cst_5 = arith.constant 2.000000e+00 : f32
    %4 = vector.broadcast %cst_5 : f32 to vector<512x128xf32>
    %5 = arith.mulf %4, %3 : vector<512x128xf32>
    %6 = vector.broadcast %2 : vector<1x128xf32> to vector<512x128xf32>
    %7 = arith.subf %6, %5 : vector<512x128xf32>
    %cst_6 = arith.constant dense<0x7F800000> : vector<512xf32>
    %8 = vector.multi_reduction <minimumf>, %7, %cst_6 [1] : vector<512x128xf32> to vector<512xf32>
    %9 = vector.shape_cast %8 : vector<512xf32> to vector<512x1xf32>
    %10 = tpu.iota {dimensions = array<i32: 1>} : vector<512x128xi32>
    %11 = vector.broadcast %9 : vector<512x1xf32> to vector<512x128xf32>
    %12 = arith.cmpf oeq, %7, %11 : vector<512x128xf32>
    %c128_i32 = arith.constant 128 : i32
    %13 = vector.broadcast %c128_i32 : i32 to vector<512x128xi32>
    %14 = arith.select %12, %10, %13 : vector<512x128xi1>, vector<512x128xi32>
    %cst_7 = arith.constant dense<2147483647> : vector<512xi32>
    %15 = vector.multi_reduction <minsi>, %14, %cst_7 [1] : vector<512x128xi32> to vector<512xi32>
    %16 = vector.shape_cast %15 : vector<512xi32> to vector<512x1xi32>
    %17 = vector.broadcast %16 : vector<512x1xi32> to vector<512x128xi32>
    %18 = arith.cmpi eq, %10, %17 : vector<512x128xi32>
    %19 = arith.extui %18 : vector<512x128xi1> to vector<512x128xi32>
    %20 = arith.sitofp %19 : vector<512x128xi32> to vector<512x128xf32>
    %cst_8 = arith.constant dense<0.000000e+00> : vector<512x64xf32>
    %21 = tpu.matmul %20, %1, %cst_8 {dimension_numbers = #tpu.dot_dimension_numbers<[1], [0], [0], [1], [0, 0, 1, 1], [], []>} : vector<512x128xf32>, vector<128x64xf32>, vector<512x64xf32> -> vector<512x64xf32>
    %c512_i32 = arith.constant 512 : i32
    %22 = arith.muli %arg0, %c512_i32 : i32
    %23 = tpu.iota {dimensions = array<i32: 0>} : vector<512x1xi32>
    %24 = vector.broadcast %22 : i32 to vector<512x1xi32>
    %25 = arith.addi %24, %23 : vector<512x1xi32>
    %c512_i32_9 = arith.constant 512 : i32
    %26 = vector.broadcast %c512_i32_9 : i32 to vector<512x1xi32>
    %27 = arith.cmpi slt, %25, %26 : vector<512x1xi32>
    %c0_10 = arith.constant 0 : index
    %c0_11 = arith.constant 0 : index
    %28 = vector.load %arg4[%c0_10, %c0_11] : memref<512x64xf32, #tpu.memory_space<vmem>>, vector<512x64xf32>
    tpu.vector_store %arg4[%c0_10, %c0_11], %21 {strides = array<i32>} : memref<512x64xf32, #tpu.memory_space<vmem>>, vector<512x64xf32>,
    %c0_12 = arith.constant 0 : index
    %c0_13 = arith.constant 0 : index
    %29 = vector.load %arg5[%c0_12, %c0_13] : memref<512x1xi32, #tpu.memory_space<vmem>>, vector<512x1xi32>
    tpu.vector_store %arg5[%c0_12, %c0_13], %16 {strides = array<i32>} : memref<512x1xi32, #tpu.memory_space<vmem>>, vector<512x1xi32>,
    %cst_14 = arith.constant 0.000000e+00 : f32
    %30 = vector.shape_cast %27 : vector<512x1xi1> to vector<512x1xi1>
    %31 = vector.broadcast %30 : vector<512x1xi1> to vector<512x128xi1>
    %32 = vector.broadcast %cst_14 : f32 to vector<512x128xf32>
    %33 = arith.select %31, %20, %32 : vector<512x128xi1>, vector<512x128xf32>
    %cst_15 = arith.constant dense<0.000000e+00> : vector<128xf32>
    %34 = vector.multi_reduction <add>, %33, %cst_15 [0] : vector<512x128xf32> to vector<128xf32>
    %35 = vector.shape_cast %34 : vector<128xf32> to vector<1x128xf32>
    %36 = vector.shape_cast %35 : vector<1x128xf32> to vector<1x1x128xf32>
    %c0_16 = arith.constant 0 : index
    %c0_17 = arith.constant 0 : index
    %c0_18 = arith.constant 0 : index
    %37 = vector.load %arg6[%c0_16, %c0_17, %c0_18] : memref<1x1x128xf32, #tpu.memory_space<vmem>>, vector<1x1x128xf32>
    tpu.vector_store %arg6[%c0_16, %c0_17, %c0_18], %36 {strides = array<i32>} : memref<1x1x128xf32, #tpu.memory_space<vmem>>, vector<1x1x128xf32>,
    %38 = arith.subf %21, %0 : vector<512x64xf32>
    %39 = arith.mulf %38, %38 : vector<512x64xf32>
    %cst_19 = arith.constant 0.000000e+00 : f32
    %40 = vector.shape_cast %27 : vector<512x1xi1> to vector<512x1xi1>
    %41 = vector.broadcast %40 : vector<512x1xi1> to vector<512x64xi1>
    %42 = vector.broadcast %cst_19 : f32 to vector<512x64xf32>
    %43 = arith.select %41, %39, %42 : vector<512x64xi1>, vector<512x64xf32>
    %cst_20 = arith.constant dense<0.000000e+00> : vector<64xf32>
    %44 = vector.multi_reduction <add>, %43, %cst_20 [0] : vector<512x64xf32> to vector<64xf32>
    %45 = vector.shape_cast %44 : vector<64xf32> to vector<1x64xf32>
    %46 = vector.shape_cast %45 : vector<1x64xf32> to vector<1x1x64xf32>
    %c0_21 = arith.constant 0 : index
    %c0_22 = arith.constant 0 : index
    %c0_23 = arith.constant 0 : index
    %47 = vector.load %arg7[%c0_21, %c0_22, %c0_23] : memref<1x1x64xf32, #tpu.memory_space<vmem>>, vector<1x1x64xf32>
    tpu.vector_store %arg7[%c0_21, %c0_22, %c0_23], %46 {strides = array<i32>} : memref<1x1x64xf32, #tpu.memory_space<vmem>>, vector<1x1x64xf32>,
    return
  }
  func.func @transform_0(%arg0: i32) -> (i32, i32) {
    %c0_i32 = arith.constant 0 : i32
    %c0_i32_0 = arith.constant 0 : i32
    return %arg0, %c0_i32 : i32, i32
  }
  func.func @transform_1(%arg0: i32) -> (i32, i32) {
    %c0_i32 = arith.constant 0 : i32
    %c0_i32_0 = arith.constant 0 : i32
    %c0_i32_1 = arith.constant 0 : i32
    return %c0_i32, %c0_i32_0 : i32, i32
  }
  func.func @transform_2(%arg0: i32) -> (i32, i32) {
    %c0_i32 = arith.constant 0 : i32
    %c0_i32_0 = arith.constant 0 : i32
    %c0_i32_1 = arith.constant 0 : i32
    return %c0_i32, %c0_i32_0 : i32, i32
  }
  func.func @transform_3(%arg0: i32) -> (i32, i32) {
    %c0_i32 = arith.constant 0 : i32
    %c0_i32_0 = arith.constant 0 : i32
    return %arg0, %c0_i32 : i32, i32
  }
  func.func @transform_4(%arg0: i32) -> (i32, i32) {
    %c0_i32 = arith.constant 0 : i32
    %c0_i32_0 = arith.constant 0 : i32
    return %arg0, %c0_i32 : i32, i32
  }
  func.func @transform_5(%arg0: i32) -> (i32, i32, i32) {
    %c0_i32 = arith.constant 0 : i32
    %c0_i32_0 = arith.constant 0 : i32
    %c0_i32_1 = arith.constant 0 : i32
    return %arg0, %c0_i32, %c0_i32_0 : i32, i32, i32
  }
  func.func @transform_6(%arg0: i32) -> (i32, i32, i32) {
    %c0_i32 = arith.constant 0 : i32
    %c0_i32_0 = arith.constant 0 : i32
    %c0_i32_1 = arith.constant 0 : i32
    return %arg0, %c0_i32, %c0_i32_0 : i32, i32, i32
  }
}

</mosaic_0001>

<llo_original>
// kernel: tpu_custom_call.1
$region0: #{tpu_custom_call.1}
  #allocation0 [shape = 'u32[]', space=smem, size = 0x4, offset = 0x4, fixed_abs, tag = 'smem constant byte address 0x4 - core index']
  #allocation1 [shape = 'u32[72,128]{1,0:T(1,128)}', space=vmem, size = 0x9000, scoped, tag = 'internal scratch']
  %s0 = inlined_call_operand.vmem [shape: f32[512,64], index: 0, kind: input, shape index: {}]
  %s1 = inlined_call_operand.vmem [shape: f32[128,64], index: 1, kind: input, shape index: {}]
  %s2 = inlined_call_operand.vmem [shape: f32[1,128], index: 2, kind: input, shape index: {}]
  %s3 = inlined_call_operand.vmem [shape: f32[512,64], index: 3, kind: output, shape index: {0}]
  %s4 = inlined_call_operand.vmem [shape: s32[512,1], index: 4, kind: output, shape index: {1}]
  %s5 = inlined_call_operand.hbm [shape: f32[1,1,128], index: 5, kind: output, shape index: {2}]
  %s6 = inlined_call_operand.hbm [shape: f32[1,1,64], index: 6, kind: output, shape index: {3}]
  %7 = xla_tuple %s3, %s4, %s5, %s6
  %s8 = sld [smem:[#allocation0]]
  $region46: #{tpu_custom_call.1} parent=0
    _
  %s10 = ssub.s32 1, %s8
  %s11 = scalar_select 0, %s10, %s8
  $region1: #{tpu_custom_call.1} parent=0
    #allocation2 [shape = 'u8[512]{0}', space=vmem, size = 0x400, scoped, tag = 'output window, operand 2, single buffered']
    #allocation3 [shape = 's32[1]{0}', space=sflag, size = 0x4, scoped, tag = 'scoped memory for tpu_custom_call.1']
    #allocation4 [shape = 'u8[512]{0}', space=vmem, size = 0x400, scoped, tag = 'output window, operand 3, single buffered']
    #allocation5 [shape = 's32[1]{0}', space=sflag, size = 0x4, scoped, tag = 'scoped memory for tpu_custom_call.1']
    %12 = vsyncpa [#allocation3], 0
    %13 = vsyncpa [#allocation5], 0
    // Predicated region
    $region2: #{tpu_custom_call.1} parent=1 // pred_check
      _
    $region3: #{tpu_custom_call.1} parent=1 // pred_check_branch
      %15 = sbr.rel (0) target = $region5
    $region4: #{tpu_custom_call.1} parent=1 // pred_region
      _
    $region5: #{tpu_custom_call.1} parent=1 // pred_fallthru
      _
    // Predicated region
    $region6: #{tpu_custom_call.1} parent=1 // pred_check
      _
    $region7: #{tpu_custom_call.1} parent=1 // pred_check_branch
      %17 = sbr.rel (0) target = $region9
    $region8: #{tpu_custom_call.1} parent=1 // pred_region
      _
    $region9: #{tpu_custom_call.1} parent=1 // pred_fallthru
      _
    // Predicated region
    $region10: #{tpu_custom_call.1} parent=1 // pred_check
      _
    $region11: #{tpu_custom_call.1} parent=1 // pred_check_branch
      %19 = sbr.rel (0) target = $region13
    $region12: #{tpu_custom_call.1} parent=1 // pred_region
      _
    $region13: #{tpu_custom_call.1} parent=1 // pred_fallthru
      _
    %v20 = vld [vmem:[%s0] sm:$0xff]
    %v21 = vld [vmem:[%s0 + $0x8] sm:$0xff]
    %v22 = vld [vmem:[%s0 + $0x10] sm:$0xff]
    %v23 = vld [vmem:[%s0 + $0x18] sm:$0xff]
    %v24 = vld [vmem:[%s0 + $0x20] sm:$0xff]
    %v25 = vld [vmem:[%s0 + $0x28] sm:$0xff]
    %v26 = vld [vmem:[%s0 + $0x30] sm:$0xff]
    %v27 = vld [vmem:[%s0 + $0x38] sm:$0xff]
    %v28 = vld [vmem:[%s0 + $0x40] sm:$0xff]
    %v29 = vld [vmem:[%s0 + $0x48] sm:$0xff]
    %v30 = vld [vmem:[%s0 + $0x50] sm:$0xff]
    %v31 = vld [vmem:[%s0 + $0x58] sm:$0xff]
    %v32 = vld [vmem:[%s0 + $0x60] sm:$0xff]
    %v33 = vld [vmem:[%s0 + $0x68] sm:$0xff]
    %v34 = vld [vmem:[%s0 + $0x70] sm:$0xff]
    %v35 = vld [vmem:[%s0 + $0x78] sm:$0xff]
    %v36 = vld [vmem:[%s0 + $0x80] sm:$0xff]
    %v37 = vld [vmem:[%s0 + $0x88] sm:$0xff]
    %v38 = vld [vmem:[%s0 + $0x90] sm:$0xff]
    %v39 = vld [vmem:[%s0 + $0x98] sm:$0xff]
    %v40 = vld [vmem:[%s0 + $0xa0] sm:$0xff]
    %v41 = vld [vmem:[%s0 + $0xa8] sm:$0xff]
    %v42 = vld [vmem:[%s0 + $0xb0] sm:$0xff]
    %v43 = vld [vmem:[%s0 + $0xb8] sm:$0xff]
    %v44 = vld [vmem:[%s0 + $0xc0] sm:$0xff]
    %v45 = vld [vmem:[%s0 + $0xc8] sm:$0xff]
    %v46 = vld [vmem:[%s0 + $0xd0] sm:$0xff]
    %v47 = vld [vmem:[%s0 + $0xd8] sm:$0xff]
    %v48 = vld [vmem:[%s0 + $0xe0] sm:$0xff]
    %v49 = vld [vmem:[%s0 + $0xe8] sm:$0xff]
    %v50 = vld [vmem:[%s0 + $0xf0] sm:$0xff]
    %v51 = vld [vmem:[%s0 + $0xf8] sm:$0xff]
    %v52 = vld [vmem:[%s0 + $0x100] sm:$0xff]
    %v53 = vld [vmem:[%s0 + $0x108] sm:$0xff]
    %v54 = vld [vmem:[%s0 + $0x110] sm:$0xff]
    %v55 = vld [vmem:[%s0 + $0x118] sm:$0xff]
    %v56 = vld [vmem:[%s0 + $0x120] sm:$0xff]
    %v57 = vld [vmem:[%s0 + $0x128] sm:$0xff]
    %v58 = vld [vmem:[%s0 + $0x130] sm:$0xff]
    %v59 = vld [vmem:[%s0 + $0x138] sm:$0xff]
    %v60 = vld [vmem:[%s0 + $0x140] sm:$0xff]
    %v61 = vld [vmem:[%s0 + $0x148] sm:$0xff]
    %v62 = vld [vmem:[%s0 + $0x150] sm:$0xff]
    %v63 = vld [vmem:[%s0 + $0x158] sm:$0xff]
    %v64 = vld [vmem:[%s0 + $0x160] sm:$0xff]
    %v65 = vld [vmem:[%s0 + $0x168] sm:$0xff]
    %v66 = vld [vmem:[%s0 + $0x170] sm:$0xff]
    %v67 = vld [vmem:[%s0 + $0x178] sm:$0xff]
    %v68 = vld [vmem:[%s0 + $0x180] sm:$0xff]
    %v69 = vld [vmem:[%s0 + $0x188] sm:$0xff]
    %v70 = vld [vmem:[%s0 + $0x190] sm:$0xff]
    %v71 = vld [vmem:[%s0 + $0x198] sm:$0xff]
    %v72 = vld [vmem:[%s0 + $0x1a0] sm:$0xff]
    %v73 = vld [vmem:[%s0 + $0x1a8] sm:$0xff]
    %v74 = vld [vmem:[%s0 + $0x1b0] sm:$0xff]
    %v75 = vld [vmem:[%s0 + $0x1b8] sm:$0xff]
    %v76 = vld [vmem:[%s0 + $0x1c0] sm:$0xff]
    %v77 = vld [vmem:[%s0 + $0x1c8] sm:$0xff]
    %v78 = vld [vmem:[%s0 + $0x1d0] sm:$0xff]
    %v79 = vld [vmem:[%s0 + $0x1d8] sm:$0xff]
    %v80 = vld [vmem:[%s0 + $0x1e0] sm:$0xff]
    %v81 = vld [vmem:[%s0 + $0x1e8] sm:$0xff]
    %v82 = vld [vmem:[%s0 + $0x1f0] sm:$0xff]
    %v83 = vld [vmem:[%s0 + $0x1f8] sm:$0xff]
    %v84 = vld [vmem:[%s1] sm:$0xff]
    %v85 = vld [vmem:[%s1 + $0x8] sm:$0xff]
    %v86 = vld [vmem:[%s1 + $0x10] sm:$0xff]
    %v87 = vld [vmem:[%s1 + $0x18] sm:$0xff]
    %v88 = vld [vmem:[%s1 + $0x20] sm:$0xff]
    %v89 = vld [vmem:[%s1 + $0x28] sm:$0xff]
    %v90 = vld [vmem:[%s1 + $0x30] sm:$0xff]
    %v91 = vld [vmem:[%s1 + $0x38] sm:$0xff]
    %v92 = vld [vmem:[%s1 + $0x40] sm:$0xff]
    %v93 = vld [vmem:[%s1 + $0x48] sm:$0xff]
    %v94 = vld [vmem:[%s1 + $0x50] sm:$0xff]
    %v95 = vld [vmem:[%s1 + $0x58] sm:$0xff]
    %v96 = vld [vmem:[%s1 + $0x60] sm:$0xff]
    %v97 = vld [vmem:[%s1 + $0x68] sm:$0xff]
    %v98 = vld [vmem:[%s1 + $0x70] sm:$0xff]
    %v99 = vld [vmem:[%s1 + $0x78] sm:$0xff]
    %v100 = vld [vmem:[%s2] sm:$0x1]
    %vm101 = vcmask 523264
    %v103 = vsel %vm101, %v20, 0
    %v106 = vsel %vm101, %v21, 0
    %v109 = vsel %vm101, %v22, 0
    %v112 = vsel %vm101, %v23, 0
    %v115 = vsel %vm101, %v24, 0
    %v118 = vsel %vm101, %v25, 0
    %v121 = vsel %vm101, %v26, 0
    %v124 = vsel %vm101, %v27, 0
    %v127 = vsel %vm101, %v28, 0
    %v130 = vsel %vm101, %v29, 0
    %v133 = vsel %vm101, %v30, 0
    %v136 = vsel %vm101, %v31, 0
    %v139 = vsel %vm101, %v32, 0
    %v142 = vsel %vm101, %v33, 0
    %v145 = vsel %vm101, %v34, 0
    %v148 = vsel %vm101, %v35, 0
    %v151 = vsel %vm101, %v36, 0
    %v154 = vsel %vm101, %v37, 0
    %v157 = vsel %vm101, %v38, 0
    %v160 = vsel %vm101, %v39, 0
    %v163 = vsel %vm101, %v40, 0
    %v166 = vsel %vm101, %v41, 0
    %v169 = vsel %vm101, %v42, 0
    %v172 = vsel %vm101, %v43, 0
    %v175 = vsel %vm101, %v44, 0
    %v178 = vsel %vm101, %v45, 0
    %v181 = vsel %vm101, %v46, 0
    %v184 = vsel %vm101, %v47, 0
    %v187 = vsel %vm101, %v48, 0
    %v190 = vsel %vm101, %v49, 0
    %v193 = vsel %vm101, %v50, 0
    %v196 = vsel %vm101, %v51, 0
    %v199 = vsel %vm101, %v52, 0
    %v202 = vsel %vm101, %v53, 0
    %v205 = vsel %vm101, %v54, 0
    %v208 = vsel %vm101, %v55, 0
    %v211 = vsel %vm101, %v56, 0
    %v214 = vsel %vm101, %v57, 0
    %v217 = vsel %vm101, %v58, 0
    %v220 = vsel %vm101, %v59, 0
    %v223 = vsel %vm101, %v60, 0
    %v226 = vsel %vm101, %v61, 0
    %v229 = vsel %vm101, %v62, 0
    %v232 = vsel %vm101, %v63, 0
    %v235 = vsel %vm101, %v64, 0
    %v238 = vsel %vm101, %v65, 0
    %v241 = vsel %vm101, %v66, 0
    %v244 = vsel %vm101, %v67, 0
    %v247 = vsel %vm101, %v68, 0
    %v250 = vsel %vm101, %v69, 0
    %v253 = vsel %vm101, %v70, 0
    %v256 = vsel %vm101, %v71, 0
    %v259 = vsel %vm101, %v72, 0
    %v262 = vsel %vm101, %v73, 0
    %v265 = vsel %vm101, %v74, 0
    %v268 = vsel %vm101, %v75, 0
    %v271 = vsel %vm101, %v76, 0
    %v274 = vsel %vm101, %v77, 0
    %v277 = vsel %vm101, %v78, 0
    %v280 = vsel %vm101, %v79, 0
    %v283 = vsel %vm101, %v80, 0
    %v286 = vsel %vm101, %v81, 0
    %v289 = vsel %vm101, %v82, 0
    %v292 = vsel %vm101, %v83, 0
    %v295 = vsel %vm101, %v84, 0
    %v298 = vsel %vm101, %v85, 0
    %v301 = vsel %vm101, %v86, 0
    %v304 = vsel %vm101, %v87, 0
    %v307 = vsel %vm101, %v88, 0
    %v310 = vsel %vm101, %v89, 0
    %v313 = vsel %vm101, %v90, 0
    %v316 = vsel %vm101, %v91, 0
    %v319 = vsel %vm101, %v92, 0
    %v322 = vsel %vm101, %v93, 0
    %v325 = vsel %vm101, %v94, 0
    %v328 = vsel %vm101, %v95, 0
    %v331 = vsel %vm101, %v96, 0
    %v334 = vsel %vm101, %v97, 0
    %v337 = vsel %vm101, %v98, 0
    %v340 = vsel %vm101, %v99, 0
    %342 = vmatpush.xpose.msra.mxu0 %v340
    %343 = vmatpush.xpose.msra.mxu0 %v337
    %344 = vmatpush.xpose.msra.mxu0 %v334
    %345 = vmatpush.xpose.msra.mxu0 %v331
    %346 = vmatpush.xpose.msra.mxu0 %v328
    %347 = vmatpush.xpose.msra.mxu0 %v325
    %348 = vmatpush.xpose.msra.mxu0 %v322
    %349 = vmatpush.xpose.msra.mxu0 %v319
    %350 = vmatpush.xpose.msra.mxu0 %v316
    %351 = vmatpush.xpose.msra.mxu0 %v313
    %352 = vmatpush.xpose.msra.mxu0 %v310
    %353 = vmatpush.xpose.msra.mxu0 %v307
    %354 = vmatpush.xpose.msra.mxu0 %v304
    %355 = vmatpush.xpose.msra.mxu0 %v301
    %356 = vmatpush.xpose.msra.mxu0 %v298
    %357 = vmatpush.xpose.msra.mxu0 %v295
    %358 = vmatmul.f32.gmra.mxu0 %v103
    %v359 = vpop.f32.mrf.mxu0
    %v360 = vadd.f32 0.0, %v359
    %361 = vmatmul.f32.gmra.mxu0 %v106
    %v362 = vpop.f32.mrf.mxu0
    %v363 = vadd.f32 0.0, %v362
    %364 = vmatmul.f32.gmra.mxu0 %v109
    %v365 = vpop.f32.mrf.mxu0
    %v366 = vadd.f32 0.0, %v365
    %367 = vmatmul.f32.gmra.mxu0 %v112
    %v368 = vpop.f32.mrf.mxu0
    %v369 = vadd.f32 0.0, %v368
    %370 = vmatmul.f32.gmra.mxu0 %v115
    %v371 = vpop.f32.mrf.mxu0
    %v372 = vadd.f32 0.0, %v371
    %373 = vmatmul.f32.gmra.mxu0 %v118
    %v374 = vpop.f32.mrf.mxu0
    %v375 = vadd.f32 0.0, %v374
    %376 = vmatmul.f32.gmra.mxu0 %v121
    %v377 = vpop.f32.mrf.mxu0
    %v378 = vadd.f32 0.0, %v377
    %379 = vmatmul.f32.gmra.mxu0 %v124
    %v380 = vpop.f32.mrf.mxu0
    %v381 = vadd.f32 0.0, %v380
    %382 = vmatmul.f32.gmra.mxu0 %v127
    %v383 = vpop.f32.mrf.mxu0
    %v384 = vadd.f32 0.0, %v383
    %385 = vmatmul.f32.gmra.mxu0 %v130
    %v386 = vpop.f32.mrf.mxu0
    %v387 = vadd.f32 0.0, %v386
    %388 = vmatmul.f32.gmra.mxu0 %v133
    %v389 = vpop.f32.mrf.mxu0
    %v390 = vadd.f32 0.0, %v389
    %391 = vmatmul.f32.gmra.mxu0 %v136
    %v392 = vpop.f32.mrf.mxu0
    %v393 = vadd.f32 0.0, %v392
    %394 = vmatmul.f32.gmra.mxu0 %v139
    %v395 = vpop.f32.mrf.mxu0
    %v396 = vadd.f32 0.0, %v395
    %397 = vmatmul.f32.gmra.mxu0 %v142
    %v398 = vpop.f32.mrf.mxu0
    %v399 = vadd.f32 0.0, %v398
    %400 = vmatmul.f32.gmra.mxu0 %v145
    %v401 = vpop.f32.mrf.mxu0
    %v402 = vadd.f32 0.0, %v401
    %403 = vmatmul.f32.gmra.mxu0 %v148
    %v404 = vpop.f32.mrf.mxu0
    %v405 = vadd.f32 0.0, %v404
    %406 = vmatmul.f32.gmra.mxu0 %v151
    %v407 = vpop.f32.mrf.mxu0
    %v408 = vadd.f32 0.0, %v407
    %409 = vmatmul.f32.gmra.mxu0 %v154
    %v410 = vpop.f32.mrf.mxu0
    %v411 = vadd.f32 0.0, %v410
    %412 = vmatmul.f32.gmra.mxu0 %v157
    %v413 = vpop.f32.mrf.mxu0
    %v414 = vadd.f32 0.0, %v413
    %415 = vmatmul.f32.gmra.mxu0 %v160
    %v416 = vpop.f32.mrf.mxu0
    %v417 = vadd.f32 0.0, %v416
    %418 = vmatmul.f32.gmra.mxu0 %v163
    %v419 = vpop.f32.mrf.mxu0
    %v420 = vadd.f32 0.0, %v419
    %421 = vmatmul.f32.gmra.mxu0 %v166
    %v422 = vpop.f32.mrf.mxu0
    %v423 = vadd.f32 0.0, %v422
    %424 = vmatmul.f32.gmra.mxu0 %v169
    %v425 = vpop.f32.mrf.mxu0
    %v426 = vadd.f32 0.0, %v425
    %427 = vmatmul.f32.gmra.mxu0 %v172
    %v428 = vpop.f32.mrf.mxu0
    %v429 = vadd.f32 0.0, %v428
    %430 = vmatmul.f32.gmra.mxu0 %v175
    %v431 = vpop.f32.mrf.mxu0
    %v432 = vadd.f32 0.0, %v431
    %433 = vmatmul.f32.gmra.mxu0 %v178
    %v434 = vpop.f32.mrf.mxu0
    %v435 = vadd.f32 0.0, %v434
    %436 = vmatmul.f32.gmra.mxu0 %v181
    %v437 = vpop.f32.mrf.mxu0
    %v438 = vadd.f32 0.0, %v437
    %439 = vmatmul.f32.gmra.mxu0 %v184
    %v440 = vpop.f32.mrf.mxu0
    %v441 = vadd.f32 0.0, %v440
    %442 = vmatmul.f32.gmra.mxu0 %v187
    %v443 = vpop.f32.mrf.mxu0
    %v444 = vadd.f32 0.0, %v443
    %445 = vmatmul.f32.gmra.mxu0 %v190
    %v446 = vpop.f32.mrf.mxu0
    %v447 = vadd.f32 0.0, %v446
    %448 = vmatmul.f32.gmra.mxu0 %v193
    %v449 = vpop.f32.mrf.mxu0
    %v450 = vadd.f32 0.0, %v449
    %451 = vmatmul.f32.gmra.mxu0 %v196
    %v452 = vpop.f32.mrf.mxu0
    %v453 = vadd.f32 0.0, %v452
    %454 = vmatmul.f32.gmra.mxu0 %v199
    %v455 = vpop.f32.mrf.mxu0
    %v456 = vadd.f32 0.0, %v455
    %457 = vmatmul.f32.gmra.mxu0 %v202
    %v458 = vpop.f32.mrf.mxu0
    %v459 = vadd.f32 0.0, %v458
    %460 = vmatmul.f32.gmra.mxu0 %v205
    %v461 = vpop.f32.mrf.mxu0
    %v462 = vadd.f32 0.0, %v461
    %463 = vmatmul.f32.gmra.mxu0 %v208
    %v464 = vpop.f32.mrf.mxu0
    %v465 = vadd.f32 0.0, %v464
    %466 = vmatmul.f32.gmra.mxu0 %v211
    %v467 = vpop.f32.mrf.mxu0
    %v468 = vadd.f32 0.0, %v467
    %469 = vmatmul.f32.gmra.mxu0 %v214
    %v470 = vpop.f32.mrf.mxu0
    %v471 = vadd.f32 0.0, %v470
    %472 = vmatmul.f32.gmra.mxu0 %v217
    %v473 = vpop.f32.mrf.mxu0
    %v474 = vadd.f32 0.0, %v473
    %475 = vmatmul.f32.gmra.mxu0 %v220
    %v476 = vpop.f32.mrf.mxu0
    %v477 = vadd.f32 0.0, %v476
    %478 = vmatmul.f32.gmra.mxu0 %v223
    %v479 = vpop.f32.mrf.mxu0
    %v480 = vadd.f32 0.0, %v479
    %481 = vmatmul.f32.gmra.mxu0 %v226
    %v482 = vpop.f32.mrf.mxu0
    %v483 = vadd.f32 0.0, %v482
    %484 = vmatmul.f32.gmra.mxu0 %v229
    %v485 = vpop.f32.mrf.mxu0
    %v486 = vadd.f32 0.0, %v485
    %487 = vmatmul.f32.gmra.mxu0 %v232
    %v488 = vpop.f32.mrf.mxu0
    %v489 = vadd.f32 0.0, %v488
    %490 = vmatmul.f32.gmra.mxu0 %v235
    %v491 = vpop.f32.mrf.mxu0
    %v492 = vadd.f32 0.0, %v491
    %493 = vmatmul.f32.gmra.mxu0 %v238
    %v494 = vpop.f32.mrf.mxu0
    %v495 = vadd.f32 0.0, %v494
    %496 = vmatmul.f32.gmra.mxu0 %v241
    %v497 = vpop.f32.mrf.mxu0
    %v498 = vadd.f32 0.0, %v497
    %499 = vmatmul.f32.gmra.mxu0 %v244
    %v500 = vpop.f32.mrf.mxu0
    %v501 = vadd.f32 0.0, %v500
    %502 = vmatmul.f32.gmra.mxu0 %v247
    %v503 = vpop.f32.mrf.mxu0
    %v504 = vadd.f32 0.0, %v503
    %505 = vmatmul.f32.gmra.mxu0 %v250
    %v506 = vpop.f32.mrf.mxu0
    %v507 = vadd.f32 0.0, %v506
    %508 = vmatmul.f32.gmra.mxu0 %v253
    %v509 = vpop.f32.mrf.mxu0
    %v510 = vadd.f32 0.0, %v509
    %511 = vmatmul.f32.gmra.mxu0 %v256
    %v512 = vpop.f32.mrf.mxu0
    %v513 = vadd.f32 0.0, %v512
    %514 = vmatmul.f32.gmra.mxu0 %v259
    %v515 = vpop.f32.mrf.mxu0
    %v516 = vadd.f32 0.0, %v515
    %517 = vmatmul.f32.gmra.mxu0 %v262
    %v518 = vpop.f32.mrf.mxu0
    %v519 = vadd.f32 0.0, %v518
    %520 = vmatmul.f32.gmra.mxu0 %v265
    %v521 = vpop.f32.mrf.mxu0
    %v522 = vadd.f32 0.0, %v521
    %523 = vmatmul.f32.gmra.mxu0 %v268
    %v524 = vpop.f32.mrf.mxu0
    %v525 = vadd.f32 0.0, %v524
    %526 = vmatmul.f32.gmra.mxu0 %v271
    %v527 = vpop.f32.mrf.mxu0
    %v528 = vadd.f32 0.0, %v527
    %529 = vmatmul.f32.gmra.mxu0 %v274
    %v530 = vpop.f32.mrf.mxu0
    %v531 = vadd.f32 0.0, %v530
    %532 = vmatmul.f32.gmra.mxu0 %v277
    %v533 = vpop.f32.mrf.mxu0
    %v534 = vadd.f32 0.0, %v533
    %535 = vmatmul.f32.gmra.mxu0 %v280
    %v536 = vpop.f32.mrf.mxu0
    %v537 = vadd.f32 0.0, %v536
    %538 = vmatmul.f32.gmra.mxu0 %v283
    %v539 = vpop.f32.mrf.mxu0
    %v540 = vadd.f32 0.0, %v539
    %541 = vmatmul.f32.gmra.mxu0 %v286
    %v542 = vpop.f32.mrf.mxu0
    %v543 = vadd.f32 0.0, %v542
    %544 = vmatmul.f32.gmra.mxu0 %v289
    %v545 = vpop.f32.mrf.mxu0
    %v546 = vadd.f32 0.0, %v545
    %547 = vmatmul.f32.gmra.mxu0 %v292
    %v548 = vpop.f32.mrf.mxu0
    %v549 = vadd.f32 0.0, %v548
    %550 = vdwg.mxu0
    %v551 = vmul.f32 %v360, 2.0
    %v552 = vmul.f32 %v363, 2.0
    %v553 = vmul.f32 %v366, 2.0
    %v554 = vmul.f32 %v369, 2.0
    %v555 = vmul.f32 %v372, 2.0
    %v556 = vmul.f32 %v375, 2.0
    %v557 = vmul.f32 %v378, 2.0
    %v558 = vmul.f32 %v381, 2.0
    %v559 = vmul.f32 %v384, 2.0
    %v560 = vmul.f32 %v387, 2.0
    %v561 = vmul.f32 %v390, 2.0
    %v562 = vmul.f32 %v393, 2.0
    %v563 = vmul.f32 %v396, 2.0
    %v564 = vmul.f32 %v399, 2.0
    %v565 = vmul.f32 %v402, 2.0
    %v566 = vmul.f32 %v405, 2.0
    %v567 = vmul.f32 %v408, 2.0
    %v568 = vmul.f32 %v411, 2.0
    %v569 = vmul.f32 %v414, 2.0
    %v570 = vmul.f32 %v417, 2.0
    %v571 = vmul.f32 %v420, 2.0
    %v572 = vmul.f32 %v423, 2.0
    %v573 = vmul.f32 %v426, 2.0
    %v574 = vmul.f32 %v429, 2.0
    %v575 = vmul.f32 %v432, 2.0
    %v576 = vmul.f32 %v435, 2.0
    %v577 = vmul.f32 %v438, 2.0
    %v578 = vmul.f32 %v441, 2.0
    %v579 = vmul.f32 %v444, 2.0
    %v580 = vmul.f32 %v447, 2.0
    %v581 = vmul.f32 %v450, 2.0
    %v582 = vmul.f32 %v453, 2.0
    %v583 = vmul.f32 %v456, 2.0
    %v584 = vmul.f32 %v459, 2.0
    %v585 = vmul.f32 %v462, 2.0
    %v586 = vmul.f32 %v465, 2.0
    %v587 = vmul.f32 %v468, 2.0
    %v588 = vmul.f32 %v471, 2.0
    %v589 = vmul.f32 %v474, 2.0
    %v590 = vmul.f32 %v477, 2.0
    %v591 = vmul.f32 %v480, 2.0
    %v592 = vmul.f32 %v483, 2.0
    %v593 = vmul.f32 %v486, 2.0
    %v594 = vmul.f32 %v489, 2.0
    %v595 = vmul.f32 %v492, 2.0
    %v596 = vmul.f32 %v495, 2.0
    %v597 = vmul.f32 %v498, 2.0
    %v598 = vmul.f32 %v501, 2.0
    %v599 = vmul.f32 %v504, 2.0
    %v600 = vmul.f32 %v507, 2.0
    %v601 = vmul.f32 %v510, 2.0
    %v602 = vmul.f32 %v513, 2.0
    %v603 = vmul.f32 %v516, 2.0
    %v604 = vmul.f32 %v519, 2.0
    %v605 = vmul.f32 %v522, 2.0
    %v606 = vmul.f32 %v525, 2.0
    %v607 = vmul.f32 %v528, 2.0
    %v608 = vmul.f32 %v531, 2.0
    %v609 = vmul.f32 %v534, 2.0
    %v610 = vmul.f32 %v537, 2.0
    %v611 = vmul.f32 %v540, 2.0
    %v612 = vmul.f32 %v543, 2.0
    %v613 = vmul.f32 %v546, 2.0
    %v614 = vmul.f32 %v549, 2.0
    %v616 = vperm.slane %v100, 0
    %v618 = vsub.f32 %v616, %v551
    %v619 = vsub.f32 %v616, %v552
    %v620 = vsub.f32 %v616, %v553
    %v621 = vsub.f32 %v616, %v554
    %v622 = vsub.f32 %v616, %v555
    %v623 = vsub.f32 %v616, %v556
    %v624 = vsub.f32 %v616, %v557
    %v625 = vsub.f32 %v616, %v558
    %v626 = vsub.f32 %v616, %v559
    %v627 = vsub.f32 %v616, %v560
    %v628 = vsub.f32 %v616, %v561
    %v629 = vsub.f32 %v616, %v562
    %v630 = vsub.f32 %v616, %v563
    %v631 = vsub.f32 %v616, %v564
    %v632 = vsub.f32 %v616, %v565
    %v633 = vsub.f32 %v616, %v566
    %v634 = vsub.f32 %v616, %v567
    %v635 = vsub.f32 %v616, %v568
    %v636 = vsub.f32 %v616, %v569
    %v637 = vsub.f32 %v616, %v570
    %v638 = vsub.f32 %v616, %v571
    %v639 = vsub.f32 %v616, %v572
    %v640 = vsub.f32 %v616, %v573
    %v641 = vsub.f32 %v616, %v574
    %v642 = vsub.f32 %v616, %v575
    %v643 = vsub.f32 %v616, %v576
    %v644 = vsub.f32 %v616, %v577
    %v645 = vsub.f32 %v616, %v578
    %v646 = vsub.f32 %v616, %v579
    %v647 = vsub.f32 %v616, %v580
    %v648 = vsub.f32 %v616, %v581
    %v649 = vsub.f32 %v616, %v582
    %v650 = vsub.f32 %v616, %v583
    %v651 = vsub.f32 %v616, %v584
    %v652 = vsub.f32 %v616, %v585
    %v653 = vsub.f32 %v616, %v586
    %v654 = vsub.f32 %v616, %v587
    %v655 = vsub.f32 %v616, %v588
    %v656 = vsub.f32 %v616, %v589
    %v657 = vsub.f32 %v616, %v590
    %v658 = vsub.f32 %v616, %v591
    %v659 = vsub.f32 %v616, %v592
    %v660 = vsub.f32 %v616, %v593
    %v661 = vsub.f32 %v616, %v594
    %v662 = vsub.f32 %v616, %v595
    %v663 = vsub.f32 %v616, %v596
    %v664 = vsub.f32 %v616, %v597
    %v665 = vsub.f32 %v616, %v598
    %v666 = vsub.f32 %v616, %v599
    %v667 = vsub.f32 %v616, %v600
    %v668 = vsub.f32 %v616, %v601
    %v669 = vsub.f32 %v616, %v602
    %v670 = vsub.f32 %v616, %v603
    %v671 = vsub.f32 %v616, %v604
    %v672 = vsub.f32 %v616, %v605
    %v673 = vsub.f32 %v616, %v606
    %v674 = vsub.f32 %v616, %v607
    %v675 = vsub.f32 %v616, %v608
    %v676 = vsub.f32 %v616, %v609
    %v677 = vsub.f32 %v616, %v610
    %v678 = vsub.f32 %v616, %v611
    %v679 = vsub.f32 %v616, %v612
    %v680 = vsub.f32 %v616, %v613
    %v681 = vsub.f32 %v616, %v614
    %682 = vmin.xlane.f32.xlu0 %v618
    %v683 = vpop.xlane.xlu0 %682
    %684 = vmin.xlane.f32.xlu0 %v619
    %v685 = vpop.xlane.xlu0 %684
    %686 = vmin.xlane.f32.xlu0 %v620
    %v687 = vpop.xlane.xlu0 %686
    %688 = vmin.xlane.f32.xlu0 %v621
    %v689 = vpop.xlane.xlu0 %688
    %690 = vmin.xlane.f32.xlu0 %v622
    %v691 = vpop.xlane.xlu0 %690
    %692 = vmin.xlane.f32.xlu0 %v623
    %v693 = vpop.xlane.xlu0 %692
    %694 = vmin.xlane.f32.xlu0 %v624
    %v695 = vpop.xlane.xlu0 %694
    %696 = vmin.xlane.f32.xlu0 %v625
    %v697 = vpop.xlane.xlu0 %696
    %698 = vmin.xlane.f32.xlu0 %v626
    %v699 = vpop.xlane.xlu0 %698
    %700 = vmin.xlane.f32.xlu0 %v627
    %v701 = vpop.xlane.xlu0 %700
    %702 = vmin.xlane.f32.xlu0 %v628
    %v703 = vpop.xlane.xlu0 %702
    %704 = vmin.xlane.f32.xlu0 %v629
    %v705 = vpop.xlane.xlu0 %704
    %706 = vmin.xlane.f32.xlu0 %v630
    %v707 = vpop.xlane.xlu0 %706
    %708 = vmin.xlane.f32.xlu0 %v631
    %v709 = vpop.xlane.xlu0 %708
    %710 = vmin.xlane.f32.xlu0 %v632
    %v711 = vpop.xlane.xlu0 %710
    %712 = vmin.xlane.f32.xlu0 %v633
    %v713 = vpop.xlane.xlu0 %712
    %714 = vmin.xlane.f32.xlu0 %v634
    %v715 = vpop.xlane.xlu0 %714
    %716 = vmin.xlane.f32.xlu0 %v635
    %v717 = vpop.xlane.xlu0 %716
    %718 = vmin.xlane.f32.xlu0 %v636
    %v719 = vpop.xlane.xlu0 %718
    %720 = vmin.xlane.f32.xlu0 %v637
    %v721 = vpop.xlane.xlu0 %720
    %722 = vmin.xlane.f32.xlu0 %v638
    %v723 = vpop.xlane.xlu0 %722
    %724 = vmin.xlane.f32.xlu0 %v639
    %v725 = vpop.xlane.xlu0 %724
    %726 = vmin.xlane.f32.xlu0 %v640
    %v727 = vpop.xlane.xlu0 %726
    %728 = vmin.xlane.f32.xlu0 %v641
    %v729 = vpop.xlane.xlu0 %728
    %730 = vmin.xlane.f32.xlu0 %v642
    %v731 = vpop.xlane.xlu0 %730
    %732 = vmin.xlane.f32.xlu0 %v643
    %v733 = vpop.xlane.xlu0 %732
    %734 = vmin.xlane.f32.xlu0 %v644
    %v735 = vpop.xlane.xlu0 %734
    %736 = vmin.xlane.f32.xlu0 %v645
    %v737 = vpop.xlane.xlu0 %736
    %738 = vmin.xlane.f32.xlu0 %v646
    %v739 = vpop.xlane.xlu0 %738
    %740 = vmin.xlane.f32.xlu0 %v647
    %v741 = vpop.xlane.xlu0 %740
    %742 = vmin.xlane.f32.xlu0 %v648
    %v743 = vpop.xlane.xlu0 %742
    %744 = vmin.xlane.f32.xlu0 %v649
    %v745 = vpop.xlane.xlu0 %744
    %746 = vmin.xlane.f32.xlu0 %v650
    %v747 = vpop.xlane.xlu0 %746
    %748 = vmin.xlane.f32.xlu0 %v651
    %v749 = vpop.xlane.xlu0 %748
    %750 = vmin.xlane.f32.xlu0 %v652
    %v751 = vpop.xlane.xlu0 %750
    %752 = vmin.xlane.f32.xlu0 %v653
    %v753 = vpop.xlane.xlu0 %752
    %754 = vmin.xlane.f32.xlu0 %v654
    %v755 = vpop.xlane.xlu0 %754
    %756 = vmin.xlane.f32.xlu0 %v655
    %v757 = vpop.xlane.xlu0 %756
    %758 = vmin.xlane.f32.xlu0 %v656
    %v759 = vpop.xlane.xlu0 %758
    %760 = vmin.xlane.f32.xlu0 %v657
    %v761 = vpop.xlane.xlu0 %760
    %762 = vmin.xlane.f32.xlu0 %v658
    %v763 = vpop.xlane.xlu0 %762
    %764 = vmin.xlane.f32.xlu0 %v659
    %v765 = vpop.xlane.xlu0 %764
    %766 = vmin.xlane.f32.xlu0 %v660
    %v767 = vpop.xlane.xlu0 %766
    %768 = vmin.xlane.f32.xlu0 %v661
    %v769 = vpop.xlane.xlu0 %768
    %770 = vmin.xlane.f32.xlu0 %v662
    %v771 = vpop.xlane.xlu0 %770
    %772 = vmin.xlane.f32.xlu0 %v663
    %v773 = vpop.xlane.xlu0 %772
    %774 = vmin.xlane.f32.xlu0 %v664
    %v775 = vpop.xlane.xlu0 %774
    %776 = vmin.xlane.f32.xlu0 %v665
    %v777 = vpop.xlane.xlu0 %776
    %778 = vmin.xlane.f32.xlu0 %v666
    %v779 = vpop.xlane.xlu0 %778
    %780 = vmin.xlane.f32.xlu0 %v667
    %v781 = vpop.xlane.xlu0 %780
    %782 = vmin.xlane.f32.xlu0 %v668
    %v783 = vpop.xlane.xlu0 %782
    %784 = vmin.xlane.f32.xlu0 %v669
    %v785 = vpop.xlane.xlu0 %784
    %786 = vmin.xlane.f32.xlu0 %v670
    %v787 = vpop.xlane.xlu0 %786
    %788 = vmin.xlane.f32.xlu0 %v671
    %v789 = vpop.xlane.xlu0 %788
    %790 = vmin.xlane.f32.xlu0 %v672
    %v791 = vpop.xlane.xlu0 %790
    %792 = vmin.xlane.f32.xlu0 %v673
    %v793 = vpop.xlane.xlu0 %792
    %794 = vmin.xlane.f32.xlu0 %v674
    %v795 = vpop.xlane.xlu0 %794
    %796 = vmin.xlane.f32.xlu0 %v675
    %v797 = vpop.xlane.xlu0 %796
    %798 = vmin.xlane.f32.xlu0 %v676
    %v799 = vpop.xlane.xlu0 %798
    %800 = vmin.xlane.f32.xlu0 %v677
    %v801 = vpop.xlane.xlu0 %800
    %802 = vmin.xlane.f32.xlu0 %v678
    %v803 = vpop.xlane.xlu0 %802
    %804 = vmin.xlane.f32.xlu0 %v679
    %v805 = vpop.xlane.xlu0 %804
    %806 = vmin.xlane.f32.xlu0 %v680
    %v807 = vpop.xlane.xlu0 %806
    %808 = vmin.xlane.f32.xlu0 %v681
    %v809 = vpop.xlane.xlu0 %808
    %v810 = vlaneseq
    %v811 = vand.u32 %v810, 127
    %vm812 = vcmp.eq.f32.partialorder %v618, %v683
    %vm813 = vcmp.eq.f32.partialorder %v619, %v685
    %vm814 = vcmp.eq.f32.partialorder %v620, %v687
    %vm815 = vcmp.eq.f32.partialorder %v621, %v689
    %vm816 = vcmp.eq.f32.partialorder %v622, %v691
    %vm817 = vcmp.eq.f32.partialorder %v623, %v693
    %vm818 = vcmp.eq.f32.partialorder %v624, %v695
    %vm819 = vcmp.eq.f32.partialorder %v625, %v697
    %vm820 = vcmp.eq.f32.partialorder %v626, %v699
    %vm821 = vcmp.eq.f32.partialorder %v627, %v701
    %vm822 = vcmp.eq.f32.partialorder %v628, %v703
    %vm823 = vcmp.eq.f32.partialorder %v629, %v705
    %vm824 = vcmp.eq.f32.partialorder %v630, %v707
    %vm825 = vcmp.eq.f32.partialorder %v631, %v709
    %vm826 = vcmp.eq.f32.partialorder %v632, %v711
    %vm827 = vcmp.eq.f32.partialorder %v633, %v713
    %vm828 = vcmp.eq.f32.partialorder %v634, %v715
    %vm829 = vcmp.eq.f32.partialorder %v635, %v717
    %vm830 = vcmp.eq.f32.partialorder %v636, %v719
    %vm831 = vcmp.eq.f32.partialorder %v637, %v721
    %vm832 = vcmp.eq.f32.partialorder %v638, %v723
    %vm833 = vcmp.eq.f32.partialorder %v639, %v725
    %vm834 = vcmp.eq.f32.partialorder %v640, %v727
    %vm835 = vcmp.eq.f32.partialorder %v641, %v729
    %vm836 = vcmp.eq.f32.partialorder %v642, %v731
    %vm837 = vcmp.eq.f32.partialorder %v643, %v733
    %vm838 = vcmp.eq.f32.partialorder %v644, %v735
    %vm839 = vcmp.eq.f32.partialorder %v645, %v737
    %vm840 = vcmp.eq.f32.partialorder %v646, %v739
    %vm841 = vcmp.eq.f32.partialorder %v647, %v741
    %vm842 = vcmp.eq.f32.partialorder %v648, %v743
    %vm843 = vcmp.eq.f32.partialorder %v649, %v745
    %vm844 = vcmp.eq.f32.partialorder %v650, %v747
    %vm845 = vcmp.eq.f32.partialorder %v651, %v749
    %vm846 = vcmp.eq.f32.partialorder %v652, %v751
    %vm847 = vcmp.eq.f32.partialorder %v653, %v753
    %vm848 = vcmp.eq.f32.partialorder %v654, %v755
    %vm849 = vcmp.eq.f32.partialorder %v655, %v757
    %vm850 = vcmp.eq.f32.partialorder %v656, %v759
    %vm851 = vcmp.eq.f32.partialorder %v657, %v761
    %vm852 = vcmp.eq.f32.partialorder %v658, %v763
    %vm853 = vcmp.eq.f32.partialorder %v659, %v765
    %vm854 = vcmp.eq.f32.partialorder %v660, %v767
    %vm855 = vcmp.eq.f32.partialorder %v661, %v769
    %vm856 = vcmp.eq.f32.partialorder %v662, %v771
    %vm857 = vcmp.eq.f32.partialorder %v663, %v773
    %vm858 = vcmp.eq.f32.partialorder %v664, %v775
    %vm859 = vcmp.eq.f32.partialorder %v665, %v777
    %vm860 = vcmp.eq.f32.partialorder %v666, %v779
    %vm861 = vcmp.eq.f32.partialorder %v667, %v781
    %vm862 = vcmp.eq.f32.partialorder %v668, %v783
    %vm863 = vcmp.eq.f32.partialorder %v669, %v785
    %vm864 = vcmp.eq.f32.partialorder %v670, %v787
    %vm865 = vcmp.eq.f32.partialorder %v671, %v789
    %vm866 = vcmp.eq.f32.partialorder %v672, %v791
    %vm867 = vcmp.eq.f32.partialorder %v673, %v793
    %vm868 = vcmp.eq.f32.partialorder %v674, %v795
    %vm869 = vcmp.eq.f32.partialorder %v675, %v797
    %vm870 = vcmp.eq.f32.partialorder %v676, %v799
    %vm871 = vcmp.eq.f32.partialorder %v677, %v801
    %vm872 = vcmp.eq.f32.partialorder %v678, %v803
    %vm873 = vcmp.eq.f32.partialorder %v679, %v805
    %vm874 = vcmp.eq.f32.partialorder %v680, %v807
    %vm875 = vcmp.eq.f32.partialorder %v681, %v809
    %v876 = vsel %vm812, %v811, 128
    %v877 = vsel %vm813, %v811, 128
    %v878 = vsel %vm814, %v811, 128
    %v879 = vsel %vm815, %v811, 128
    %v880 = vsel %vm816, %v811, 128
    %v881 = vsel %vm817, %v811, 128
    %v882 = vsel %vm818, %v811, 128
    %v883 = vsel %vm819, %v811, 128
    %v884 = vsel %vm820, %v811, 128
    %v885 = vsel %vm821, %v811, 128
    %v886 = vsel %vm822, %v811, 128
    %v887 = vsel %vm823, %v811, 128
    %v888 = vsel %vm824, %v811, 128
    %v889 = vsel %vm825, %v811, 128
    %v890 = vsel %vm826, %v811, 128
    %v891 = vsel %vm827, %v811, 128
    %v892 = vsel %vm828, %v811, 128
    %v893 = vsel %vm829, %v811, 128
    %v894 = vsel %vm830, %v811, 128
    %v895 = vsel %vm831, %v811, 128
    %v896 = vsel %vm832, %v811, 128
    %v897 = vsel %vm833, %v811, 128
    %v898 = vsel %vm834, %v811, 128
    %v899 = vsel %vm835, %v811, 128
    %v900 = vsel %vm836, %v811, 128
    %v901 = vsel %vm837, %v811, 128
    %v902 = vsel %vm838, %v811, 128
    %v903 = vsel %vm839, %v811, 128
    %v904 = vsel %vm840, %v811, 128
    %v905 = vsel %vm841, %v811, 128
    %v906 = vsel %vm842, %v811, 128
    %v907 = vsel %vm843, %v811, 128
    %v908 = vsel %vm844, %v811, 128
    %v909 = vsel %vm845, %v811, 128
    %v910 = vsel %vm846, %v811, 128
    %v911 = vsel %vm847, %v811, 128
    %v912 = vsel %vm848, %v811, 128
    %v913 = vsel %vm849, %v811, 128
    %v914 = vsel %vm850, %v811, 128
    %v915 = vsel %vm851, %v811, 128
    %v916 = vsel %vm852, %v811, 128
    %v917 = vsel %vm853, %v811, 128
    %v918 = vsel %vm854, %v811, 128
    %v919 = vsel %vm855, %v811, 128
    %v920 = vsel %vm856, %v811, 128
    %v921 = vsel %vm857, %v811, 128
    %v922 = vsel %vm858, %v811, 128
    %v923 = vsel %vm859, %v811, 128
    %v924 = vsel %vm860, %v811, 128
    %v925 = vsel %vm861, %v811, 128
    %v926 = vsel %vm862, %v811, 128
    %v927 = vsel %vm863, %v811, 128
    %v928 = vsel %vm864, %v811, 128
    %v929 = vsel %vm865, %v811, 128
    %v930 = vsel %vm866, %v811, 128
    %v931 = vsel %vm867, %v811, 128
    %v932 = vsel %vm868, %v811, 128
    %v933 = vsel %vm869, %v811, 128
    %v934 = vsel %vm870, %v811, 128
    %v935 = vsel %vm871, %v811, 128
    %v936 = vsel %vm872, %v811, 128
    %v937 = vsel %vm873, %v811, 128
    %v938 = vsel %vm874, %v811, 128
    %v939 = vsel %vm875, %v811, 128
    %v940 = vand.u32 %v876, 65535
    %v941 = vshra.s32 %v876, 16
    %v942 = vcvt.s32.f32 %v940
    %v943 = vcvt.s32.f32 %v941
    %944 = vmin.xlane.f32.xlu0 %v943
    %v945 = vpop.xlane.xlu0 %944
    %vm946 = vcmp.eq.f32.partialorder %v943, %v945
    %v947 = vsel %vm946, %v942, inf
    %948 = vmin.xlane.f32.xlu0 %v947
    %v949 = vpop.xlane.xlu0 %948
    %v950 = vcvt.f32.s32 %v949
    %v951 = vcvt.f32.s32 %v945
    %v952 = vshll.u32 %v951, 16
    %v953 = vadd.s32 %v952, %v950
    %v954 = vand.u32 %v877, 65535
    %v955 = vshra.s32 %v877, 16
    %v956 = vcvt.s32.f32 %v954
    %v957 = vcvt.s32.f32 %v955
    %958 = vmin.xlane.f32.xlu0 %v957
    %v959 = vpop.xlane.xlu0 %958
    %vm960 = vcmp.eq.f32.partialorder %v957, %v959
    %v961 = vsel %vm960, %v956, inf
    %962 = vmin.xlane.f32.xlu0 %v961
    %v963 = vpop.xlane.xlu0 %962
    %v964 = vcvt.f32.s32 %v963
    %v965 = vcvt.f32.s32 %v959
    %v966 = vshll.u32 %v965, 16
    %v967 = vadd.s32 %v966, %v964
    %v968 = vand.u32 %v878, 65535
    %v969 = vshra.s32 %v878, 16
    %v970 = vcvt.s32.f32 %v968
    %v971 = vcvt.s32.f32 %v969
    %972 = vmin.xlane.f32.xlu0 %v971
    %v973 = vpop.xlane.xlu0 %972
    %vm974 = vcmp.eq.f32.partialorder %v971, %v973
    %v975 = vsel %vm974, %v970, inf
    %976 = vmin.xlane.f32.xlu0 %v975
    %v977 = vpop.xlane.xlu0 %976
    %v978 = vcvt.f32.s32 %v977
    %v979 = vcvt.f32.s32 %v973
    %v980 = vshll.u32 %v979, 16
    %v981 = vadd.s32 %v980, %v978
    %v982 = vand.u32 %v879, 65535
    %v983 = vshra.s32 %v879, 16
    %v984 = vcvt.s32.f32 %v982
    %v985 = vcvt.s32.f32 %v983
    %986 = vmin.xlane.f32.xlu0 %v985
    %v987 = vpop.xlane.xlu0 %986
    %vm988 = vcmp.eq.f32.partialorder %v985, %v987
    %v989 = vsel %vm988, %v984, inf
    %990 = vmin.xlane.f32.xlu0 %v989
    %v991 = vpop.xlane.xlu0 %990
    %v992 = vcvt.f32.s32 %v991
    %v993 = vcvt.f32.s32 %v987
    %v994 = vshll.u32 %v993, 16
    %v995 = vadd.s32 %v994, %v992
    %v996 = vand.u32 %v880, 65535
    %v997 = vshra.s32 %v880, 16
    %v998 = vcvt.s32.f32 %v996
    %v999 = vcvt.s32.f32 %v997
    %1000 = vmin.xlane.f32.xlu0 %v999
    %v1001 = vpop.xlane.xlu0 %1000
    %vm1002 = vcmp.eq.f32.partialorder %v999, %v1001
    %v1003 = vsel %vm1002, %v998, inf
    %1004 = vmin.xlane.f32.xlu0 %v1003
    %v1005 = vpop.xlane.xlu0 %1004
    %v1006 = vcvt.f32.s32 %v1005
    %v1007 = vcvt.f32.s32 %v1001
    %v1008 = vshll.u32 %v1007, 16
    %v1009 = vadd.s32 %v1008, %v1006
    %v1010 = vand.u32 %v881, 65535
    %v1011 = vshra.s32 %v881, 16
    %v1012 = vcvt.s32.f32 %v1010
    %v1013 = vcvt.s32.f32 %v1011
    %1014 = vmin.xlane.f32.xlu0 %v1013
    %v1015 = vpop.xlane.xlu0 %1014
    %vm1016 = vcmp.eq.f32.partialorder %v1013, %v1015
    %v1017 = vsel %vm1016, %v1012, inf
    %1018 = vmin.xlane.f32.xlu0 %v1017
    %v1019 = vpop.xlane.xlu0 %1018
    %v1020 = vcvt.f32.s32 %v1019
    %v1021 = vcvt.f32.s32 %v1015
    %v1022 = vshll.u32 %v1021, 16
    %v1023 = vadd.s32 %v1022, %v1020
    %v1024 = vand.u32 %v882, 65535
    %v1025 = vshra.s32 %v882, 16
    %v1026 = vcvt.s32.f32 %v1024
    %v1027 = vcvt.s32.f32 %v1025
    %1028 = vmin.xlane.f32.xlu0 %v1027
    %v1029 = vpop.xlane.xlu0 %1028
    %vm1030 = vcmp.eq.f32.partialorder %v1027, %v1029
    %v1031 = vsel %vm1030, %v1026, inf
    %1032 = vmin.xlane.f32.xlu0 %v1031
    %v1033 = vpop.xlane.xlu0 %1032
    %v1034 = vcvt.f32.s32 %v1033
    %v1035 = vcvt.f32.s32 %v1029
    %v1036 = vshll.u32 %v1035, 16
    %v1037 = vadd.s32 %v1036, %v1034
    %v1038 = vand.u32 %v883, 65535
    %v1039 = vshra.s32 %v883, 16
    %v1040 = vcvt.s32.f32 %v1038
    %v1041 = vcvt.s32.f32 %v1039
    %1042 = vmin.xlane.f32.xlu0 %v1041
    %v1043 = vpop.xlane.xlu0 %1042
    %vm1044 = vcmp.eq.f32.partialorder %v1041, %v1043
    %v1045 = vsel %vm1044, %v1040, inf
    %1046 = vmin.xlane.f32.xlu0 %v1045
    %v1047 = vpop.xlane.xlu0 %1046
    %v1048 = vcvt.f32.s32 %v1047
    %v1049 = vcvt.f32.s32 %v1043
    %v1050 = vshll.u32 %v1049, 16
    %v1051 = vadd.s32 %v1050, %v1048
    %v1052 = vand.u32 %v884, 65535
    %v1053 = vshra.s32 %v884, 16
    %v1054 = vcvt.s32.f32 %v1052
    %v1055 = vcvt.s32.f32 %v1053
    %1056 = vmin.xlane.f32.xlu0 %v1055
    %v1057 = vpop.xlane.xlu0 %1056
    %vm1058 = vcmp.eq.f32.partialorder %v1055, %v1057
    %v1059 = vsel %vm1058, %v1054, inf
    %1060 = vmin.xlane.f32.xlu0 %v1059
    %v1061 = vpop.xlane.xlu0 %1060
    %v1062 = vcvt.f32.s32 %v1061
    %v1063 = vcvt.f32.s32 %v1057
    %v1064 = vshll.u32 %v1063, 16
    %v1065 = vadd.s32 %v1064, %v1062
    %v1066 = vand.u32 %v885, 65535
    %v1067 = vshra.s32 %v885, 16
    %v1068 = vcvt.s32.f32 %v1066
    %v1069 = vcvt.s32.f32 %v1067
    %1070 = vmin.xlane.f32.xlu0 %v1069
    %v1071 = vpop.xlane.xlu0 %1070
    %vm1072 = vcmp.eq.f32.partialorder %v1069, %v1071
    %v1073 = vsel %vm1072, %v1068, inf
    %1074 = vmin.xlane.f32.xlu0 %v1073
    %v1075 = vpop.xlane.xlu0 %1074
    %v1076 = vcvt.f32.s32 %v1075
    %v1077 = vcvt.f32.s32 %v1071
    %v1078 = vshll.u32 %v1077, 16
    %v1079 = vadd.s32 %v1078, %v1076
    %v1080 = vand.u32 %v886, 65535
    %v1081 = vshra.s32 %v886, 16
    %v1082 = vcvt.s32.f32 %v1080
    %v1083 = vcvt.s32.f32 %v1081
    %1084 = vmin.xlane.f32.xlu0 %v1083
    %v1085 = vpop.xlane.xlu0 %1084
    %vm1086 = vcmp.eq.f32.partialorder %v1083, %v1085
    %v1087 = vsel %vm1086, %v1082, inf
    %1088 = vmin.xlane.f32.xlu0 %v1087
    %v1089 = vpop.xlane.xlu0 %1088
    %v1090 = vcvt.f32.s32 %v1089
    %v1091 = vcvt.f32.s32 %v1085
    %v1092 = vshll.u32 %v1091, 16
    %v1093 = vadd.s32 %v1092, %v1090
    %v1094 = vand.u32 %v887, 65535
    %v1095 = vshra.s32 %v887, 16
    %v1096 = vcvt.s32.f32 %v1094
    %v1097 = vcvt.s32.f32 %v1095
    %1098 = vmin.xlane.f32.xlu0 %v1097
    %v1099 = vpop.xlane.xlu0 %1098
    %vm1100 = vcmp.eq.f32.partialorder %v1097, %v1099
    %v1101 = vsel %vm1100, %v1096, inf
    %1102 = vmin.xlane.f32.xlu0 %v1101
    %v1103 = vpop.xlane.xlu0 %1102
    %v1104 = vcvt.f32.s32 %v1103
    %v1105 = vcvt.f32.s32 %v1099
    %v1106 = vshll.u32 %v1105, 16
    %v1107 = vadd.s32 %v1106, %v1104
    %v1108 = vand.u32 %v888, 65535
    %v1109 = vshra.s32 %v888, 16
    %v1110 = vcvt.s32.f32 %v1108
    %v1111 = vcvt.s32.f32 %v1109
    %1112 = vmin.xlane.f32.xlu0 %v1111
    %v1113 = vpop.xlane.xlu0 %1112
    %vm1114 = vcmp.eq.f32.partialorder %v1111, %v1113
    %v1115 = vsel %vm1114, %v1110, inf
    %1116 = vmin.xlane.f32.xlu0 %v1115
    %v1117 = vpop.xlane.xlu0 %1116
    %v1118 = vcvt.f32.s32 %v1117
    %v1119 = vcvt.f32.s32 %v1113
    %v1120 = vshll.u32 %v1119, 16
    %v1121 = vadd.s32 %v1120, %v1118
    %v1122 = vand.u32 %v889, 65535
    %v1123 = vshra.s32 %v889, 16
    %v1124 = vcvt.s32.f32 %v1122
    %v1125 = vcvt.s32.f32 %v1123
    %1126 = vmin.xlane.f32.xlu0 %v1125
    %v1127 = vpop.xlane.xlu0 %1126
    %vm1128 = vcmp.eq.f32.partialorder %v1125, %v1127
    %v1129 = vsel %vm1128, %v1124, inf
    %1130 = vmin.xlane.f32.xlu0 %v1129
    %v1131 = vpop.xlane.xlu0 %1130
    %v1132 = vcvt.f32.s32 %v1131
    %v1133 = vcvt.f32.s32 %v1127
    %v1134 = vshll.u32 %v1133, 16
    %v1135 = vadd.s32 %v1134, %v1132
    %v1136 = vand.u32 %v890, 65535
    %v1137 = vshra.s32 %v890, 16
    %v1138 = vcvt.s32.f32 %v1136
    %v1139 = vcvt.s32.f32 %v1137
    %1140 = vmin.xlane.f32.xlu0 %v1139
    %v1141 = vpop.xlane.xlu0 %1140
    %vm1142 = vcmp.eq.f32.partialorder %v1139, %v1141
    %v1143 = vsel %vm1142, %v1138, inf
    %1144 = vmin.xlane.f32.xlu0 %v1143
    %v1145 = vpop.xlane.xlu0 %1144
    %v1146 = vcvt.f32.s32 %v1145
    %v1147 = vcvt.f32.s32 %v1141
    %v1148 = vshll.u32 %v1147, 16
    %v1149 = vadd.s32 %v1148, %v1146
    %v1150 = vand.u32 %v891, 65535
    %v1151 = vshra.s32 %v891, 16
    %v1152 = vcvt.s32.f32 %v1150
    %v1153 = vcvt.s32.f32 %v1151
    %1154 = vmin.xlane.f32.xlu0 %v1153
    %v1155 = vpop.xlane.xlu0 %1154
    %vm1156 = vcmp.eq.f32.partialorder %v1153, %v1155
    %v1157 = vsel %vm1156, %v1152, inf
    %1158 = vmin.xlane.f32.xlu0 %v1157
    %v1159 = vpop.xlane.xlu0 %1158
    %v1160 = vcvt.f32.s32 %v1159
    %v1161 = vcvt.f32.s32 %v1155
    %v1162 = vshll.u32 %v1161, 16
    %v1163 = vadd.s32 %v1162, %v1160
    %v1164 = vand.u32 %v892, 65535
    %v1165 = vshra.s32 %v892, 16
    %v1166 = vcvt.s32.f32 %v1164
    %v1167 = vcvt.s32.f32 %v1165
    %1168 = vmin.xlane.f32.xlu0 %v1167
    %v1169 = vpop.xlane.xlu0 %1168
    %vm1170 = vcmp.eq.f32.partialorder %v1167, %v1169
    %v1171 = vsel %vm1170, %v1166, inf
    %1172 = vmin.xlane.f32.xlu0 %v1171
    %v1173 = vpop.xlane.xlu0 %1172
    %v1174 = vcvt.f32.s32 %v1173
    %v1175 = vcvt.f32.s32 %v1169
    %v1176 = vshll.u32 %v1175, 16
    %v1177 = vadd.s32 %v1176, %v1174
    %v1178 = vand.u32 %v893, 65535
    %v1179 = vshra.s32 %v893, 16
    %v1180 = vcvt.s32.f32 %v1178
    %v1181 = vcvt.s32.f32 %v1179
    %1182 = vmin.xlane.f32.xlu0 %v1181
    %v1183 = vpop.xlane.xlu0 %1182
    %vm1184 = vcmp.eq.f32.partialorder %v1181, %v1183
    %v1185 = vsel %vm1184, %v1180, inf
    %1186 = vmin.xlane.f32.xlu0 %v1185
    %v1187 = vpop.xlane.xlu0 %1186
    %v1188 = vcvt.f32.s32 %v1187
    %v1189 = vcvt.f32.s32 %v1183
    %v1190 = vshll.u32 %v1189, 16
    %v1191 = vadd.s32 %v1190, %v1188
    %v1192 = vand.u32 %v894, 65535
    %v1193 = vshra.s32 %v894, 16
    %v1194 = vcvt.s32.f32 %v1192
    %v1195 = vcvt.s32.f32 %v1193
    %1196 = vmin.xlane.f32.xlu0 %v1195
    %v1197 = vpop.xlane.xlu0 %1196
    %vm1198 = vcmp.eq.f32.partialorder %v1195, %v1197
    %v1199 = vsel %vm1198, %v1194, inf
    %1200 = vmin.xlane.f32.xlu0 %v1199
    %v1201 = vpop.xlane.xlu0 %1200
    %v1202 = vcvt.f32.s32 %v1201
    %v1203 = vcvt.f32.s32 %v1197
    %v1204 = vshll.u32 %v1203, 16
    %v1205 = vadd.s32 %v1204, %v1202
    %v1206 = vand.u32 %v895, 65535
    %v1207 = vshra.s32 %v895, 16
    %v1208 = vcvt.s32.f32 %v1206
    %v1209 = vcvt.s32.f32 %v1207
    %1210 = vmin.xlane.f32.xlu0 %v1209
    %v1211 = vpop.xlane.xlu0 %1210
    %vm1212 = vcmp.eq.f32.partialorder %v1209, %v1211
    %v1213 = vsel %vm1212, %v1208, inf
    %1214 = vmin.xlane.f32.xlu0 %v1213
    %v1215 = vpop.xlane.xlu0 %1214
    %v1216 = vcvt.f32.s32 %v1215
    %v1217 = vcvt.f32.s32 %v1211
    %v1218 = vshll.u32 %v1217, 16
    %v1219 = vadd.s32 %v1218, %v1216
    %v1220 = vand.u32 %v896, 65535
    %v1221 = vshra.s32 %v896, 16
    %v1222 = vcvt.s32.f32 %v1220
    %v1223 = vcvt.s32.f32 %v1221
    %1224 = vmin.xlane.f32.xlu0 %v1223
    %v1225 = vpop.xlane.xlu0 %1224
    %vm1226 = vcmp.eq.f32.partialorder %v1223, %v1225
    %v1227 = vsel %vm1226, %v1222, inf
    %1228 = vmin.xlane.f32.xlu0 %v1227
    %v1229 = vpop.xlane.xlu0 %1228
    %v1230 = vcvt.f32.s32 %v1229
    %v1231 = vcvt.f32.s32 %v1225
    %v1232 = vshll.u32 %v1231, 16
    %v1233 = vadd.s32 %v1232, %v1230
    %v1234 = vand.u32 %v897, 65535
    %v1235 = vshra.s32 %v897, 16
    %v1236 = vcvt.s32.f32 %v1234
    %v1237 = vcvt.s32.f32 %v1235
    %1238 = vmin.xlane.f32.xlu0 %v1237
    %v1239 = vpop.xlane.xlu0 %1238
    %vm1240 = vcmp.eq.f32.partialorder %v1237, %v1239
    %v1241 = vsel %vm1240, %v1236, inf
    %1242 = vmin.xlane.f32.xlu0 %v1241
    %v1243 = vpop.xlane.xlu0 %1242
    %v1244 = vcvt.f32.s32 %v1243
    %v1245 = vcvt.f32.s32 %v1239
    %v1246 = vshll.u32 %v1245, 16
    %v1247 = vadd.s32 %v1246, %v1244
    %v1248 = vand.u32 %v898, 65535
    %v1249 = vshra.s32 %v898, 16
    %v1250 = vcvt.s32.f32 %v1248
    %v1251 = vcvt.s32.f32 %v1249
    %1252 = vmin.xlane.f32.xlu0 %v1251
    %v1253 = vpop.xlane.xlu0 %1252
    %vm1254 = vcmp.eq.f32.partialorder %v1251, %v1253
    %v1255 = vsel %vm1254, %v1250, inf
    %1256 = vmin.xlane.f32.xlu0 %v1255
    %v1257 = vpop.xlane.xlu0 %1256
    %v1258 = vcvt.f32.s32 %v1257
    %v1259 = vcvt.f32.s32 %v1253
    %v1260 = vshll.u32 %v1259, 16
    %v1261 = vadd.s32 %v1260, %v1258
    %v1262 = vand.u32 %v899, 65535
    %v1263 = vshra.s32 %v899, 16
    %v1264 = vcvt.s32.f32 %v1262
    %v1265 = vcvt.s32.f32 %v1263
    %1266 = vmin.xlane.f32.xlu0 %v1265
    %v1267 = vpop.xlane.xlu0 %1266
    %vm1268 = vcmp.eq.f32.partialorder %v1265, %v1267
    %v1269 = vsel %vm1268, %v1264, inf
    %1270 = vmin.xlane.f32.xlu0 %v1269
    %v1271 = vpop.xlane.xlu0 %1270
    %v1272 = vcvt.f32.s32 %v1271
    %v1273 = vcvt.f32.s32 %v1267
    %v1274 = vshll.u32 %v1273, 16
    %v1275 = vadd.s32 %v1274, %v1272
    %v1276 = vand.u32 %v900, 65535
    %v1277 = vshra.s32 %v900, 16
    %v1278 = vcvt.s32.f32 %v1276
    %v1279 = vcvt.s32.f32 %v1277
    %1280 = vmin.xlane.f32.xlu0 %v1279
    %v1281 = vpop.xlane.xlu0 %1280
    %vm1282 = vcmp.eq.f32.partialorder %v1279, %v1281
    %v1283 = vsel %vm1282, %v1278, inf
    %1284 = vmin.xlane.f32.xlu0 %v1283
    %v1285 = vpop.xlane.xlu0 %1284
    %v1286 = vcvt.f32.s32 %v1285
    %v1287 = vcvt.f32.s32 %v1281
    %v1288 = vshll.u32 %v1287, 16
    %v1289 = vadd.s32 %v1288, %v1286
    %v1290 = vand.u32 %v901, 65535
    %v1291 = vshra.s32 %v901, 16
    %v1292 = vcvt.s32.f32 %v1290
    %v1293 = vcvt.s32.f32 %v1291
    %1294 = vmin.xlane.f32.xlu0 %v1293
    %v1295 = vpop.xlane.xlu0 %1294
    %vm1296 = vcmp.eq.f32.partialorder %v1293, %v1295
    %v1297 = vsel %vm1296, %v1292, inf
    %1298 = vmin.xlane.f32.xlu0 %v1297
    %v1299 = vpop.xlane.xlu0 %1298
    %v1300 = vcvt.f32.s32 %v1299
    %v1301 = vcvt.f32.s32 %v1295
    %v1302 = vshll.u32 %v1301, 16
    %v1303 = vadd.s32 %v1302, %v1300
    %v1304 = vand.u32 %v902, 65535
    %v1305 = vshra.s32 %v902, 16
    %v1306 = vcvt.s32.f32 %v1304
    %v1307 = vcvt.s32.f32 %v1305
    %1308 = vmin.xlane.f32.xlu0 %v1307
    %v1309 = vpop.xlane.xlu0 %1308
    %vm1310 = vcmp.eq.f32.partialorder %v1307, %v1309
    %v1311 = vsel %vm1310, %v1306, inf
    %1312 = vmin.xlane.f32.xlu0 %v1311
    %v1313 = vpop.xlane.xlu0 %1312
    %v1314 = vcvt.f32.s32 %v1313
    %v1315 = vcvt.f32.s32 %v1309
    %v1316 = vshll.u32 %v1315, 16
    %v1317 = vadd.s32 %v1316, %v1314
    %v1318 = vand.u32 %v903, 65535
    %v1319 = vshra.s32 %v903, 16
    %v1320 = vcvt.s32.f32 %v1318
    %v1321 = vcvt.s32.f32 %v1319
    %1322 = vmin.xlane.f32.xlu0 %v1321
    %v1323 = vpop.xlane.xlu0 %1322
    %vm1324 = vcmp.eq.f32.partialorder %v1321, %v1323
    %v1325 = vsel %vm1324, %v1320, inf
    %1326 = vmin.xlane.f32.xlu0 %v1325
    %v1327 = vpop.xlane.xlu0 %1326
    %v1328 = vcvt.f32.s32 %v1327
    %v1329 = vcvt.f32.s32 %v1323
    %v1330 = vshll.u32 %v1329, 16
    %v1331 = vadd.s32 %v1330, %v1328
    %v1332 = vand.u32 %v904, 65535
    %v1333 = vshra.s32 %v904, 16
    %v1334 = vcvt.s32.f32 %v1332
    %v1335 = vcvt.s32.f32 %v1333
    %1336 = vmin.xlane.f32.xlu0 %v1335
    %v1337 = vpop.xlane.xlu0 %1336
    %vm1338 = vcmp.eq.f32.partialorder %v1335, %v1337
    %v1339 = vsel %vm1338, %v1334, inf
    %1340 = vmin.xlane.f32.xlu0 %v1339
    %v1341 = vpop.xlane.xlu0 %1340
    %v1342 = vcvt.f32.s32 %v1341
    %v1343 = vcvt.f32.s32 %v1337
    %v1344 = vshll.u32 %v1343, 16
    %v1345 = vadd.s32 %v1344, %v1342
    %v1346 = vand.u32 %v905, 65535
    %v1347 = vshra.s32 %v905, 16
    %v1348 = vcvt.s32.f32 %v1346
    %v1349 = vcvt.s32.f32 %v1347
    %1350 = vmin.xlane.f32.xlu0 %v1349
    %v1351 = vpop.xlane.xlu0 %1350
    %vm1352 = vcmp.eq.f32.partialorder %v1349, %v1351
    %v1353 = vsel %vm1352, %v1348, inf
    %1354 = vmin.xlane.f32.xlu0 %v1353
    %v1355 = vpop.xlane.xlu0 %1354
    %v1356 = vcvt.f32.s32 %v1355
    %v1357 = vcvt.f32.s32 %v1351
    %v1358 = vshll.u32 %v1357, 16
    %v1359 = vadd.s32 %v1358, %v1356
    %v1360 = vand.u32 %v906, 65535
    %v1361 = vshra.s32 %v906, 16
    %v1362 = vcvt.s32.f32 %v1360
    %v1363 = vcvt.s32.f32 %v1361
    %1364 = vmin.xlane.f32.xlu0 %v1363
    %v1365 = vpop.xlane.xlu0 %1364
    %vm1366 = vcmp.eq.f32.partialorder %v1363, %v1365
    %v1367 = vsel %vm1366, %v1362, inf
    %1368 = vmin.xlane.f32.xlu0 %v1367
    %v1369 = vpop.xlane.xlu0 %1368
    %v1370 = vcvt.f32.s32 %v1369
    %v1371 = vcvt.f32.s32 %v1365
    %v1372 = vshll.u32 %v1371, 16
    %v1373 = vadd.s32 %v1372, %v1370
    %v1374 = vand.u32 %v907, 65535
    %v1375 = vshra.s32 %v907, 16
    %v1376 = vcvt.s32.f32 %v1374
    %v1377 = vcvt.s32.f32 %v1375
    %1378 = vmin.xlane.f32.xlu0 %v1377
    %v1379 = vpop.xlane.xlu0 %1378
    %vm1380 = vcmp.eq.f32.partialorder %v1377, %v1379
    %v1381 = vsel %vm1380, %v1376, inf
    %1382 = vmin.xlane.f32.xlu0 %v1381
    %v1383 = vpop.xlane.xlu0 %1382
    %v1384 = vcvt.f32.s32 %v1383
    %v1385 = vcvt.f32.s32 %v1379
    %v1386 = vshll.u32 %v1385, 16
    %v1387 = vadd.s32 %v1386, %v1384
    %v1388 = vand.u32 %v908, 65535
    %v1389 = vshra.s32 %v908, 16
    %v1390 = vcvt.s32.f32 %v1388
    %v1391 = vcvt.s32.f32 %v1389
    %1392 = vmin.xlane.f32.xlu0 %v1391
    %v1393 = vpop.xlane.xlu0 %1392
    %vm1394 = vcmp.eq.f32.partialorder %v1391, %v1393
    %v1395 = vsel %vm1394, %v1390, inf
    %1396 = vmin.xlane.f32.xlu0 %v1395
    %v1397 = vpop.xlane.xlu0 %1396
    %v1398 = vcvt.f32.s32 %v1397
    %v1399 = vcvt.f32.s32 %v1393
    %v1400 = vshll.u32 %v1399, 16
    %v1401 = vadd.s32 %v1400, %v1398
    %v1402 = vand.u32 %v909, 65535
    %v1403 = vshra.s32 %v909, 16
    %v1404 = vcvt.s32.f32 %v1402
    %v1405 = vcvt.s32.f32 %v1403
    %1406 = vmin.xlane.f32.xlu0 %v1405
    %v1407 = vpop.xlane.xlu0 %1406
    %vm1408 = vcmp.eq.f32.partialorder %v1405, %v1407
    %v1409 = vsel %vm1408, %v1404, inf
    %1410 = vmin.xlane.f32.xlu0 %v1409
    %v1411 = vpop.xlane.xlu0 %1410
    %v1412 = vcvt.f32.s32 %v1411
    %v1413 = vcvt.f32.s32 %v1407
    %v1414 = vshll.u32 %v1413, 16
    %v1415 = vadd.s32 %v1414, %v1412
    %v1416 = vand.u32 %v910, 65535
    %v1417 = vshra.s32 %v910, 16
    %v1418 = vcvt.s32.f32 %v1416
    %v1419 = vcvt.s32.f32 %v1417
    %1420 = vmin.xlane.f32.xlu0 %v1419
    %v1421 = vpop.xlane.xlu0 %1420
    %vm1422 = vcmp.eq.f32.partialorder %v1419, %v1421
    %v1423 = vsel %vm1422, %v1418, inf
    %1424 = vmin.xlane.f32.xlu0 %v1423
    %v1425 = vpop.xlane.xlu0 %1424
    %v1426 = vcvt.f32.s32 %v1425
    %v1427 = vcvt.f32.s32 %v1421
    %v1428 = vshll.u32 %v1427, 16
    %v1429 = vadd.s32 %v1428, %v1426
    %v1430 = vand.u32 %v911, 65535
    %v1431 = vshra.s32 %v911, 16
    %v1432 = vcvt.s32.f32 %v1430
    %v1433 = vcvt.s32.f32 %v1431
    %1434 = vmin.xlane.f32.xlu0 %v1433
    %v1435 = vpop.xlane.xlu0 %1434
    %vm1436 = vcmp.eq.f32.partialorder %v1433, %v1435
    %v1437 = vsel %vm1436, %v1432, inf
    %1438 = vmin.xlane.f32.xlu0 %v1437
    %v1439 = vpop.xlane.xlu0 %1438
    %v1440 = vcvt.f32.s32 %v1439
    %v1441 = vcvt.f32.s32 %v1435
    %v1442 = vshll.u32 %v1441, 16
    %v1443 = vadd.s32 %v1442, %v1440
    %v1444 = vand.u32 %v912, 65535
    %v1445 = vshra.s32 %v912, 16
    %v1446 = vcvt.s32.f32 %v1444
    %v1447 = vcvt.s32.f32 %v1445
    %1448 = vmin.xlane.f32.xlu0 %v1447
    %v1449 = vpop.xlane.xlu0 %1448
    %vm1450 = vcmp.eq.f32.partialorder %v1447, %v1449
    %v1451 = vsel %vm1450, %v1446, inf
    %1452 = vmin.xlane.f32.xlu0 %v1451
    %v1453 = vpop.xlane.xlu0 %1452
    %v1454 = vcvt.f32.s32 %v1453
    %v1455 = vcvt.f32.s32 %v1449
    %v1456 = vshll.u32 %v1455, 16
    %v1457 = vadd.s32 %v1456, %v1454
    %v1458 = vand.u32 %v913, 65535
    %v1459 = vshra.s32 %v913, 16
    %v1460 = vcvt.s32.f32 %v1458
    %v1461 = vcvt.s32.f32 %v1459
    %1462 = vmin.xlane.f32.xlu0 %v1461
    %v1463 = vpop.xlane.xlu0 %1462
    %vm1464 = vcmp.eq.f32.partialorder %v1461, %v1463
    %v1465 = vsel %vm1464, %v1460, inf
    %1466 = vmin.xlane.f32.xlu0 %v1465
    %v1467 = vpop.xlane.xlu0 %1466
    %v1468 = vcvt.f32.s32 %v1467
    %v1469 = vcvt.f32.s32 %v1463
    %v1470 = vshll.u32 %v1469, 16
    %v1471 = vadd.s32 %v1470, %v1468
    %v1472 = vand.u32 %v914, 65535
    %v1473 = vshra.s32 %v914, 16
    %v1474 = vcvt.s32.f32 %v1472
    %v1475 = vcvt.s32.f32 %v1473
    %1476 = vmin.xlane.f32.xlu0 %v1475
    %v1477 = vpop.xlane.xlu0 %1476
    %vm1478 = vcmp.eq.f32.partialorder %v1475, %v1477
    %v1479 = vsel %vm1478, %v1474, inf
    %1480 = vmin.xlane.f32.xlu0 %v1479
    %v1481 = vpop.xlane.xlu0 %1480
    %v1482 = vcvt.f32.s32 %v1481
    %v1483 = vcvt.f32.s32 %v1477
    %v1484 = vshll.u32 %v1483, 16
    %v1485 = vadd.s32 %v1484, %v1482
    %v1486 = vand.u32 %v915, 65535
    %v1487 = vshra.s32 %v915, 16
    %v1488 = vcvt.s32.f32 %v1486
    %v1489 = vcvt.s32.f32 %v1487
    %1490 = vmin.xlane.f32.xlu0 %v1489
    %v1491 = vpop.xlane.xlu0 %1490
    %vm1492 = vcmp.eq.f32.partialorder %v1489, %v1491
    %v1493 = vsel %vm1492, %v1488, inf
    %1494 = vmin.xlane.f32.xlu0 %v1493
    %v1495 = vpop.xlane.xlu0 %1494
    %v1496 = vcvt.f32.s32 %v1495
    %v1497 = vcvt.f32.s32 %v1491
    %v1498 = vshll.u32 %v1497, 16
    %v1499 = vadd.s32 %v1498, %v1496
    %v1500 = vand.u32 %v916, 65535
    %v1501 = vshra.s32 %v916, 16
    %v1502 = vcvt.s32.f32 %v1500
    %v1503 = vcvt.s32.f32 %v1501
    %1504 = vmin.xlane.f32.xlu0 %v1503
    %v1505 = vpop.xlane.xlu0 %1504
    %vm1506 = vcmp.eq.f32.partialorder %v1503, %v1505
    %v1507 = vsel %vm1506, %v1502, inf
    %1508 = vmin.xlane.f32.xlu0 %v1507
    %v1509 = vpop.xlane.xlu0 %1508
    %v1510 = vcvt.f32.s32 %v1509
    %v1511 = vcvt.f32.s32 %v1505
    %v1512 = vshll.u32 %v1511, 16
    %v1513 = vadd.s32 %v1512, %v1510
    %v1514 = vand.u32 %v917, 65535
    %v1515 = vshra.s32 %v917, 16
    %v1516 = vcvt.s32.f32 %v1514
    %v1517 = vcvt.s32.f32 %v1515
    %1518 = vmin.xlane.f32.xlu0 %v1517
    %v1519 = vpop.xlane.xlu0 %1518
    %vm1520 = vcmp.eq.f32.partialorder %v1517, %v1519
    %v1521 = vsel %vm1520, %v1516, inf
    %1522 = vmin.xlane.f32.xlu0 %v1521
    %v1523 = vpop.xlane.xlu0 %1522
    %v1524 = vcvt.f32.s32 %v1523
    %v1525 = vcvt.f32.s32 %v1519
    %v1526 = vshll.u32 %v1525, 16
    %v1527 = vadd.s32 %v1526, %v1524
    %v1528 = vand.u32 %v918, 65535
    %v1529 = vshra.s32 %v918, 16
    %v1530 = vcvt.s32.f32 %v1528
    %v1531 = vcvt.s32.f32 %v1529
    %1532 = vmin.xlane.f32.xlu0 %v1531
    %v1533 = vpop.xlane.xlu0 %1532
    %vm1534 = vcmp.eq.f32.partialorder %v1531, %v1533
    %v1535 = vsel %vm1534, %v1530, inf
    %1536 = vmin.xlane.f32.xlu0 %v1535
    %v1537 = vpop.xlane.xlu0 %1536
    %v1538 = vcvt.f32.s32 %v1537
    %v1539 = vcvt.f32.s32 %v1533
    %v1540 = vshll.u32 %v1539, 16
    %v1541 = vadd.s32 %v1540, %v1538
    %v1542 = vand.u32 %v919, 65535
    %v1543 = vshra.s32 %v919, 16
    %v1544 = vcvt.s32.f32 %v1542
    %v1545 = vcvt.s32.f32 %v1543
    %1546 = vmin.xlane.f32.xlu0 %v1545
    %v1547 = vpop.xlane.xlu0 %1546
    %vm1548 = vcmp.eq.f32.partialorder %v1545, %v1547
    %v1549 = vsel %vm1548, %v1544, inf
    %1550 = vmin.xlane.f32.xlu0 %v1549
    %v1551 = vpop.xlane.xlu0 %1550
    %v1552 = vcvt.f32.s32 %v1551
    %v1553 = vcvt.f32.s32 %v1547
    %v1554 = vshll.u32 %v1553, 16
    %v1555 = vadd.s32 %v1554, %v1552
    %v1556 = vand.u32 %v920, 65535
    %v1557 = vshra.s32 %v920, 16
    %v1558 = vcvt.s32.f32 %v1556
    %v1559 = vcvt.s32.f32 %v1557
    %1560 = vmin.xlane.f32.xlu0 %v1559
    %v1561 = vpop.xlane.xlu0 %1560
    %vm1562 = vcmp.eq.f32.partialorder %v1559, %v1561
    %v1563 = vsel %vm1562, %v1558, inf
    %1564 = vmin.xlane.f32.xlu0 %v1563
    %v1565 = vpop.xlane.xlu0 %1564
    %v1566 = vcvt.f32.s32 %v1565
    %v1567 = vcvt.f32.s32 %v1561
    %v1568 = vshll.u32 %v1567, 16
    %v1569 = vadd.s32 %v1568, %v1566
    %v1570 = vand.u32 %v921, 65535
    %v1571 = vshra.s32 %v921, 16
    %v1572 = vcvt.s32.f32 %v1570
    %v1573 = vcvt.s32.f32 %v1571
    %1574 = vmin.xlane.f32.xlu0 %v1573
    %v1575 = vpop.xlane.xlu0 %1574
    %vm1576 = vcmp.eq.f32.partialorder %v1573, %v1575
    %v1577 = vsel %vm1576, %v1572, inf
    %1578 = vmin.xlane.f32.xlu0 %v1577
    %v1579 = vpop.xlane.xlu0 %1578
    %v1580 = vcvt.f32.s32 %v1579
    %v1581 = vcvt.f32.s32 %v1575
    %v1582 = vshll.u32 %v1581, 16
    %v1583 = vadd.s32 %v1582, %v1580
    %v1584 = vand.u32 %v922, 65535
    %v1585 = vshra.s32 %v922, 16
    %v1586 = vcvt.s32.f32 %v1584
    %v1587 = vcvt.s32.f32 %v1585
    %1588 = vmin.xlane.f32.xlu0 %v1587
    %v1589 = vpop.xlane.xlu0 %1588
    %vm1590 = vcmp.eq.f32.partialorder %v1587, %v1589
    %v1591 = vsel %vm1590, %v1586, inf
    %1592 = vmin.xlane.f32.xlu0 %v1591
    %v1593 = vpop.xlane.xlu0 %1592
    %v1594 = vcvt.f32.s32 %v1593
    %v1595 = vcvt.f32.s32 %v1589
    %v1596 = vshll.u32 %v1595, 16
    %v1597 = vadd.s32 %v1596, %v1594
    %v1598 = vand.u32 %v923, 65535
    %v1599 = vshra.s32 %v923, 16
    %v1600 = vcvt.s32.f32 %v1598
    %v1601 = vcvt.s32.f32 %v1599
    %1602 = vmin.xlane.f32.xlu0 %v1601
    %v1603 = vpop.xlane.xlu0 %1602
    %vm1604 = vcmp.eq.f32.partialorder %v1601, %v1603
    %v1605 = vsel %vm1604, %v1600, inf
    %1606 = vmin.xlane.f32.xlu0 %v1605
    %v1607 = vpop.xlane.xlu0 %1606
    %v1608 = vcvt.f32.s32 %v1607
    %v1609 = vcvt.f32.s32 %v1603
    %v1610 = vshll.u32 %v1609, 16
    %v1611 = vadd.s32 %v1610, %v1608
    %v1612 = vand.u32 %v924, 65535
    %v1613 = vshra.s32 %v924, 16
    %v1614 = vcvt.s32.f32 %v1612
    %v1615 = vcvt.s32.f32 %v1613
    %1616 = vmin.xlane.f32.xlu0 %v1615
    %v1617 = vpop.xlane.xlu0 %1616
    %vm1618 = vcmp.eq.f32.partialorder %v1615, %v1617
    %v1619 = vsel %vm1618, %v1614, inf
    %1620 = vmin.xlane.f32.xlu0 %v1619
    %v1621 = vpop.xlane.xlu0 %1620
    %v1622 = vcvt.f32.s32 %v1621
    %v1623 = vcvt.f32.s32 %v1617
    %v1624 = vshll.u32 %v1623, 16
    %v1625 = vadd.s32 %v1624, %v1622
    %v1626 = vand.u32 %v925, 65535
    %v1627 = vshra.s32 %v925, 16
    %v1628 = vcvt.s32.f32 %v1626
    %v1629 = vcvt.s32.f32 %v1627
    %1630 = vmin.xlane.f32.xlu0 %v1629
    %v1631 = vpop.xlane.xlu0 %1630
    %vm1632 = vcmp.eq.f32.partialorder %v1629, %v1631
    %v1633 = vsel %vm1632, %v1628, inf
    %1634 = vmin.xlane.f32.xlu0 %v1633
    %v1635 = vpop.xlane.xlu0 %1634
    %v1636 = vcvt.f32.s32 %v1635
    %v1637 = vcvt.f32.s32 %v1631
    %v1638 = vshll.u32 %v1637, 16
    %v1639 = vadd.s32 %v1638, %v1636
    %v1640 = vand.u32 %v926, 65535
    %v1641 = vshra.s32 %v926, 16
    %v1642 = vcvt.s32.f32 %v1640
    %v1643 = vcvt.s32.f32 %v1641
    %1644 = vmin.xlane.f32.xlu0 %v1643
    %v1645 = vpop.xlane.xlu0 %1644
    %vm1646 = vcmp.eq.f32.partialorder %v1643, %v1645
    %v1647 = vsel %vm1646, %v1642, inf
    %1648 = vmin.xlane.f32.xlu0 %v1647
    %v1649 = vpop.xlane.xlu0 %1648
    %v1650 = vcvt.f32.s32 %v1649
    %v1651 = vcvt.f32.s32 %v1645
    %v1652 = vshll.u32 %v1651, 16
    %v1653 = vadd.s32 %v1652, %v1650
    %v1654 = vand.u32 %v927, 65535
    %v1655 = vshra.s32 %v927, 16
    %v1656 = vcvt.s32.f32 %v1654
    %v1657 = vcvt.s32.f32 %v1655
    %1658 = vmin.xlane.f32.xlu0 %v1657
    %v1659 = vpop.xlane.xlu0 %1658
    %vm1660 = vcmp.eq.f32.partialorder %v1657, %v1659
    %v1661 = vsel %vm1660, %v1656, inf
    %1662 = vmin.xlane.f32.xlu0 %v1661
    %v1663 = vpop.xlane.xlu0 %1662
    %v1664 = vcvt.f32.s32 %v1663
    %v1665 = vcvt.f32.s32 %v1659
    %v1666 = vshll.u32 %v1665, 16
    %v1667 = vadd.s32 %v1666, %v1664
    %v1668 = vand.u32 %v928, 65535
    %v1669 = vshra.s32 %v928, 16
    %v1670 = vcvt.s32.f32 %v1668
    %v1671 = vcvt.s32.f32 %v1669
    %1672 = vmin.xlane.f32.xlu0 %v1671
    %v1673 = vpop.xlane.xlu0 %1672
    %vm1674 = vcmp.eq.f32.partialorder %v1671, %v1673
    %v1675 = vsel %vm1674, %v1670, inf
    %1676 = vmin.xlane.f32.xlu0 %v1675
    %v1677 = vpop.xlane.xlu0 %1676
    %v1678 = vcvt.f32.s32 %v1677
    %v1679 = vcvt.f32.s32 %v1673
    %v1680 = vshll.u32 %v1679, 16
    %v1681 = vadd.s32 %v1680, %v1678
    %v1682 = vand.u32 %v929, 65535
    %v1683 = vshra.s32 %v929, 16
    %v1684 = vcvt.s32.f32 %v1682
    %v1685 = vcvt.s32.f32 %v1683
    %1686 = vmin.xlane.f32.xlu0 %v1685
    %v1687 = vpop.xlane.xlu0 %1686
    %vm1688 = vcmp.eq.f32.partialorder %v1685, %v1687
    %v1689 = vsel %vm1688, %v1684, inf
    %1690 = vmin.xlane.f32.xlu0 %v1689
    %v1691 = vpop.xlane.xlu0 %1690
    %v1692 = vcvt.f32.s32 %v1691
    %v1693 = vcvt.f32.s32 %v1687
    %v1694 = vshll.u32 %v1693, 16
    %v1695 = vadd.s32 %v1694, %v1692
    %v1696 = vand.u32 %v930, 65535
    %v1697 = vshra.s32 %v930, 16
    %v1698 = vcvt.s32.f32 %v1696
    %v1699 = vcvt.s32.f32 %v1697
    %1700 = vmin.xlane.f32.xlu0 %v1699
    %v1701 = vpop.xlane.xlu0 %1700
    %vm1702 = vcmp.eq.f32.partialorder %v1699, %v1701
    %v1703 = vsel %vm1702, %v1698, inf
    %1704 = vmin.xlane.f32.xlu0 %v1703
    %v1705 = vpop.xlane.xlu0 %1704
    %v1706 = vcvt.f32.s32 %v1705
    %v1707 = vcvt.f32.s32 %v1701
    %v1708 = vshll.u32 %v1707, 16
    %v1709 = vadd.s32 %v1708, %v1706
    %v1710 = vand.u32 %v931, 65535
    %v1711 = vshra.s32 %v931, 16
    %v1712 = vcvt.s32.f32 %v1710
    %v1713 = vcvt.s32.f32 %v1711
    %1714 = vmin.xlane.f32.xlu0 %v1713
    %v1715 = vpop.xlane.xlu0 %1714
    %vm1716 = vcmp.eq.f32.partialorder %v1713, %v1715
    %v1717 = vsel %vm1716, %v1712, inf
    %1718 = vmin.xlane.f32.xlu0 %v1717
    %v1719 = vpop.xlane.xlu0 %1718
    %v1720 = vcvt.f32.s32 %v1719
    %v1721 = vcvt.f32.s32 %v1715
    %v1722 = vshll.u32 %v1721, 16
    %v1723 = vadd.s32 %v1722, %v1720
    %v1724 = vand.u32 %v932, 65535
    %v1725 = vshra.s32 %v932, 16
    %v1726 = vcvt.s32.f32 %v1724
    %v1727 = vcvt.s32.f32 %v1725
    %1728 = vmin.xlane.f32.xlu0 %v1727
    %v1729 = vpop.xlane.xlu0 %1728
    %vm1730 = vcmp.eq.f32.partialorder %v1727, %v1729
    %v1731 = vsel %vm1730, %v1726, inf
    %1732 = vmin.xlane.f32.xlu0 %v1731
    %v1733 = vpop.xlane.xlu0 %1732
    %v1734 = vcvt.f32.s32 %v1733
    %v1735 = vcvt.f32.s32 %v1729
    %v1736 = vshll.u32 %v1735, 16
    %v1737 = vadd.s32 %v1736, %v1734
    %v1738 = vand.u32 %v933, 65535
    %v1739 = vshra.s32 %v933, 16
    %v1740 = vcvt.s32.f32 %v1738
    %v1741 = vcvt.s32.f32 %v1739
    %1742 = vmin.xlane.f32.xlu0 %v1741
    %v1743 = vpop.xlane.xlu0 %1742
    %vm1744 = vcmp.eq.f32.partialorder %v1741, %v1743
    %v1745 = vsel %vm1744, %v1740, inf
    %1746 = vmin.xlane.f32.xlu0 %v1745
    %v1747 = vpop.xlane.xlu0 %1746
    %v1748 = vcvt.f32.s32 %v1747
    %v1749 = vcvt.f32.s32 %v1743
    %v1750 = vshll.u32 %v1749, 16
    %v1751 = vadd.s32 %v1750, %v1748
    %v1752 = vand.u32 %v934, 65535
    %v1753 = vshra.s32 %v934, 16
    %v1754 = vcvt.s32.f32 %v1752
    %v1755 = vcvt.s32.f32 %v1753
    %1756 = vmin.xlane.f32.xlu0 %v1755
    %v1757 = vpop.xlane.xlu0 %1756
    %vm1758 = vcmp.eq.f32.partialorder %v1755, %v1757
    %v1759 = vsel %vm1758, %v1754, inf
    %1760 = vmin.xlane.f32.xlu0 %v1759
    %v1761 = vpop.xlane.xlu0 %1760
    %v1762 = vcvt.f32.s32 %v1761
    %v1763 = vcvt.f32.s32 %v1757
    %v1764 = vshll.u32 %v1763, 16
    %v1765 = vadd.s32 %v1764, %v1762
    %v1766 = vand.u32 %v935, 65535
    %v1767 = vshra.s32 %v935, 16
    %v1768 = vcvt.s32.f32 %v1766
    %v1769 = vcvt.s32.f32 %v1767
    %1770 = vmin.xlane.f32.xlu0 %v1769
    %v1771 = vpop.xlane.xlu0 %1770
    %vm1772 = vcmp.eq.f32.partialorder %v1769, %v1771
    %v1773 = vsel %vm1772, %v1768, inf
    %1774 = vmin.xlane.f32.xlu0 %v1773
    %v1775 = vpop.xlane.xlu0 %1774
    %v1776 = vcvt.f32.s32 %v1775
    %v1777 = vcvt.f32.s32 %v1771
    %v1778 = vshll.u32 %v1777, 16
    %v1779 = vadd.s32 %v1778, %v1776
    %v1780 = vand.u32 %v936, 65535
    %v1781 = vshra.s32 %v936, 16
    %v1782 = vcvt.s32.f32 %v1780
    %v1783 = vcvt.s32.f32 %v1781
    %1784 = vmin.xlane.f32.xlu0 %v1783
    %v1785 = vpop.xlane.xlu0 %1784
    %vm1786 = vcmp.eq.f32.partialorder %v1783, %v1785
    %v1787 = vsel %vm1786, %v1782, inf
    %1788 = vmin.xlane.f32.xlu0 %v1787
    %v1789 = vpop.xlane.xlu0 %1788
    %v1790 = vcvt.f32.s32 %v1789
    %v1791 = vcvt.f32.s32 %v1785
    %v1792 = vshll.u32 %v1791, 16
    %v1793 = vadd.s32 %v1792, %v1790
    %v1794 = vand.u32 %v937, 65535
    %v1795 = vshra.s32 %v937, 16
    %v1796 = vcvt.s32.f32 %v1794
    %v1797 = vcvt.s32.f32 %v1795
    %1798 = vmin.xlane.f32.xlu0 %v1797
    %v1799 = vpop.xlane.xlu0 %1798
    %vm1800 = vcmp.eq.f32.partialorder %v1797, %v1799
    %v1801 = vsel %vm1800, %v1796, inf
    %1802 = vmin.xlane.f32.xlu0 %v1801
    %v1803 = vpop.xlane.xlu0 %1802
    %v1804 = vcvt.f32.s32 %v1803
    %v1805 = vcvt.f32.s32 %v1799
    %v1806 = vshll.u32 %v1805, 16
    %v1807 = vadd.s32 %v1806, %v1804
    %v1808 = vand.u32 %v938, 65535
    %v1809 = vshra.s32 %v938, 16
    %v1810 = vcvt.s32.f32 %v1808
    %v1811 = vcvt.s32.f32 %v1809
    %1812 = vmin.xlane.f32.xlu0 %v1811
    %v1813 = vpop.xlane.xlu0 %1812
    %vm1814 = vcmp.eq.f32.partialorder %v1811, %v1813
    %v1815 = vsel %vm1814, %v1810, inf
    %1816 = vmin.xlane.f32.xlu0 %v1815
    %v1817 = vpop.xlane.xlu0 %1816
    %v1818 = vcvt.f32.s32 %v1817
    %v1819 = vcvt.f32.s32 %v1813
    %v1820 = vshll.u32 %v1819, 16
    %v1821 = vadd.s32 %v1820, %v1818
    %v1822 = vand.u32 %v939, 65535
    %v1823 = vshra.s32 %v939, 16
    %v1824 = vcvt.s32.f32 %v1822
    %v1825 = vcvt.s32.f32 %v1823
    %1826 = vmin.xlane.f32.xlu0 %v1825
    %v1827 = vpop.xlane.xlu0 %1826
    %vm1828 = vcmp.eq.f32.partialorder %v1825, %v1827
    %v1829 = vsel %vm1828, %v1824, inf
    %1830 = vmin.xlane.f32.xlu0 %v1829
    %v1831 = vpop.xlane.xlu0 %1830
    %v1832 = vcvt.f32.s32 %v1831
    %v1833 = vcvt.f32.s32 %v1827
    %v1834 = vshll.u32 %v1833, 16
    %v1835 = vadd.s32 %v1834, %v1832
    %vm1836 = vcmp.eq.s32.totalorder %v811, %v953
    %vm1837 = vcmp.eq.s32.totalorder %v811, %v967
    %vm1838 = vcmp.eq.s32.totalorder %v811, %v981
    %vm1839 = vcmp.eq.s32.totalorder %v811, %v995
    %vm1840 = vcmp.eq.s32.totalorder %v811, %v1009
    %vm1841 = vcmp.eq.s32.totalorder %v811, %v1023
    %vm1842 = vcmp.eq.s32.totalorder %v811, %v1037
    %vm1843 = vcmp.eq.s32.totalorder %v811, %v1051
    %vm1844 = vcmp.eq.s32.totalorder %v811, %v1065
    %vm1845 = vcmp.eq.s32.totalorder %v811, %v1079
    %vm1846 = vcmp.eq.s32.totalorder %v811, %v1093
    %vm1847 = vcmp.eq.s32.totalorder %v811, %v1107
    %vm1848 = vcmp.eq.s32.totalorder %v811, %v1121
    %vm1849 = vcmp.eq.s32.totalorder %v811, %v1135
    %vm1850 = vcmp.eq.s32.totalorder %v811, %v1149
    %vm1851 = vcmp.eq.s32.totalorder %v811, %v1163
    %vm1852 = vcmp.eq.s32.totalorder %v811, %v1177
    %vm1853 = vcmp.eq.s32.totalorder %v811, %v1191
    %vm1854 = vcmp.eq.s32.totalorder %v811, %v1205
    %vm1855 = vcmp.eq.s32.totalorder %v811, %v1219
    %vm1856 = vcmp.eq.s32.totalorder %v811, %v1233
    %vm1857 = vcmp.eq.s32.totalorder %v811, %v1247
    %vm1858 = vcmp.eq.s32.totalorder %v811, %v1261
    %vm1859 = vcmp.eq.s32.totalorder %v811, %v1275
    %vm1860 = vcmp.eq.s32.totalorder %v811, %v1289
    %vm1861 = vcmp.eq.s32.totalorder %v811, %v1303
    %vm1862 = vcmp.eq.s32.totalorder %v811, %v1317
    %vm1863 = vcmp.eq.s32.totalorder %v811, %v1331
    %vm1864 = vcmp.eq.s32.totalorder %v811, %v1345
    %vm1865 = vcmp.eq.s32.totalorder %v811, %v1359
    %vm1866 = vcmp.eq.s32.totalorder %v811, %v1373
    %vm1867 = vcmp.eq.s32.totalorder %v811, %v1387
    %vm1868 = vcmp.eq.s32.totalorder %v811, %v1401
    %vm1869 = vcmp.eq.s32.totalorder %v811, %v1415
    %vm1870 = vcmp.eq.s32.totalorder %v811, %v1429
    %vm1871 = vcmp.eq.s32.totalorder %v811, %v1443
    %vm1872 = vcmp.eq.s32.totalorder %v811, %v1457
    %vm1873 = vcmp.eq.s32.totalorder %v811, %v1471
    %vm1874 = vcmp.eq.s32.totalorder %v811, %v1485
    %vm1875 = vcmp.eq.s32.totalorder %v811, %v1499
    %vm1876 = vcmp.eq.s32.totalorder %v811, %v1513
    %vm1877 = vcmp.eq.s32.totalorder %v811, %v1527
    %vm1878 = vcmp.eq.s32.totalorder %v811, %v1541
    %vm1879 = vcmp.eq.s32.totalorder %v811, %v1555
    %vm1880 = vcmp.eq.s32.totalorder %v811, %v1569
    %vm1881 = vcmp.eq.s32.totalorder %v811, %v1583
    %vm1882 = vcmp.eq.s32.totalorder %v811, %v1597
    %vm1883 = vcmp.eq.s32.totalorder %v811, %v1611
    %vm1884 = vcmp.eq.s32.totalorder %v811, %v1625
    %vm1885 = vcmp.eq.s32.totalorder %v811, %v1639
    %vm1886 = vcmp.eq.s32.totalorder %v811, %v1653
    %vm1887 = vcmp.eq.s32.totalorder %v811, %v1667
    %vm1888 = vcmp.eq.s32.totalorder %v811, %v1681
    %vm1889 = vcmp.eq.s32.totalorder %v811, %v1695
    %vm1890 = vcmp.eq.s32.totalorder %v811, %v1709
    %vm1891 = vcmp.eq.s32.totalorder %v811, %v1723
    %vm1892 = vcmp.eq.s32.totalorder %v811, %v1737
    %vm1893 = vcmp.eq.s32.totalorder %v811, %v1751
    %vm1894 = vcmp.eq.s32.totalorder %v811, %v1765
    %vm1895 = vcmp.eq.s32.totalorder %v811, %v1779
    %vm1896 = vcmp.eq.s32.totalorder %v811, %v1793
    %vm1897 = vcmp.eq.s32.totalorder %v811, %v1807
    %vm1898 = vcmp.eq.s32.totalorder %v811, %v1821
    %vm1899 = vcmp.eq.s32.totalorder %v811, %v1835
    %v1900 = vsel %vm1836, 1, 0
    %v1901 = vsel %vm1837, 1, 0
    %v1902 = vsel %vm1838, 1, 0
    %v1903 = vsel %vm1839, 1, 0
    %v1904 = vsel %vm1840, 1, 0
    %v1905 = vsel %vm1841, 1, 0
    %v1906 = vsel %vm1842, 1, 0
    %v1907 = vsel %vm1843, 1, 0
    %v1908 = vsel %vm1844, 1, 0
    %v1909 = vsel %vm1845, 1, 0
    %v1910 = vsel %vm1846, 1, 0
    %v1911 = vsel %vm1847, 1, 0
    %v1912 = vsel %vm1848, 1, 0
    %v1913 = vsel %vm1849, 1, 0
    %v1914 = vsel %vm1850, 1, 0
    %v1915 = vsel %vm1851, 1, 0
    %v1916 = vsel %vm1852, 1, 0
    %v1917 = vsel %vm1853, 1, 0
    %v1918 = vsel %vm1854, 1, 0
    %v1919 = vsel %vm1855, 1, 0
    %v1920 = vsel %vm1856, 1, 0
    %v1921 = vsel %vm1857, 1, 0
    %v1922 = vsel %vm1858, 1, 0
    %v1923 = vsel %vm1859, 1, 0
    %v1924 = vsel %vm1860, 1, 0
    %v1925 = vsel %vm1861, 1, 0
    %v1926 = vsel %vm1862, 1, 0
    %v1927 = vsel %vm1863, 1, 0
    %v1928 = vsel %vm1864, 1, 0
    %v1929 = vsel %vm1865, 1, 0
    %v1930 = vsel %vm1866, 1, 0
    %v1931 = vsel %vm1867, 1, 0
    %v1932 = vsel %vm1868, 1, 0
    %v1933 = vsel %vm1869, 1, 0
    %v1934 = vsel %vm1870, 1, 0
    %v1935 = vsel %vm1871, 1, 0
    %v1936 = vsel %vm1872, 1, 0
    %v1937 = vsel %vm1873, 1, 0
    %v1938 = vsel %vm1874, 1, 0
    %v1939 = vsel %vm1875, 1, 0
    %v1940 = vsel %vm1876, 1, 0
    %v1941 = vsel %vm1877, 1, 0
    %v1942 = vsel %vm1878, 1, 0
    %v1943 = vsel %vm1879, 1, 0
    %v1944 = vsel %vm1880, 1, 0
    %v1945 = vsel %vm1881, 1, 0
    %v1946 = vsel %vm1882, 1, 0
    %v1947 = vsel %vm1883, 1, 0
    %v1948 = vsel %vm1884, 1, 0
    %v1949 = vsel %vm1885, 1, 0
    %v1950 = vsel %vm1886, 1, 0
    %v1951 = vsel %vm1887, 1, 0
    %v1952 = vsel %vm1888, 1, 0
    %v1953 = vsel %vm1889, 1, 0
    %v1954 = vsel %vm1890, 1, 0
    %v1955 = vsel %vm1891, 1, 0
    %v1956 = vsel %vm1892, 1, 0
    %v1957 = vsel %vm1893, 1, 0
    %v1958 = vsel %vm1894, 1, 0
    %v1959 = vsel %vm1895, 1, 0
    %v1960 = vsel %vm1896, 1, 0
    %v1961 = vsel %vm1897, 1, 0
    %v1962 = vsel %vm1898, 1, 0
    %v1963 = vsel %vm1899, 1, 0
    %v1964 = vcvt.s32.f32 %v1900
    %v1965 = vcvt.s32.f32 %v1901
    %v1966 = vcvt.s32.f32 %v1902
    %v1967 = vcvt.s32.f32 %v1903
    %v1968 = vcvt.s32.f32 %v1904
    %v1969 = vcvt.s32.f32 %v1905
    %v1970 = vcvt.s32.f32 %v1906
    %v1971 = vcvt.s32.f32 %v1907
    %v1972 = vcvt.s32.f32 %v1908
    %v1973 = vcvt.s32.f32 %v1909
    %v1974 = vcvt.s32.f32 %v1910
    %v1975 = vcvt.s32.f32 %v1911
    %v1976 = vcvt.s32.f32 %v1912
    %v1977 = vcvt.s32.f32 %v1913
    %v1978 = vcvt.s32.f32 %v1914
    %v1979 = vcvt.s32.f32 %v1915
    %v1980 = vcvt.s32.f32 %v1916
    %v1981 = vcvt.s32.f32 %v1917
    %v1982 = vcvt.s32.f32 %v1918
    %v1983 = vcvt.s32.f32 %v1919
    %v1984 = vcvt.s32.f32 %v1920
    %v1985 = vcvt.s32.f32 %v1921
    %v1986 = vcvt.s32.f32 %v1922
    %v1987 = vcvt.s32.f32 %v1923
    %v1988 = vcvt.s32.f32 %v1924
    %v1989 = vcvt.s32.f32 %v1925
    %v1990 = vcvt.s32.f32 %v1926
    %v1991 = vcvt.s32.f32 %v1927
    %v1992 = vcvt.s32.f32 %v1928
    %v1993 = vcvt.s32.f32 %v1929
    %v1994 = vcvt.s32.f32 %v1930
    %v1995 = vcvt.s32.f32 %v1931
    %v1996 = vcvt.s32.f32 %v1932
    %v1997 = vcvt.s32.f32 %v1933
    %v1998 = vcvt.s32.f32 %v1934
    %v1999 = vcvt.s32.f32 %v1935
    %v2000 = vcvt.s32.f32 %v1936
    %v2001 = vcvt.s32.f32 %v1937
    %v2002 = vcvt.s32.f32 %v1938
    %v2003 = vcvt.s32.f32 %v1939
    %v2004 = vcvt.s32.f32 %v1940
    %v2005 = vcvt.s32.f32 %v1941
    %v2006 = vcvt.s32.f32 %v1942
    %v2007 = vcvt.s32.f32 %v1943
    %v2008 = vcvt.s32.f32 %v1944
    %v2009 = vcvt.s32.f32 %v1945
    %v2010 = vcvt.s32.f32 %v1946
    %v2011 = vcvt.s32.f32 %v1947
    %v2012 = vcvt.s32.f32 %v1948
    %v2013 = vcvt.s32.f32 %v1949
    %v2014 = vcvt.s32.f32 %v1950
    %v2015 = vcvt.s32.f32 %v1951
    %v2016 = vcvt.s32.f32 %v1952
    %v2017 = vcvt.s32.f32 %v1953
    %v2018 = vcvt.s32.f32 %v1954
    %v2019 = vcvt.s32.f32 %v1955
    %v2020 = vcvt.s32.f32 %v1956
    %v2021 = vcvt.s32.f32 %v1957
    %v2022 = vcvt.s32.f32 %v1958
    %v2023 = vcvt.s32.f32 %v1959
    %v2024 = vcvt.s32.f32 %v1960
    %v2025 = vcvt.s32.f32 %v1961
    %v2026 = vcvt.s32.f32 %v1962
    %v2027 = vcvt.s32.f32 %v1963
    %2028 = vmatpush.msra.mxu0 %v99
    %2029 = vmatpush.msra.mxu0 %v98
    %2030 = vmatpush.msra.mxu0 %v97
    %2031 = vmatpush.msra.mxu0 %v96
    %2032 = vmatpush.msra.mxu0 %v95
    %2033 = vmatpush.msra.mxu0 %v94
    %2034 = vmatpush.msra.mxu0 %v93
    %2035 = vmatpush.msra.mxu0 %v92
    %2036 = vmatpush.msra.mxu0 %v91
    %2037 = vmatpush.msra.mxu0 %v90
    %2038 = vmatpush.msra.mxu0 %v89
    %2039 = vmatpush.msra.mxu0 %v88
    %2040 = vmatpush.msra.mxu0 %v87
    %2041 = vmatpush.msra.mxu0 %v86
    %2042 = vmatpush.msra.mxu0 %v85
    %2043 = vmatpush.msra.mxu0 %v84
    %2044 = vmatmul.f32.gmra.mxu0 %v1964
    %v2045 = vpop.f32.mrf.mxu0
    %v2046 = vadd.f32 0.0, %v2045
    %2047 = vmatmul.f32.gmra.mxu0 %v1965
    %v2048 = vpop.f32.mrf.mxu0
    %v2049 = vadd.f32 0.0, %v2048
    %2050 = vmatmul.f32.gmra.mxu0 %v1966
    %v2051 = vpop.f32.mrf.mxu0
    %v2052 = vadd.f32 0.0, %v2051
    %2053 = vmatmul.f32.gmra.mxu0 %v1967
    %v2054 = vpop.f32.mrf.mxu0
    %v2055 = vadd.f32 0.0, %v2054
    %2056 = vmatmul.f32.gmra.mxu0 %v1968
    %v2057 = vpop.f32.mrf.mxu0
    %v2058 = vadd.f32 0.0, %v2057
    %2059 = vmatmul.f32.gmra.mxu0 %v1969
    %v2060 = vpop.f32.mrf.mxu0
    %v2061 = vadd.f32 0.0, %v2060
    %2062 = vmatmul.f32.gmra.mxu0 %v1970
    %v2063 = vpop.f32.mrf.mxu0
    %v2064 = vadd.f32 0.0, %v2063
    %2065 = vmatmul.f32.gmra.mxu0 %v1971
    %v2066 = vpop.f32.mrf.mxu0
    %v2067 = vadd.f32 0.0, %v2066
    %2068 = vmatmul.f32.gmra.mxu0 %v1972
    %v2069 = vpop.f32.mrf.mxu0
    %v2070 = vadd.f32 0.0, %v2069
    %2071 = vmatmul.f32.gmra.mxu0 %v1973
    %v2072 = vpop.f32.mrf.mxu0
    %v2073 = vadd.f32 0.0, %v2072
    %2074 = vmatmul.f32.gmra.mxu0 %v1974
    %v2075 = vpop.f32.mrf.mxu0
    %v2076 = vadd.f32 0.0, %v2075
    %2077 = vmatmul.f32.gmra.mxu0 %v1975
    %v2078 = vpop.f32.mrf.mxu0
    %v2079 = vadd.f32 0.0, %v2078
    %2080 = vmatmul.f32.gmra.mxu0 %v1976
    %v2081 = vpop.f32.mrf.mxu0
    %v2082 = vadd.f32 0.0, %v2081
    %2083 = vmatmul.f32.gmra.mxu0 %v1977
    %v2084 = vpop.f32.mrf.mxu0
    %v2085 = vadd.f32 0.0, %v2084
    %2086 = vmatmul.f32.gmra.mxu0 %v1978
    %v2087 = vpop.f32.mrf.mxu0
    %v2088 = vadd.f32 0.0, %v2087
    %2089 = vmatmul.f32.gmra.mxu0 %v1979
    %v2090 = vpop.f32.mrf.mxu0
    %v2091 = vadd.f32 0.0, %v2090
    %2092 = vmatmul.f32.gmra.mxu0 %v1980
    %v2093 = vpop.f32.mrf.mxu0
    %v2094 = vadd.f32 0.0, %v2093
    %2095 = vmatmul.f32.gmra.mxu0 %v1981
    %v2096 = vpop.f32.mrf.mxu0
    %v2097 = vadd.f32 0.0, %v2096
    %2098 = vmatmul.f32.gmra.mxu0 %v1982
    %v2099 = vpop.f32.mrf.mxu0
    %v2100 = vadd.f32 0.0, %v2099
    %2101 = vmatmul.f32.gmra.mxu0 %v1983
    %v2102 = vpop.f32.mrf.mxu0
    %v2103 = vadd.f32 0.0, %v2102
    %2104 = vmatmul.f32.gmra.mxu0 %v1984
    %v2105 = vpop.f32.mrf.mxu0
    %v2106 = vadd.f32 0.0, %v2105
    %2107 = vmatmul.f32.gmra.mxu0 %v1985
    %v2108 = vpop.f32.mrf.mxu0
    %v2109 = vadd.f32 0.0, %v2108
    %2110 = vmatmul.f32.gmra.mxu0 %v1986
    %v2111 = vpop.f32.mrf.mxu0
    %v2112 = vadd.f32 0.0, %v2111
    %2113 = vmatmul.f32.gmra.mxu0 %v1987
    %v2114 = vpop.f32.mrf.mxu0
    %v2115 = vadd.f32 0.0, %v2114
    %2116 = vmatmul.f32.gmra.mxu0 %v1988
    %v2117 = vpop.f32.mrf.mxu0
    %v2118 = vadd.f32 0.0, %v2117
    %2119 = vmatmul.f32.gmra.mxu0 %v1989
    %v2120 = vpop.f32.mrf.mxu0
    %v2121 = vadd.f32 0.0, %v2120
    %2122 = vmatmul.f32.gmra.mxu0 %v1990
    %v2123 = vpop.f32.mrf.mxu0
    %v2124 = vadd.f32 0.0, %v2123
    %2125 = vmatmul.f32.gmra.mxu0 %v1991
    %v2126 = vpop.f32.mrf.mxu0
    %v2127 = vadd.f32 0.0, %v2126
    %2128 = vmatmul.f32.gmra.mxu0 %v1992
    %v2129 = vpop.f32.mrf.mxu0
    %v2130 = vadd.f32 0.0, %v2129
    %2131 = vmatmul.f32.gmra.mxu0 %v1993
    %v2132 = vpop.f32.mrf.mxu0
    %v2133 = vadd.f32 0.0, %v2132
    %2134 = vmatmul.f32.gmra.mxu0 %v1994
    %v2135 = vpop.f32.mrf.mxu0
    %v2136 = vadd.f32 0.0, %v2135
    %2137 = vmatmul.f32.gmra.mxu0 %v1995
    %v2138 = vpop.f32.mrf.mxu0
    %v2139 = vadd.f32 0.0, %v2138
    %2140 = vmatmul.f32.gmra.mxu0 %v1996
    %v2141 = vpop.f32.mrf.mxu0
    %v2142 = vadd.f32 0.0, %v2141
    %2143 = vmatmul.f32.gmra.mxu0 %v1997
    %v2144 = vpop.f32.mrf.mxu0
    %v2145 = vadd.f32 0.0, %v2144
    %2146 = vmatmul.f32.gmra.mxu0 %v1998
    %v2147 = vpop.f32.mrf.mxu0
    %v2148 = vadd.f32 0.0, %v2147
    %2149 = vmatmul.f32.gmra.mxu0 %v1999
    %v2150 = vpop.f32.mrf.mxu0
    %v2151 = vadd.f32 0.0, %v2150
    %2152 = vmatmul.f32.gmra.mxu0 %v2000
    %v2153 = vpop.f32.mrf.mxu0
    %v2154 = vadd.f32 0.0, %v2153
    %2155 = vmatmul.f32.gmra.mxu0 %v2001
    %v2156 = vpop.f32.mrf.mxu0
    %v2157 = vadd.f32 0.0, %v2156
    %2158 = vmatmul.f32.gmra.mxu0 %v2002
    %v2159 = vpop.f32.mrf.mxu0
    %v2160 = vadd.f32 0.0, %v2159
    %2161 = vmatmul.f32.gmra.mxu0 %v2003
    %v2162 = vpop.f32.mrf.mxu0
    %v2163 = vadd.f32 0.0, %v2162
    %2164 = vmatmul.f32.gmra.mxu0 %v2004
    %v2165 = vpop.f32.mrf.mxu0
    %v2166 = vadd.f32 0.0, %v2165
    %2167 = vmatmul.f32.gmra.mxu0 %v2005
    %v2168 = vpop.f32.mrf.mxu0
    %v2169 = vadd.f32 0.0, %v2168
    %2170 = vmatmul.f32.gmra.mxu0 %v2006
    %v2171 = vpop.f32.mrf.mxu0
    %v2172 = vadd.f32 0.0, %v2171
    %2173 = vmatmul.f32.gmra.mxu0 %v2007
    %v2174 = vpop.f32.mrf.mxu0
    %v2175 = vadd.f32 0.0, %v2174
    %2176 = vmatmul.f32.gmra.mxu0 %v2008
    %v2177 = vpop.f32.mrf.mxu0
    %v2178 = vadd.f32 0.0, %v2177
    %2179 = vmatmul.f32.gmra.mxu0 %v2009
    %v2180 = vpop.f32.mrf.mxu0
    %v2181 = vadd.f32 0.0, %v2180
    %2182 = vmatmul.f32.gmra.mxu0 %v2010
    %v2183 = vpop.f32.mrf.mxu0
    %v2184 = vadd.f32 0.0, %v2183
    %2185 = vmatmul.f32.gmra.mxu0 %v2011
    %v2186 = vpop.f32.mrf.mxu0
    %v2187 = vadd.f32 0.0, %v2186
    %2188 = vmatmul.f32.gmra.mxu0 %v2012
    %v2189 = vpop.f32.mrf.mxu0
    %v2190 = vadd.f32 0.0, %v2189
    %2191 = vmatmul.f32.gmra.mxu0 %v2013
    %v2192 = vpop.f32.mrf.mxu0
    %v2193 = vadd.f32 0.0, %v2192
    %2194 = vmatmul.f32.gmra.mxu0 %v2014
    %v2195 = vpop.f32.mrf.mxu0
    %v2196 = vadd.f32 0.0, %v2195
    %2197 = vmatmul.f32.gmra.mxu0 %v2015
    %v2198 = vpop.f32.mrf.mxu0
    %v2199 = vadd.f32 0.0, %v2198
    %2200 = vmatmul.f32.gmra.mxu0 %v2016
    %v2201 = vpop.f32.mrf.mxu0
    %v2202 = vadd.f32 0.0, %v2201
    %2203 = vmatmul.f32.gmra.mxu0 %v2017
    %v2204 = vpop.f32.mrf.mxu0
    %v2205 = vadd.f32 0.0, %v2204
    %2206 = vmatmul.f32.gmra.mxu0 %v2018
    %v2207 = vpop.f32.mrf.mxu0
    %v2208 = vadd.f32 0.0, %v2207
    %2209 = vmatmul.f32.gmra.mxu0 %v2019
    %v2210 = vpop.f32.mrf.mxu0
    %v2211 = vadd.f32 0.0, %v2210
    %2212 = vmatmul.f32.gmra.mxu0 %v2020
    %v2213 = vpop.f32.mrf.mxu0
    %v2214 = vadd.f32 0.0, %v2213
    %2215 = vmatmul.f32.gmra.mxu0 %v2021
    %v2216 = vpop.f32.mrf.mxu0
    %v2217 = vadd.f32 0.0, %v2216
    %2218 = vmatmul.f32.gmra.mxu0 %v2022
    %v2219 = vpop.f32.mrf.mxu0
    %v2220 = vadd.f32 0.0, %v2219
    %2221 = vmatmul.f32.gmra.mxu0 %v2023
    %v2222 = vpop.f32.mrf.mxu0
    %v2223 = vadd.f32 0.0, %v2222
    %2224 = vmatmul.f32.gmra.mxu0 %v2024
    %v2225 = vpop.f32.mrf.mxu0
    %v2226 = vadd.f32 0.0, %v2225
    %2227 = vmatmul.f32.gmra.mxu0 %v2025
    %v2228 = vpop.f32.mrf.mxu0
    %v2229 = vadd.f32 0.0, %v2228
    %2230 = vmatmul.f32.gmra.mxu0 %v2026
    %v2231 = vpop.f32.mrf.mxu0
    %v2232 = vadd.f32 0.0, %v2231
    %2233 = vmatmul.f32.gmra.mxu0 %v2027
    %v2234 = vpop.f32.mrf.mxu0
    %v2235 = vadd.f32 0.0, %v2234
    %2236 = vdwg.mxu0
    %s2237 = smul.u32 0, 512
    %v2238 = vlaneseq
    %v2239 = vshrl.u32 %v2238, 7
    %v2240 = vadd.s32 %v2239, 8
    %v2241 = vadd.s32 %v2239, 16
    %v2242 = vadd.s32 %v2239, 24
    %v2243 = vadd.s32 %v2239, 32
    %v2244 = vadd.s32 %v2239, 40
    %v2245 = vadd.s32 %v2239, 48
    %v2246 = vadd.s32 %v2239, 56
    %v2247 = vadd.s32 %v2239, 64
    %v2248 = vadd.s32 %v2239, 72
    %v2249 = vadd.s32 %v2239, 80
    %v2250 = vadd.s32 %v2239, 88
    %v2251 = vadd.s32 %v2239, 96
    %v2252 = vadd.s32 %v2239, 104
    %v2253 = vadd.s32 %v2239, 112
    %v2254 = vadd.s32 %v2239, 120
    %v2255 = vadd.s32 %v2239, 128
    %v2256 = vadd.s32 %v2239, 136
    %v2257 = vadd.s32 %v2239, 144
    %v2258 = vadd.s32 %v2239, 152
    %v2259 = vadd.s32 %v2239, 160
    %v2260 = vadd.s32 %v2239, 168
    %v2261 = vadd.s32 %v2239, 176
    %v2262 = vadd.s32 %v2239, 184
    %v2263 = vadd.s32 %v2239, 192
    %v2264 = vadd.s32 %v2239, 200
    %v2265 = vadd.s32 %v2239, 208
    %v2266 = vadd.s32 %v2239, 216
    %v2267 = vadd.s32 %v2239, 224
    %v2268 = vadd.s32 %v2239, 232
    %v2269 = vadd.s32 %v2239, 240
    %v2270 = vadd.s32 %v2239, 248
    %v2271 = vadd.s32 %v2239, 256
    %v2272 = vadd.s32 %v2239, 264
    %v2273 = vadd.s32 %v2239, 272
    %v2274 = vadd.s32 %v2239, 280
    %v2275 = vadd.s32 %v2239, 288
    %v2276 = vadd.s32 %v2239, 296
    %v2277 = vadd.s32 %v2239, 304
    %v2278 = vadd.s32 %v2239, 312
    %v2279 = vadd.s32 %v2239, 320
    %v2280 = vadd.s32 %v2239, 328
    %v2281 = vadd.s32 %v2239, 336
    %v2282 = vadd.s32 %v2239, 344
    %v2283 = vadd.s32 %v2239, 352
    %v2284 = vadd.s32 %v2239, 360
    %v2285 = vadd.s32 %v2239, 368
    %v2286 = vadd.s32 %v2239, 376
    %v2287 = vadd.s32 %v2239, 384
    %v2288 = vadd.s32 %v2239, 392
    %v2289 = vadd.s32 %v2239, 400
    %v2290 = vadd.s32 %v2239, 408
    %v2291 = vadd.s32 %v2239, 416
    %v2292 = vadd.s32 %v2239, 424
    %v2293 = vadd.s32 %v2239, 432
    %v2294 = vadd.s32 %v2239, 440
    %v2295 = vadd.s32 %v2239, 448
    %v2296 = vadd.s32 %v2239, 456
    %v2297 = vadd.s32 %v2239, 464
    %v2298 = vadd.s32 %v2239, 472
    %v2299 = vadd.s32 %v2239, 480
    %v2300 = vadd.s32 %v2239, 488
    %v2301 = vadd.s32 %v2239, 496
    %v2302 = vadd.s32 %v2239, 504
    %v2303 = vstv %s2237
    %v2304 = vadd.s32 %v2303, %v2239
    %v2305 = vadd.s32 %v2303, %v2240
    %v2306 = vadd.s32 %v2303, %v2241
    %v2307 = vadd.s32 %v2303, %v2242
    %v2308 = vadd.s32 %v2303, %v2243
    %v2309 = vadd.s32 %v2303, %v2244
    %v2310 = vadd.s32 %v2303, %v2245
    %v2311 = vadd.s32 %v2303, %v2246
    %v2312 = vadd.s32 %v2303, %v2247
    %v2313 = vadd.s32 %v2303, %v2248
    %v2314 = vadd.s32 %v2303, %v2249
    %v2315 = vadd.s32 %v2303, %v2250
    %v2316 = vadd.s32 %v2303, %v2251
    %v2317 = vadd.s32 %v2303, %v2252
    %v2318 = vadd.s32 %v2303, %v2253
    %v2319 = vadd.s32 %v2303, %v2254
    %v2320 = vadd.s32 %v2303, %v2255
    %v2321 = vadd.s32 %v2303, %v2256
    %v2322 = vadd.s32 %v2303, %v2257
    %v2323 = vadd.s32 %v2303, %v2258
    %v2324 = vadd.s32 %v2303, %v2259
    %v2325 = vadd.s32 %v2303, %v2260
    %v2326 = vadd.s32 %v2303, %v2261
    %v2327 = vadd.s32 %v2303, %v2262
    %v2328 = vadd.s32 %v2303, %v2263
    %v2329 = vadd.s32 %v2303, %v2264
    %v2330 = vadd.s32 %v2303, %v2265
    %v2331 = vadd.s32 %v2303, %v2266
    %v2332 = vadd.s32 %v2303, %v2267
    %v2333 = vadd.s32 %v2303, %v2268
    %v2334 = vadd.s32 %v2303, %v2269
    %v2335 = vadd.s32 %v2303, %v2270
    %v2336 = vadd.s32 %v2303, %v2271
    %v2337 = vadd.s32 %v2303, %v2272
    %v2338 = vadd.s32 %v2303, %v2273
    %v2339 = vadd.s32 %v2303, %v2274
    %v2340 = vadd.s32 %v2303, %v2275
    %v2341 = vadd.s32 %v2303, %v2276
    %v2342 = vadd.s32 %v2303, %v2277
    %v2343 = vadd.s32 %v2303, %v2278
    %v2344 = vadd.s32 %v2303, %v2279
    %v2345 = vadd.s32 %v2303, %v2280
    %v2346 = vadd.s32 %v2303, %v2281
    %v2347 = vadd.s32 %v2303, %v2282
    %v2348 = vadd.s32 %v2303, %v2283
    %v2349 = vadd.s32 %v2303, %v2284
    %v2350 = vadd.s32 %v2303, %v2285
    %v2351 = vadd.s32 %v2303, %v2286
    %v2352 = vadd.s32 %v2303, %v2287
    %v2353 = vadd.s32 %v2303, %v2288
    %v2354 = vadd.s32 %v2303, %v2289
    %v2355 = vadd.s32 %v2303, %v2290
    %v2356 = vadd.s32 %v2303, %v2291
    %v2357 = vadd.s32 %v2303, %v2292
    %v2358 = vadd.s32 %v2303, %v2293
    %v2359 = vadd.s32 %v2303, %v2294
    %v2360 = vadd.s32 %v2303, %v2295
    %v2361 = vadd.s32 %v2303, %v2296
    %v2362 = vadd.s32 %v2303, %v2297
    %v2363 = vadd.s32 %v2303, %v2298
    %v2364 = vadd.s32 %v2303, %v2299
    %v2365 = vadd.s32 %v2303, %v2300
    %v2366 = vadd.s32 %v2303, %v2301
    %v2367 = vadd.s32 %v2303, %v2302
    %vm2368 = vcmp.lt.s32.totalorder %v2304, 512
    %vm2369 = vcmp.lt.s32.totalorder %v2305, 512
    %vm2370 = vcmp.lt.s32.totalorder %v2306, 512
    %vm2371 = vcmp.lt.s32.totalorder %v2307, 512
    %vm2372 = vcmp.lt.s32.totalorder %v2308, 512
    %vm2373 = vcmp.lt.s32.totalorder %v2309, 512
    %vm2374 = vcmp.lt.s32.totalorder %v2310, 512
    %vm2375 = vcmp.lt.s32.totalorder %v2311, 512
    %vm2376 = vcmp.lt.s32.totalorder %v2312, 512
    %vm2377 = vcmp.lt.s32.totalorder %v2313, 512
    %vm2378 = vcmp.lt.s32.totalorder %v2314, 512
    %vm2379 = vcmp.lt.s32.totalorder %v2315, 512
    %vm2380 = vcmp.lt.s32.totalorder %v2316, 512
    %vm2381 = vcmp.lt.s32.totalorder %v2317, 512
    %vm2382 = vcmp.lt.s32.totalorder %v2318, 512
    %vm2383 = vcmp.lt.s32.totalorder %v2319, 512
    %vm2384 = vcmp.lt.s32.totalorder %v2320, 512
    %vm2385 = vcmp.lt.s32.totalorder %v2321, 512
    %vm2386 = vcmp.lt.s32.totalorder %v2322, 512
    %vm2387 = vcmp.lt.s32.totalorder %v2323, 512
    %vm2388 = vcmp.lt.s32.totalorder %v2324, 512
    %vm2389 = vcmp.lt.s32.totalorder %v2325, 512
    %vm2390 = vcmp.lt.s32.totalorder %v2326, 512
    %vm2391 = vcmp.lt.s32.totalorder %v2327, 512
    %vm2392 = vcmp.lt.s32.totalorder %v2328, 512
    %vm2393 = vcmp.lt.s32.totalorder %v2329, 512
    %vm2394 = vcmp.lt.s32.totalorder %v2330, 512
    %vm2395 = vcmp.lt.s32.totalorder %v2331, 512
    %vm2396 = vcmp.lt.s32.totalorder %v2332, 512
    %vm2397 = vcmp.lt.s32.totalorder %v2333, 512
    %vm2398 = vcmp.lt.s32.totalorder %v2334, 512
    %vm2399 = vcmp.lt.s32.totalorder %v2335, 512
    %vm2400 = vcmp.lt.s32.totalorder %v2336, 512
    %vm2401 = vcmp.lt.s32.totalorder %v2337, 512
    %vm2402 = vcmp.lt.s32.totalorder %v2338, 512
    %vm2403 = vcmp.lt.s32.totalorder %v2339, 512
    %vm2404 = vcmp.lt.s32.totalorder %v2340, 512
    %vm2405 = vcmp.lt.s32.totalorder %v2341, 512
    %vm2406 = vcmp.lt.s32.totalorder %v2342, 512
    %vm2407 = vcmp.lt.s32.totalorder %v2343, 512
    %vm2408 = vcmp.lt.s32.totalorder %v2344, 512
    %vm2409 = vcmp.lt.s32.totalorder %v2345, 512
    %vm2410 = vcmp.lt.s32.totalorder %v2346, 512
    %vm2411 = vcmp.lt.s32.totalorder %v2347, 512
    %vm2412 = vcmp.lt.s32.totalorder %v2348, 512
    %vm2413 = vcmp.lt.s32.totalorder %v2349, 512
    %vm2414 = vcmp.lt.s32.totalorder %v2350, 512
    %vm2415 = vcmp.lt.s32.totalorder %v2351, 512
    %vm2416 = vcmp.lt.s32.totalorder %v2352, 512
    %vm2417 = vcmp.lt.s32.totalorder %v2353, 512
    %vm2418 = vcmp.lt.s32.totalorder %v2354, 512
    %vm2419 = vcmp.lt.s32.totalorder %v2355, 512
    %vm2420 = vcmp.lt.s32.totalorder %v2356, 512
    %vm2421 = vcmp.lt.s32.totalorder %v2357, 512
    %vm2422 = vcmp.lt.s32.totalorder %v2358, 512
    %vm2423 = vcmp.lt.s32.totalorder %v2359, 512
    %vm2424 = vcmp.lt.s32.totalorder %v2360, 512
    %vm2425 = vcmp.lt.s32.totalorder %v2361, 512
    %vm2426 = vcmp.lt.s32.totalorder %v2362, 512
    %vm2427 = vcmp.lt.s32.totalorder %v2363, 512
    %vm2428 = vcmp.lt.s32.totalorder %v2364, 512
    %vm2429 = vcmp.lt.s32.totalorder %v2365, 512
    %vm2430 = vcmp.lt.s32.totalorder %v2366, 512
    %vm2431 = vcmp.lt.s32.totalorder %v2367, 512
    %2432 = vst.msk [vmem:[%s3] sm:$0xff] %vm101, %v2046
    %2433 = vst.msk [vmem:[%s3 + $0x8] sm:$0xff] %vm101, %v2049
    %2434 = vst.msk [vmem:[%s3 + $0x10] sm:$0xff] %vm101, %v2052
    %2435 = vst.msk [vmem:[%s3 + $0x18] sm:$0xff] %vm101, %v2055
    %2436 = vst.msk [vmem:[%s3 + $0x20] sm:$0xff] %vm101, %v2058
    %2437 = vst.msk [vmem:[%s3 + $0x28] sm:$0xff] %vm101, %v2061
    %2438 = vst.msk [vmem:[%s3 + $0x30] sm:$0xff] %vm101, %v2064
    %2439 = vst.msk [vmem:[%s3 + $0x38] sm:$0xff] %vm101, %v2067
    %2440 = vst.msk [vmem:[%s3 + $0x40] sm:$0xff] %vm101, %v2070
    %2441 = vst.msk [vmem:[%s3 + $0x48] sm:$0xff] %vm101, %v2073
    %2442 = vst.msk [vmem:[%s3 + $0x50] sm:$0xff] %vm101, %v2076
    %2443 = vst.msk [vmem:[%s3 + $0x58] sm:$0xff] %vm101, %v2079
    %2444 = vst.msk [vmem:[%s3 + $0x60] sm:$0xff] %vm101, %v2082
    %2445 = vst.msk [vmem:[%s3 + $0x68] sm:$0xff] %vm101, %v2085
    %2446 = vst.msk [vmem:[%s3 + $0x70] sm:$0xff] %vm101, %v2088
    %2447 = vst.msk [vmem:[%s3 + $0x78] sm:$0xff] %vm101, %v2091
    %2448 = vst.msk [vmem:[%s3 + $0x80] sm:$0xff] %vm101, %v2094
    %2449 = vst.msk [vmem:[%s3 + $0x88] sm:$0xff] %vm101, %v2097
    %2450 = vst.msk [vmem:[%s3 + $0x90] sm:$0xff] %vm101, %v2100
    %2451 = vst.msk [vmem:[%s3 + $0x98] sm:$0xff] %vm101, %v2103
    %2452 = vst.msk [vmem:[%s3 + $0xa0] sm:$0xff] %vm101, %v2106
    %2453 = vst.msk [vmem:[%s3 + $0xa8] sm:$0xff] %vm101, %v2109
    %2454 = vst.msk [vmem:[%s3 + $0xb0] sm:$0xff] %vm101, %v2112
    %2455 = vst.msk [vmem:[%s3 + $0xb8] sm:$0xff] %vm101, %v2115
    %2456 = vst.msk [vmem:[%s3 + $0xc0] sm:$0xff] %vm101, %v2118
    %2457 = vst.msk [vmem:[%s3 + $0xc8] sm:$0xff] %vm101, %v2121
    %2458 = vst.msk [vmem:[%s3 + $0xd0] sm:$0xff] %vm101, %v2124
    %2459 = vst.msk [vmem:[%s3 + $0xd8] sm:$0xff] %vm101, %v2127
    %2460 = vst.msk [vmem:[%s3 + $0xe0] sm:$0xff] %vm101, %v2130
    %2461 = vst.msk [vmem:[%s3 + $0xe8] sm:$0xff] %vm101, %v2133
    %2462 = vst.msk [vmem:[%s3 + $0xf0] sm:$0xff] %vm101, %v2136
    %2463 = vst.msk [vmem:[%s3 + $0xf8] sm:$0xff] %vm101, %v2139
    %2464 = vst.msk [vmem:[%s3 + $0x100] sm:$0xff] %vm101, %v2142
    %2465 = vst.msk [vmem:[%s3 + $0x108] sm:$0xff] %vm101, %v2145
    %2466 = vst.msk [vmem:[%s3 + $0x110] sm:$0xff] %vm101, %v2148
    %2467 = vst.msk [vmem:[%s3 + $0x118] sm:$0xff] %vm101, %v2151
    %2468 = vst.msk [vmem:[%s3 + $0x120] sm:$0xff] %vm101, %v2154
    %2469 = vst.msk [vmem:[%s3 + $0x128] sm:$0xff] %vm101, %v2157
    %2470 = vst.msk [vmem:[%s3 + $0x130] sm:$0xff] %vm101, %v2160
    %2471 = vst.msk [vmem:[%s3 + $0x138] sm:$0xff] %vm101, %v2163
    %2472 = vst.msk [vmem:[%s3 + $0x140] sm:$0xff] %vm101, %v2166
    %2473 = vst.msk [vmem:[%s3 + $0x148] sm:$0xff] %vm101, %v2169
    %2474 = vst.msk [vmem:[%s3 + $0x150] sm:$0xff] %vm101, %v2172
    %2475 = vst.msk [vmem:[%s3 + $0x158] sm:$0xff] %vm101, %v2175
    %2476 = vst.msk [vmem:[%s3 + $0x160] sm:$0xff] %vm101, %v2178
    %2477 = vst.msk [vmem:[%s3 + $0x168] sm:$0xff] %vm101, %v2181
    %2478 = vst.msk [vmem:[%s3 + $0x170] sm:$0xff] %vm101, %v2184
    %2479 = vst.msk [vmem:[%s3 + $0x178] sm:$0xff] %vm101, %v2187
    %2480 = vst.msk [vmem:[%s3 + $0x180] sm:$0xff] %vm101, %v2190
    %2481 = vst.msk [vmem:[%s3 + $0x188] sm:$0xff] %vm101, %v2193
    %2482 = vst.msk [vmem:[%s3 + $0x190] sm:$0xff] %vm101, %v2196
    %2483 = vst.msk [vmem:[%s3 + $0x198] sm:$0xff] %vm101, %v2199
    %2484 = vst.msk [vmem:[%s3 + $0x1a0] sm:$0xff] %vm101, %v2202
    %2485 = vst.msk [vmem:[%s3 + $0x1a8] sm:$0xff] %vm101, %v2205
    %2486 = vst.msk [vmem:[%s3 + $0x1b0] sm:$0xff] %vm101, %v2208
    %2487 = vst.msk [vmem:[%s3 + $0x1b8] sm:$0xff] %vm101, %v2211
    %2488 = vst.msk [vmem:[%s3 + $0x1c0] sm:$0xff] %vm101, %v2214
    %2489 = vst.msk [vmem:[%s3 + $0x1c8] sm:$0xff] %vm101, %v2217
    %2490 = vst.msk [vmem:[%s3 + $0x1d0] sm:$0xff] %vm101, %v2220
    %2491 = vst.msk [vmem:[%s3 + $0x1d8] sm:$0xff] %vm101, %v2223
    %2492 = vst.msk [vmem:[%s3 + $0x1e0] sm:$0xff] %vm101, %v2226
    %2493 = vst.msk [vmem:[%s3 + $0x1e8] sm:$0xff] %vm101, %v2229
    %2494 = vst.msk [vmem:[%s3 + $0x1f0] sm:$0xff] %vm101, %v2232
    %2495 = vst.msk [vmem:[%s3 + $0x1f8] sm:$0xff] %vm101, %v2235
    %vm2496 = vcmask 7168
    %2497 = vst.msk [vmem:[%s4] sm:$0xff] %vm2496, %v953
    %2498 = vst.msk [vmem:[%s4 + $0x8] sm:$0xff] %vm2496, %v967
    %2499 = vst.msk [vmem:[%s4 + $0x10] sm:$0xff] %vm2496, %v981
    %2500 = vst.msk [vmem:[%s4 + $0x18] sm:$0xff] %vm2496, %v995
    %2501 = vst.msk [vmem:[%s4 + $0x20] sm:$0xff] %vm2496, %v1009
    %2502 = vst.msk [vmem:[%s4 + $0x28] sm:$0xff] %vm2496, %v1023
    %2503 = vst.msk [vmem:[%s4 + $0x30] sm:$0xff] %vm2496, %v1037
    %2504 = vst.msk [vmem:[%s4 + $0x38] sm:$0xff] %vm2496, %v1051
    %2505 = vst.msk [vmem:[%s4 + $0x40] sm:$0xff] %vm2496, %v1065
    %2506 = vst.msk [vmem:[%s4 + $0x48] sm:$0xff] %vm2496, %v1079
    %2507 = vst.msk [vmem:[%s4 + $0x50] sm:$0xff] %vm2496, %v1093
    %2508 = vst.msk [vmem:[%s4 + $0x58] sm:$0xff] %vm2496, %v1107
    %2509 = vst.msk [vmem:[%s4 + $0x60] sm:$0xff] %vm2496, %v1121
    %2510 = vst.msk [vmem:[%s4 + $0x68] sm:$0xff] %vm2496, %v1135
    %2511 = vst.msk [vmem:[%s4 + $0x70] sm:$0xff] %vm2496, %v1149
    %2512 = vst.msk [vmem:[%s4 + $0x78] sm:$0xff] %vm2496, %v1163
    %2513 = vst.msk [vmem:[%s4 + $0x80] sm:$0xff] %vm2496, %v1177
    %2514 = vst.msk [vmem:[%s4 + $0x88] sm:$0xff] %vm2496, %v1191
    %2515 = vst.msk [vmem:[%s4 + $0x90] sm:$0xff] %vm2496, %v1205
    %2516 = vst.msk [vmem:[%s4 + $0x98] sm:$0xff] %vm2496, %v1219
    %2517 = vst.msk [vmem:[%s4 + $0xa0] sm:$0xff] %vm2496, %v1233
    %2518 = vst.msk [vmem:[%s4 + $0xa8] sm:$0xff] %vm2496, %v1247
    %2519 = vst.msk [vmem:[%s4 + $0xb0] sm:$0xff] %vm2496, %v1261
    %2520 = vst.msk [vmem:[%s4 + $0xb8] sm:$0xff] %vm2496, %v1275
    %2521 = vst.msk [vmem:[%s4 + $0xc0] sm:$0xff] %vm2496, %v1289
    %2522 = vst.msk [vmem:[%s4 + $0xc8] sm:$0xff] %vm2496, %v1303
    %2523 = vst.msk [vmem:[%s4 + $0xd0] sm:$0xff] %vm2496, %v1317
    %2524 = vst.msk [vmem:[%s4 + $0xd8] sm:$0xff] %vm2496, %v1331
    %2525 = vst.msk [vmem:[%s4 + $0xe0] sm:$0xff] %vm2496, %v1345
    %2526 = vst.msk [vmem:[%s4 + $0xe8] sm:$0xff] %vm2496, %v1359
    %2527 = vst.msk [vmem:[%s4 + $0xf0] sm:$0xff] %vm2496, %v1373
    %2528 = vst.msk [vmem:[%s4 + $0xf8] sm:$0xff] %vm2496, %v1387
    %2529 = vst.msk [vmem:[%s4 + $0x100] sm:$0xff] %vm2496, %v1401
    %2530 = vst.msk [vmem:[%s4 + $0x108] sm:$0xff] %vm2496, %v1415
    %2531 = vst.msk [vmem:[%s4 + $0x110] sm:$0xff] %vm2496, %v1429
    %2532 = vst.msk [vmem:[%s4 + $0x118] sm:$0xff] %vm2496, %v1443
    %2533 = vst.msk [vmem:[%s4 + $0x120] sm:$0xff] %vm2496, %v1457
    %2534 = vst.msk [vmem:[%s4 + $0x128] sm:$0xff] %vm2496, %v1471
    %2535 = vst.msk [vmem:[%s4 + $0x130] sm:$0xff] %vm2496, %v1485
    %2536 = vst.msk [vmem:[%s4 + $0x138] sm:$0xff] %vm2496, %v1499
    %2537 = vst.msk [vmem:[%s4 + $0x140] sm:$0xff] %vm2496, %v1513
    %2538 = vst.msk [vmem:[%s4 + $0x148] sm:$0xff] %vm2496, %v1527
    %2539 = vst.msk [vmem:[%s4 + $0x150] sm:$0xff] %vm2496, %v1541
    %2540 = vst.msk [vmem:[%s4 + $0x158] sm:$0xff] %vm2496, %v1555
    %2541 = vst.msk [vmem:[%s4 + $0x160] sm:$0xff] %vm2496, %v1569
    %2542 = vst.msk [vmem:[%s4 + $0x168] sm:$0xff] %vm2496, %v1583
    %2543 = vst.msk [vmem:[%s4 + $0x170] sm:$0xff] %vm2496, %v1597
    %2544 = vst.msk [vmem:[%s4 + $0x178] sm:$0xff] %vm2496, %v1611
    %2545 = vst.msk [vmem:[%s4 + $0x180] sm:$0xff] %vm2496, %v1625
    %2546 = vst.msk [vmem:[%s4 + $0x188] sm:$0xff] %vm2496, %v1639
    %2547 = vst.msk [vmem:[%s4 + $0x190] sm:$0xff] %vm2496, %v1653
    %2548 = vst.msk [vmem:[%s4 + $0x198] sm:$0xff] %vm2496, %v1667
    %2549 = vst.msk [vmem:[%s4 + $0x1a0] sm:$0xff] %vm2496, %v1681
    %2550 = vst.msk [vmem:[%s4 + $0x1a8] sm:$0xff] %vm2496, %v1695
    %2551 = vst.msk [vmem:[%s4 + $0x1b0] sm:$0xff] %vm2496, %v1709
    %2552 = vst.msk [vmem:[%s4 + $0x1b8] sm:$0xff] %vm2496, %v1723
    %2553 = vst.msk [vmem:[%s4 + $0x1c0] sm:$0xff] %vm2496, %v1737
    %2554 = vst.msk [vmem:[%s4 + $0x1c8] sm:$0xff] %vm2496, %v1751
    %2555 = vst.msk [vmem:[%s4 + $0x1d0] sm:$0xff] %vm2496, %v1765
    %2556 = vst.msk [vmem:[%s4 + $0x1d8] sm:$0xff] %vm2496, %v1779
    %2557 = vst.msk [vmem:[%s4 + $0x1e0] sm:$0xff] %vm2496, %v1793
    %2558 = vst.msk [vmem:[%s4 + $0x1e8] sm:$0xff] %vm2496, %v1807
    %2559 = vst.msk [vmem:[%s4 + $0x1f0] sm:$0xff] %vm2496, %v1821
    %2560 = vst.msk [vmem:[%s4 + $0x1f8] sm:$0xff] %vm2496, %v1835
    %v2561 = vsel %vm2368, 1, 0
    %v2562 = vsel %vm2369, 1, 0
    %v2563 = vsel %vm2370, 1, 0
    %v2564 = vsel %vm2371, 1, 0
    %v2565 = vsel %vm2372, 1, 0
    %v2566 = vsel %vm2373, 1, 0
    %v2567 = vsel %vm2374, 1, 0
    %v2568 = vsel %vm2375, 1, 0
    %v2569 = vsel %vm2376, 1, 0
    %v2570 = vsel %vm2377, 1, 0
    %v2571 = vsel %vm2378, 1, 0
    %v2572 = vsel %vm2379, 1, 0
    %v2573 = vsel %vm2380, 1, 0
    %v2574 = vsel %vm2381, 1, 0
    %v2575 = vsel %vm2382, 1, 0
    %v2576 = vsel %vm2383, 1, 0
    %v2577 = vsel %vm2384, 1, 0
    %v2578 = vsel %vm2385, 1, 0
    %v2579 = vsel %vm2386, 1, 0
    %v2580 = vsel %vm2387, 1, 0
    %v2581 = vsel %vm2388, 1, 0
    %v2582 = vsel %vm2389, 1, 0
    %v2583 = vsel %vm2390, 1, 0
    %v2584 = vsel %vm2391, 1, 0
    %v2585 = vsel %vm2392, 1, 0
    %v2586 = vsel %vm2393, 1, 0
    %v2587 = vsel %vm2394, 1, 0
    %v2588 = vsel %vm2395, 1, 0
    %v2589 = vsel %vm2396, 1, 0
    %v2590 = vsel %vm2397, 1, 0
    %v2591 = vsel %vm2398, 1, 0
    %v2592 = vsel %vm2399, 1, 0
    %v2593 = vsel %vm2400, 1, 0
    %v2594 = vsel %vm2401, 1, 0
    %v2595 = vsel %vm2402, 1, 0
    %v2596 = vsel %vm2403, 1, 0
    %v2597 = vsel %vm2404, 1, 0
    %v2598 = vsel %vm2405, 1, 0
    %v2599 = vsel %vm2406, 1, 0
    %v2600 = vsel %vm2407, 1, 0
    %v2601 = vsel %vm2408, 1, 0
    %v2602 = vsel %vm2409, 1, 0
    %v2603 = vsel %vm2410, 1, 0
    %v2604 = vsel %vm2411, 1, 0
    %v2605 = vsel %vm2412, 1, 0
    %v2606 = vsel %vm2413, 1, 0
    %v2607 = vsel %vm2414, 1, 0
    %v2608 = vsel %vm2415, 1, 0
    %v2609 = vsel %vm2416, 1, 0
    %v2610 = vsel %vm2417, 1, 0
    %v2611 = vsel %vm2418, 1, 0
    %v2612 = vsel %vm2419, 1, 0
    %v2613 = vsel %vm2420, 1, 0
    %v2614 = vsel %vm2421, 1, 0
    %v2615 = vsel %vm2422, 1, 0
    %v2616 = vsel %vm2423, 1, 0
    %v2617 = vsel %vm2424, 1, 0
    %v2618 = vsel %vm2425, 1, 0
    %v2619 = vsel %vm2426, 1, 0
    %v2620 = vsel %vm2427, 1, 0
    %v2621 = vsel %vm2428, 1, 0
    %v2622 = vsel %vm2429, 1, 0
    %v2623 = vsel %vm2430, 1, 0
    %v2624 = vsel %vm2431, 1, 0
    %vm2625 = vcmp.eq.s32.totalorder %v2561, 1
    %vm2626 = vcmp.eq.s32.totalorder %v2562, 1
    %vm2627 = vcmp.eq.s32.totalorder %v2563, 1
    %vm2628 = vcmp.eq.s32.totalorder %v2564, 1
    %vm2629 = vcmp.eq.s32.totalorder %v2565, 1
    %vm2630 = vcmp.eq.s32.totalorder %v2566, 1
    %vm2631 = vcmp.eq.s32.totalorder %v2567, 1
    %vm2632 = vcmp.eq.s32.totalorder %v2568, 1
    %vm2633 = vcmp.eq.s32.totalorder %v2569, 1
    %vm2634 = vcmp.eq.s32.totalorder %v2570, 1
    %vm2635 = vcmp.eq.s32.totalorder %v2571, 1
    %vm2636 = vcmp.eq.s32.totalorder %v2572, 1
    %vm2637 = vcmp.eq.s32.totalorder %v2573, 1
    %vm2638 = vcmp.eq.s32.totalorder %v2574, 1
    %vm2639 = vcmp.eq.s32.totalorder %v2575, 1
    %vm2640 = vcmp.eq.s32.totalorder %v2576, 1
    %vm2641 = vcmp.eq.s32.totalorder %v2577, 1
    %vm2642 = vcmp.eq.s32.totalorder %v2578, 1
    %vm2643 = vcmp.eq.s32.totalorder %v2579, 1
    %vm2644 = vcmp.eq.s32.totalorder %v2580, 1
    %vm2645 = vcmp.eq.s32.totalorder %v2581, 1
    %vm2646 = vcmp.eq.s32.totalorder %v2582, 1
    %vm2647 = vcmp.eq.s32.totalorder %v2583, 1
    %vm2648 = vcmp.eq.s32.totalorder %v2584, 1
    %vm2649 = vcmp.eq.s32.totalorder %v2585, 1
    %vm2650 = vcmp.eq.s32.totalorder %v2586, 1
    %vm2651 = vcmp.eq.s32.totalorder %v2587, 1
    %vm2652 = vcmp.eq.s32.totalorder %v2588, 1
    %vm2653 = vcmp.eq.s32.totalorder %v2589, 1
    %vm2654 = vcmp.eq.s32.totalorder %v2590, 1
    %vm2655 = vcmp.eq.s32.totalorder %v2591, 1
    %vm2656 = vcmp.eq.s32.totalorder %v2592, 1
    %vm2657 = vcmp.eq.s32.totalorder %v2593, 1
    %vm2658 = vcmp.eq.s32.totalorder %v2594, 1
    %vm2659 = vcmp.eq.s32.totalorder %v2595, 1
    %vm2660 = vcmp.eq.s32.totalorder %v2596, 1
    %vm2661 = vcmp.eq.s32.totalorder %v2597, 1
    %vm2662 = vcmp.eq.s32.totalorder %v2598, 1
    %vm2663 = vcmp.eq.s32.totalorder %v2599, 1
    %vm2664 = vcmp.eq.s32.totalorder %v2600, 1
    %vm2665 = vcmp.eq.s32.totalorder %v2601, 1
    %vm2666 = vcmp.eq.s32.totalorder %v2602, 1
    %vm2667 = vcmp.eq.s32.totalorder %v2603, 1
    %vm2668 = vcmp.eq.s32.totalorder %v2604, 1
    %vm2669 = vcmp.eq.s32.totalorder %v2605, 1
    %vm2670 = vcmp.eq.s32.totalorder %v2606, 1
    %vm2671 = vcmp.eq.s32.totalorder %v2607, 1
    %vm2672 = vcmp.eq.s32.totalorder %v2608, 1
    %vm2673 = vcmp.eq.s32.totalorder %v2609, 1
    %vm2674 = vcmp.eq.s32.totalorder %v2610, 1
    %vm2675 = vcmp.eq.s32.totalorder %v2611, 1
    %vm2676 = vcmp.eq.s32.totalorder %v2612, 1
    %vm2677 = vcmp.eq.s32.totalorder %v2613, 1
    %vm2678 = vcmp.eq.s32.totalorder %v2614, 1
    %vm2679 = vcmp.eq.s32.totalorder %v2615, 1
    %vm2680 = vcmp.eq.s32.totalorder %v2616, 1
    %vm2681 = vcmp.eq.s32.totalorder %v2617, 1
    %vm2682 = vcmp.eq.s32.totalorder %v2618, 1
    %vm2683 = vcmp.eq.s32.totalorder %v2619, 1
    %vm2684 = vcmp.eq.s32.totalorder %v2620, 1
    %vm2685 = vcmp.eq.s32.totalorder %v2621, 1
    %vm2686 = vcmp.eq.s32.totalorder %v2622, 1
    %vm2687 = vcmp.eq.s32.totalorder %v2623, 1
    %vm2688 = vcmp.eq.s32.totalorder %v2624, 1
    %v2689 = vsel %vm2625, %v1964, 0.0
    %v2690 = vsel %vm2626, %v1965, 0.0
    %v2691 = vsel %vm2627, %v1966, 0.0
    %v2692 = vsel %vm2628, %v1967, 0.0
    %v2693 = vsel %vm2629, %v1968, 0.0
    %v2694 = vsel %vm2630, %v1969, 0.0
    %v2695 = vsel %vm2631, %v1970, 0.0
    %v2696 = vsel %vm2632, %v1971, 0.0
    %v2697 = vsel %vm2633, %v1972, 0.0
    %v2698 = vsel %vm2634, %v1973, 0.0
    %v2699 = vsel %vm2635, %v1974, 0.0
    %v2700 = vsel %vm2636, %v1975, 0.0
    %v2701 = vsel %vm2637, %v1976, 0.0
    %v2702 = vsel %vm2638, %v1977, 0.0
    %v2703 = vsel %vm2639, %v1978, 0.0
    %v2704 = vsel %vm2640, %v1979, 0.0
    %v2705 = vsel %vm2641, %v1980, 0.0
    %v2706 = vsel %vm2642, %v1981, 0.0
    %v2707 = vsel %vm2643, %v1982, 0.0
    %v2708 = vsel %vm2644, %v1983, 0.0
    %v2709 = vsel %vm2645, %v1984, 0.0
    %v2710 = vsel %vm2646, %v1985, 0.0
    %v2711 = vsel %vm2647, %v1986, 0.0
    %v2712 = vsel %vm2648, %v1987, 0.0
    %v2713 = vsel %vm2649, %v1988, 0.0
    %v2714 = vsel %vm2650, %v1989, 0.0
    %v2715 = vsel %vm2651, %v1990, 0.0
    %v2716 = vsel %vm2652, %v1991, 0.0
    %v2717 = vsel %vm2653, %v1992, 0.0
    %v2718 = vsel %vm2654, %v1993, 0.0
    %v2719 = vsel %vm2655, %v1994, 0.0
    %v2720 = vsel %vm2656, %v1995, 0.0
    %v2721 = vsel %vm2657, %v1996, 0.0
    %v2722 = vsel %vm2658, %v1997, 0.0
    %v2723 = vsel %vm2659, %v1998, 0.0
    %v2724 = vsel %vm2660, %v1999, 0.0
    %v2725 = vsel %vm2661, %v2000, 0.0
    %v2726 = vsel %vm2662, %v2001, 0.0
    %v2727 = vsel %vm2663, %v2002, 0.0
    %v2728 = vsel %vm2664, %v2003, 0.0
    %v2729 = vsel %vm2665, %v2004, 0.0
    %v2730 = vsel %vm2666, %v2005, 0.0
    %v2731 = vsel %vm2667, %v2006, 0.0
    %v2732 = vsel %vm2668, %v2007, 0.0
    %v2733 = vsel %vm2669, %v2008, 0.0
    %v2734 = vsel %vm2670, %v2009, 0.0
    %v2735 = vsel %vm2671, %v2010, 0.0
    %v2736 = vsel %vm2672, %v2011, 0.0
    %v2737 = vsel %vm2673, %v2012, 0.0
    %v2738 = vsel %vm2674, %v2013, 0.0
    %v2739 = vsel %vm2675, %v2014, 0.0
    %v2740 = vsel %vm2676, %v2015, 0.0
    %v2741 = vsel %vm2677, %v2016, 0.0
    %v2742 = vsel %vm2678, %v2017, 0.0
    %v2743 = vsel %vm2679, %v2018, 0.0
    %v2744 = vsel %vm2680, %v2019, 0.0
    %v2745 = vsel %vm2681, %v2020, 0.0
    %v2746 = vsel %vm2682, %v2021, 0.0
    %v2747 = vsel %vm2683, %v2022, 0.0
    %v2748 = vsel %vm2684, %v2023, 0.0
    %v2749 = vsel %vm2685, %v2024, 0.0
    %v2750 = vsel %vm2686, %v2025, 0.0
    %v2751 = vsel %vm2687, %v2026, 0.0
    %v2752 = vsel %vm2688, %v2027, 0.0
    %v2753 = vadd.f32 %v2689, %v2690
    %v2754 = vadd.f32 %v2753, %v2691
    %v2755 = vadd.f32 %v2754, %v2692
    %v2756 = vadd.f32 %v2755, %v2693
    %v2757 = vadd.f32 %v2756, %v2694
    %v2758 = vadd.f32 %v2757, %v2695
    %v2759 = vadd.f32 %v2758, %v2696
    %v2760 = vadd.f32 %v2759, %v2697
    %v2761 = vadd.f32 %v2760, %v2698
    %v2762 = vadd.f32 %v2761, %v2699
    %v2763 = vadd.f32 %v2762, %v2700
    %v2764 = vadd.f32 %v2763, %v2701
    %v2765 = vadd.f32 %v2764, %v2702
    %v2766 = vadd.f32 %v2765, %v2703
    %v2767 = vadd.f32 %v2766, %v2704
    %v2768 = vadd.f32 %v2767, %v2705
    %v2769 = vadd.f32 %v2768, %v2706
    %v2770 = vadd.f32 %v2769, %v2707
    %v2771 = vadd.f32 %v2770, %v2708
    %v2772 = vadd.f32 %v2771, %v2709
    %v2773 = vadd.f32 %v2772, %v2710
    %v2774 = vadd.f32 %v2773, %v2711
    %v2775 = vadd.f32 %v2774, %v2712
    %v2776 = vadd.f32 %v2775, %v2713
    %v2777 = vadd.f32 %v2776, %v2714
    %v2778 = vadd.f32 %v2777, %v2715
    %v2779 = vadd.f32 %v2778, %v2716
    %v2780 = vadd.f32 %v2779, %v2717
    %v2781 = vadd.f32 %v2780, %v2718
    %v2782 = vadd.f32 %v2781, %v2719
    %v2783 = vadd.f32 %v2782, %v2720
    %v2784 = vadd.f32 %v2783, %v2721
    %v2785 = vadd.f32 %v2784, %v2722
    %v2786 = vadd.f32 %v2785, %v2723
    %v2787 = vadd.f32 %v2786, %v2724
    %v2788 = vadd.f32 %v2787, %v2725
    %v2789 = vadd.f32 %v2788, %v2726
    %v2790 = vadd.f32 %v2789, %v2727
    %v2791 = vadd.f32 %v2790, %v2728
    %v2792 = vadd.f32 %v2791, %v2729
    %v2793 = vadd.f32 %v2792, %v2730
    %v2794 = vadd.f32 %v2793, %v2731
    %v2795 = vadd.f32 %v2794, %v2732
    %v2796 = vadd.f32 %v2795, %v2733
    %v2797 = vadd.f32 %v2796, %v2734
    %v2798 = vadd.f32 %v2797, %v2735
    %v2799 = vadd.f32 %v2798, %v2736
    %v2800 = vadd.f32 %v2799, %v2737
    %v2801 = vadd.f32 %v2800, %v2738
    %v2802 = vadd.f32 %v2801, %v2739
    %v2803 = vadd.f32 %v2802, %v2740
    %v2804 = vadd.f32 %v2803, %v2741
    %v2805 = vadd.f32 %v2804, %v2742
    %v2806 = vadd.f32 %v2805, %v2743
    %v2807 = vadd.f32 %v2806, %v2744
    %v2808 = vadd.f32 %v2807, %v2745
    %v2809 = vadd.f32 %v2808, %v2746
    %v2810 = vadd.f32 %v2809, %v2747
    %v2811 = vadd.f32 %v2810, %v2748
    %v2812 = vadd.f32 %v2811, %v2749
    %v2813 = vadd.f32 %v2812, %v2750
    %v2814 = vadd.f32 %v2813, %v2751
    %v2815 = vadd.f32 %v2814, %v2752
    %v2816 = vrot.slane %v2815, 4
    %v2817 = vadd.f32 %v2815, %v2816
    %v2818 = vrot.slane %v2817, 2
    %v2819 = vadd.f32 %v2817, %v2818
    %v2820 = vrot.slane %v2819, 1
    %v2821 = vadd.f32 %v2819, %v2820
    %2822 = vst [vmem:[#allocation2] sm:$0x1] %v2821
    %v2823 = vsub.f32 %v2046, %v20
    %v2824 = vsub.f32 %v2049, %v21
    %v2825 = vsub.f32 %v2052, %v22
    %v2826 = vsub.f32 %v2055, %v23
    %v2827 = vsub.f32 %v2058, %v24
    %v2828 = vsub.f32 %v2061, %v25
    %v2829 = vsub.f32 %v2064, %v26
    %v2830 = vsub.f32 %v2067, %v27
    %v2831 = vsub.f32 %v2070, %v28
    %v2832 = vsub.f32 %v2073, %v29
    %v2833 = vsub.f32 %v2076, %v30
    %v2834 = vsub.f32 %v2079, %v31
    %v2835 = vsub.f32 %v2082, %v32
    %v2836 = vsub.f32 %v2085, %v33
    %v2837 = vsub.f32 %v2088, %v34
    %v2838 = vsub.f32 %v2091, %v35
    %v2839 = vsub.f32 %v2094, %v36
    %v2840 = vsub.f32 %v2097, %v37
    %v2841 = vsub.f32 %v2100, %v38
    %v2842 = vsub.f32 %v2103, %v39
    %v2843 = vsub.f32 %v2106, %v40
    %v2844 = vsub.f32 %v2109, %v41
    %v2845 = vsub.f32 %v2112, %v42
    %v2846 = vsub.f32 %v2115, %v43
    %v2847 = vsub.f32 %v2118, %v44
    %v2848 = vsub.f32 %v2121, %v45
    %v2849 = vsub.f32 %v2124, %v46
    %v2850 = vsub.f32 %v2127, %v47
    %v2851 = vsub.f32 %v2130, %v48
    %v2852 = vsub.f32 %v2133, %v49
    %v2853 = vsub.f32 %v2136, %v50
    %v2854 = vsub.f32 %v2139, %v51
    %v2855 = vsub.f32 %v2142, %v52
    %v2856 = vsub.f32 %v2145, %v53
    %v2857 = vsub.f32 %v2148, %v54
    %v2858 = vsub.f32 %v2151, %v55
    %v2859 = vsub.f32 %v2154, %v56
    %v2860 = vsub.f32 %v2157, %v57
    %v2861 = vsub.f32 %v2160, %v58
    %v2862 = vsub.f32 %v2163, %v59
    %v2863 = vsub.f32 %v2166, %v60
    %v2864 = vsub.f32 %v2169, %v61
    %v2865 = vsub.f32 %v2172, %v62
    %v2866 = vsub.f32 %v2175, %v63
    %v2867 = vsub.f32 %v2178, %v64
    %v2868 = vsub.f32 %v2181, %v65
    %v2869 = vsub.f32 %v2184, %v66
    %v2870 = vsub.f32 %v2187, %v67
    %v2871 = vsub.f32 %v2190, %v68
    %v2872 = vsub.f32 %v2193, %v69
    %v2873 = vsub.f32 %v2196, %v70
    %v2874 = vsub.f32 %v2199, %v71
    %v2875 = vsub.f32 %v2202, %v72
    %v2876 = vsub.f32 %v2205, %v73
    %v2877 = vsub.f32 %v2208, %v74
    %v2878 = vsub.f32 %v2211, %v75
    %v2879 = vsub.f32 %v2214, %v76
    %v2880 = vsub.f32 %v2217, %v77
    %v2881 = vsub.f32 %v2220, %v78
    %v2882 = vsub.f32 %v2223, %v79
    %v2883 = vsub.f32 %v2226, %v80
    %v2884 = vsub.f32 %v2229, %v81
    %v2885 = vsub.f32 %v2232, %v82
    %v2886 = vsub.f32 %v2235, %v83
    %v2887 = vmul.f32 %v2823, %v2823
    %v2888 = vmul.f32 %v2824, %v2824
    %v2889 = vmul.f32 %v2825, %v2825
    %v2890 = vmul.f32 %v2826, %v2826
    %v2891 = vmul.f32 %v2827, %v2827
    %v2892 = vmul.f32 %v2828, %v2828
    %v2893 = vmul.f32 %v2829, %v2829
    %v2894 = vmul.f32 %v2830, %v2830
    %v2895 = vmul.f32 %v2831, %v2831
    %v2896 = vmul.f32 %v2832, %v2832
    %v2897 = vmul.f32 %v2833, %v2833
    %v2898 = vmul.f32 %v2834, %v2834
    %v2899 = vmul.f32 %v2835, %v2835
    %v2900 = vmul.f32 %v2836, %v2836
    %v2901 = vmul.f32 %v2837, %v2837
    %v2902 = vmul.f32 %v2838, %v2838
    %v2903 = vmul.f32 %v2839, %v2839
    %v2904 = vmul.f32 %v2840, %v2840
    %v2905 = vmul.f32 %v2841, %v2841
    %v2906 = vmul.f32 %v2842, %v2842
    %v2907 = vmul.f32 %v2843, %v2843
    %v2908 = vmul.f32 %v2844, %v2844
    %v2909 = vmul.f32 %v2845, %v2845
    %v2910 = vmul.f32 %v2846, %v2846
    %v2911 = vmul.f32 %v2847, %v2847
    %v2912 = vmul.f32 %v2848, %v2848
    %v2913 = vmul.f32 %v2849, %v2849
    %v2914 = vmul.f32 %v2850, %v2850
    %v2915 = vmul.f32 %v2851, %v2851
    %v2916 = vmul.f32 %v2852, %v2852
    %v2917 = vmul.f32 %v2853, %v2853
    %v2918 = vmul.f32 %v2854, %v2854
    %v2919 = vmul.f32 %v2855, %v2855
    %v2920 = vmul.f32 %v2856, %v2856
    %v2921 = vmul.f32 %v2857, %v2857
    %v2922 = vmul.f32 %v2858, %v2858
    %v2923 = vmul.f32 %v2859, %v2859
    %v2924 = vmul.f32 %v2860, %v2860
    %v2925 = vmul.f32 %v2861, %v2861
    %v2926 = vmul.f32 %v2862, %v2862
    %v2927 = vmul.f32 %v2863, %v2863
    %v2928 = vmul.f32 %v2864, %v2864
    %v2929 = vmul.f32 %v2865, %v2865
    %v2930 = vmul.f32 %v2866, %v2866
    %v2931 = vmul.f32 %v2867, %v2867
    %v2932 = vmul.f32 %v2868, %v2868
    %v2933 = vmul.f32 %v2869, %v2869
    %v2934 = vmul.f32 %v2870, %v2870
    %v2935 = vmul.f32 %v2871, %v2871
    %v2936 = vmul.f32 %v2872, %v2872
    %v2937 = vmul.f32 %v2873, %v2873
    %v2938 = vmul.f32 %v2874, %v2874
    %v2939 = vmul.f32 %v2875, %v2875
    %v2940 = vmul.f32 %v2876, %v2876
    %v2941 = vmul.f32 %v2877, %v2877
    %v2942 = vmul.f32 %v2878, %v2878
    %v2943 = vmul.f32 %v2879, %v2879
    %v2944 = vmul.f32 %v2880, %v2880
    %v2945 = vmul.f32 %v2881, %v2881
    %v2946 = vmul.f32 %v2882, %v2882
    %v2947 = vmul.f32 %v2883, %v2883
    %v2948 = vmul.f32 %v2884, %v2884
    %v2949 = vmul.f32 %v2885, %v2885
    %v2950 = vmul.f32 %v2886, %v2886
    %v2951 = vsel %vm2625, %v2887, 0.0
    %v2952 = vsel %vm2626, %v2888, 0.0
    %v2953 = vsel %vm2627, %v2889, 0.0
    %v2954 = vsel %vm2628, %v2890, 0.0
    %v2955 = vsel %vm2629, %v2891, 0.0
    %v2956 = vsel %vm2630, %v2892, 0.0
    %v2957 = vsel %vm2631, %v2893, 0.0
    %v2958 = vsel %vm2632, %v2894, 0.0
    %v2959 = vsel %vm2633, %v2895, 0.0
    %v2960 = vsel %vm2634, %v2896, 0.0
    %v2961 = vsel %vm2635, %v2897, 0.0
    %v2962 = vsel %vm2636, %v2898, 0.0
    %v2963 = vsel %vm2637, %v2899, 0.0
    %v2964 = vsel %vm2638, %v2900, 0.0
    %v2965 = vsel %vm2639, %v2901, 0.0
    %v2966 = vsel %vm2640, %v2902, 0.0
    %v2967 = vsel %vm2641, %v2903, 0.0
    %v2968 = vsel %vm2642, %v2904, 0.0
    %v2969 = vsel %vm2643, %v2905, 0.0
    %v2970 = vsel %vm2644, %v2906, 0.0
    %v2971 = vsel %vm2645, %v2907, 0.0
    %v2972 = vsel %vm2646, %v2908, 0.0
    %v2973 = vsel %vm2647, %v2909, 0.0
    %v2974 = vsel %vm2648, %v2910, 0.0
    %v2975 = vsel %vm2649, %v2911, 0.0
    %v2976 = vsel %vm2650, %v2912, 0.0
    %v2977 = vsel %vm2651, %v2913, 0.0
    %v2978 = vsel %vm2652, %v2914, 0.0
    %v2979 = vsel %vm2653, %v2915, 0.0
    %v2980 = vsel %vm2654, %v2916, 0.0
    %v2981 = vsel %vm2655, %v2917, 0.0
    %v2982 = vsel %vm2656, %v2918, 0.0
    %v2983 = vsel %vm2657, %v2919, 0.0
    %v2984 = vsel %vm2658, %v2920, 0.0
    %v2985 = vsel %vm2659, %v2921, 0.0
    %v2986 = vsel %vm2660, %v2922, 0.0
    %v2987 = vsel %vm2661, %v2923, 0.0
    %v2988 = vsel %vm2662, %v2924, 0.0
    %v2989 = vsel %vm2663, %v2925, 0.0
    %v2990 = vsel %vm2664, %v2926, 0.0
    %v2991 = vsel %vm2665, %v2927, 0.0
    %v2992 = vsel %vm2666, %v2928, 0.0
    %v2993 = vsel %vm2667, %v2929, 0.0
    %v2994 = vsel %vm2668, %v2930, 0.0
    %v2995 = vsel %vm2669, %v2931, 0.0
    %v2996 = vsel %vm2670, %v2932, 0.0
    %v2997 = vsel %vm2671, %v2933, 0.0
    %v2998 = vsel %vm2672, %v2934, 0.0
    %v2999 = vsel %vm2673, %v2935, 0.0
    %v3000 = vsel %vm2674, %v2936, 0.0
    %v3001 = vsel %vm2675, %v2937, 0.0
    %v3002 = vsel %vm2676, %v2938, 0.0
    %v3003 = vsel %vm2677, %v2939, 0.0
    %v3004 = vsel %vm2678, %v2940, 0.0
    %v3005 = vsel %vm2679, %v2941, 0.0
    %v3006 = vsel %vm2680, %v2942, 0.0
    %v3007 = vsel %vm2681, %v2943, 0.0
    %v3008 = vsel %vm2682, %v2944, 0.0
    %v3009 = vsel %vm2683, %v2945, 0.0
    %v3010 = vsel %vm2684, %v2946, 0.0
    %v3011 = vsel %vm2685, %v2947, 0.0
    %v3012 = vsel %vm2686, %v2948, 0.0
    %v3013 = vsel %vm2687, %v2949, 0.0
    %v3014 = vsel %vm2688, %v2950, 0.0
    %v3015 = vsel %vm101, %v2951, 0.0
    %v3016 = vsel %vm101, %v2952, 0.0
    %v3017 = vadd.f32 %v3015, %v3016
    %v3018 = vsel %vm101, %v2953, 0.0
    %v3019 = vadd.f32 %v3017, %v3018
    %v3020 = vsel %vm101, %v2954, 0.0
    %v3021 = vadd.f32 %v3019, %v3020
    %v3022 = vsel %vm101, %v2955, 0.0
    %v3023 = vadd.f32 %v3021, %v3022
    %v3024 = vsel %vm101, %v2956, 0.0
    %v3025 = vadd.f32 %v3023, %v3024
    %v3026 = vsel %vm101, %v2957, 0.0
    %v3027 = vadd.f32 %v3025, %v3026
    %v3028 = vsel %vm101, %v2958, 0.0
    %v3029 = vadd.f32 %v3027, %v3028
    %v3030 = vsel %vm101, %v2959, 0.0
    %v3031 = vadd.f32 %v3029, %v3030
    %v3032 = vsel %vm101, %v2960, 0.0
    %v3033 = vadd.f32 %v3031, %v3032
    %v3034 = vsel %vm101, %v2961, 0.0
    %v3035 = vadd.f32 %v3033, %v3034
    %v3036 = vsel %vm101, %v2962, 0.0
    %v3037 = vadd.f32 %v3035, %v3036
    %v3038 = vsel %vm101, %v2963, 0.0
    %v3039 = vadd.f32 %v3037, %v3038
    %v3040 = vsel %vm101, %v2964, 0.0
    %v3041 = vadd.f32 %v3039, %v3040
    %v3042 = vsel %vm101, %v2965, 0.0
    %v3043 = vadd.f32 %v3041, %v3042
    %v3044 = vsel %vm101, %v2966, 0.0
    %v3045 = vadd.f32 %v3043, %v3044
    %v3046 = vsel %vm101, %v2967, 0.0
    %v3047 = vadd.f32 %v3045, %v3046
    %v3048 = vsel %vm101, %v2968, 0.0
    %v3049 = vadd.f32 %v3047, %v3048
    %v3050 = vsel %vm101, %v2969, 0.0
    %v3051 = vadd.f32 %v3049, %v3050
    %v3052 = vsel %vm101, %v2970, 0.0
    %v3053 = vadd.f32 %v3051, %v3052
    %v3054 = vsel %vm101, %v2971, 0.0
    %v3055 = vadd.f32 %v3053, %v3054
    %v3056 = vsel %vm101, %v2972, 0.0
    %v3057 = vadd.f32 %v3055, %v3056
    %v3058 = vsel %vm101, %v2973, 0.0
    %v3059 = vadd.f32 %v3057, %v3058
    %v3060 = vsel %vm101, %v2974, 0.0
    %v3061 = vadd.f32 %v3059, %v3060
    %v3062 = vsel %vm101, %v2975, 0.0
    %v3063 = vadd.f32 %v3061, %v3062
    %v3064 = vsel %vm101, %v2976, 0.0
    %v3065 = vadd.f32 %v3063, %v3064
    %v3066 = vsel %vm101, %v2977, 0.0
    %v3067 = vadd.f32 %v3065, %v3066
    %v3068 = vsel %vm101, %v2978, 0.0
    %v3069 = vadd.f32 %v3067, %v3068
    %v3070 = vsel %vm101, %v2979, 0.0
    %v3071 = vadd.f32 %v3069, %v3070
    %v3072 = vsel %vm101, %v2980, 0.0
    %v3073 = vadd.f32 %v3071, %v3072
    %v3074 = vsel %vm101, %v2981, 0.0
    %v3075 = vadd.f32 %v3073, %v3074
    %v3076 = vsel %vm101, %v2982, 0.0
    %v3077 = vadd.f32 %v3075, %v3076
    %v3078 = vsel %vm101, %v2983, 0.0
    %v3079 = vadd.f32 %v3077, %v3078
    %v3080 = vsel %vm101, %v2984, 0.0
    %v3081 = vadd.f32 %v3079, %v3080
    %v3082 = vsel %vm101, %v2985, 0.0
    %v3083 = vadd.f32 %v3081, %v3082
    %v3084 = vsel %vm101, %v2986, 0.0
    %v3085 = vadd.f32 %v3083, %v3084
    %v3086 = vsel %vm101, %v2987, 0.0
    %v3087 = vadd.f32 %v3085, %v3086
    %v3088 = vsel %vm101, %v2988, 0.0
    %v3089 = vadd.f32 %v3087, %v3088
    %v3090 = vsel %vm101, %v2989, 0.0
    %v3091 = vadd.f32 %v3089, %v3090
    %v3092 = vsel %vm101, %v2990, 0.0
    %v3093 = vadd.f32 %v3091, %v3092
    %v3094 = vsel %vm101, %v2991, 0.0
    %v3095 = vadd.f32 %v3093, %v3094
    %v3096 = vsel %vm101, %v2992, 0.0
    %v3097 = vadd.f32 %v3095, %v3096
    %v3098 = vsel %vm101, %v2993, 0.0
    %v3099 = vadd.f32 %v3097, %v3098
    %v3100 = vsel %vm101, %v2994, 0.0
    %v3101 = vadd.f32 %v3099, %v3100
    %v3102 = vsel %vm101, %v2995, 0.0
    %v3103 = vadd.f32 %v3101, %v3102
    %v3104 = vsel %vm101, %v2996, 0.0
    %v3105 = vadd.f32 %v3103, %v3104
    %v3106 = vsel %vm101, %v2997, 0.0
    %v3107 = vadd.f32 %v3105, %v3106
    %v3108 = vsel %vm101, %v2998, 0.0
    %v3109 = vadd.f32 %v3107, %v3108
    %v3110 = vsel %vm101, %v2999, 0.0
    %v3111 = vadd.f32 %v3109, %v3110
    %v3112 = vsel %vm101, %v3000, 0.0
    %v3113 = vadd.f32 %v3111, %v3112
    %v3114 = vsel %vm101, %v3001, 0.0
    %v3115 = vadd.f32 %v3113, %v3114
    %v3116 = vsel %vm101, %v3002, 0.0
    %v3117 = vadd.f32 %v3115, %v3116
    %v3118 = vsel %vm101, %v3003, 0.0
    %v3119 = vadd.f32 %v3117, %v3118
    %v3120 = vsel %vm101, %v3004, 0.0
    %v3121 = vadd.f32 %v3119, %v3120
    %v3122 = vsel %vm101, %v3005, 0.0
    %v3123 = vadd.f32 %v3121, %v3122
    %v3124 = vsel %vm101, %v3006, 0.0
    %v3125 = vadd.f32 %v3123, %v3124
    %v3126 = vsel %vm101, %v3007, 0.0
    %v3127 = vadd.f32 %v3125, %v3126
    %v3128 = vsel %vm101, %v3008, 0.0
    %v3129 = vadd.f32 %v3127, %v3128
    %v3130 = vsel %vm101, %v3009, 0.0
    %v3131 = vadd.f32 %v3129, %v3130
    %v3132 = vsel %vm101, %v3010, 0.0
    %v3133 = vadd.f32 %v3131, %v3132
    %v3134 = vsel %vm101, %v3011, 0.0
    %v3135 = vadd.f32 %v3133, %v3134
    %v3136 = vsel %vm101, %v3012, 0.0
    %v3137 = vadd.f32 %v3135, %v3136
    %v3138 = vsel %vm101, %v3013, 0.0
    %v3139 = vadd.f32 %v3137, %v3138
    %v3140 = vsel %vm101, %v3014, 0.0
    %v3141 = vadd.f32 %v3139, %v3140
    %v3142 = vrot.slane %v3141, 4
    %v3143 = vadd.f32 %v3141, %v3142
    %v3144 = vrot.slane %v3143, 2
    %v3145 = vadd.f32 %v3143, %v3144
    %v3146 = vrot.slane %v3145, 1
    %v3147 = vadd.f32 %v3145, %v3146
    %vm3148 = vcmask 516096
    %3149 = vst.msk [vmem:[#allocation4] sm:$0x1] %vm3148, %v3147
    // Predicated region
    $region14: #{tpu_custom_call.1} parent=1 // pred_check
      _
    $region15: #{tpu_custom_call.1} parent=1 // pred_check_branch
      %3151 = sbr.rel (0) target = $region17
    $region16: #{tpu_custom_call.1} parent=1 // pred_region
      _
    $region17: #{tpu_custom_call.1} parent=1 // pred_fallthru
      _
    // Predicated region
    $region18: #{tpu_custom_call.1} parent=1 // pred_check
      _
    $region19: #{tpu_custom_call.1} parent=1 // pred_check_branch
      %3153 = sbr.rel (0) target = $region21
    $region20: #{tpu_custom_call.1} parent=1 // pred_region
      _
    $region21: #{tpu_custom_call.1} parent=1 // pred_fallthru
      _
    // Predicated region
    $region22: #{tpu_custom_call.1} parent=1 // pred_check
      _
    $region23: #{tpu_custom_call.1} parent=1 // pred_check_branch
      %3155 = sbr.rel (0) target = $region25
    $region24: #{tpu_custom_call.1} parent=1 // pred_region
      %3157 = vsyncadd [#allocation3], 0
      %s3159 = sshll.u32 [#allocation2], 4
      %s3160 = int_to_ptr.vmem [resolvable:$true] %s3159
      %s3161 = sshll.u32 %s5, 4
      %s3162 = int_to_ptr.hbm [resolvable:$true] %s3161
      %3164 = dma.vmem_to_hbm [thread:$0]  %s3160, 16, %s3162, [#allocation3]
    $region25: #{tpu_custom_call.1} parent=1 // pred_fallthru
      _
    // Predicated region
    $region26: #{tpu_custom_call.1} parent=1 // pred_check
      _
    $region27: #{tpu_custom_call.1} parent=1 // pred_check_branch
      %3166 = sbr.rel (0) target = $region29
    $region28: #{tpu_custom_call.1} parent=1 // pred_region
      %3168 = vsyncadd [#allocation5], 0
      %s3170 = sshll.u32 [#allocation4], 4
      %s3171 = int_to_ptr.vmem [resolvable:$true] %s3170
      %s3172 = sshll.u32 %s6, 4
      %s3173 = int_to_ptr.hbm [resolvable:$true] %s3172
      %3175 = dma.vmem_to_hbm [thread:$0]  %s3171, 16, %s3173, [#allocation5]
    $region29: #{tpu_custom_call.1} parent=1 // pred_fallthru
      _
    // Predicated region
    $region30: #{tpu_custom_call.1} parent=1 // pred_check
      _
    $region31: #{tpu_custom_call.1} parent=1 // pred_check_branch
      %3177 = sbr.rel (0) target = $region33
    $region32: #{tpu_custom_call.1} parent=1 // pred_region
      _
    $region33: #{tpu_custom_call.1} parent=1 // pred_fallthru
      _
    // Predicated region
    $region34: #{tpu_custom_call.1} parent=1 // pred_check
      _
    $region35: #{tpu_custom_call.1} parent=1 // pred_check_branch
      %3179 = sbr.rel (0) target = $region37
    $region36: #{tpu_custom_call.1} parent=1 // pred_region
      _
    $region37: #{tpu_custom_call.1} parent=1 // pred_fallthru
      _
    // Predicated region
    $region38: #{tpu_custom_call.1} parent=1 // pred_check
      _
    $region39: #{tpu_custom_call.1} parent=1 // pred_check_branch
      %3181 = sbr.rel (0) target = $region41
    $region40: #{tpu_custom_call.1} parent=1 // pred_region
      %3183 = dma.done [#allocation3], 16
    $region41: #{tpu_custom_call.1} parent=1 // pred_fallthru
      _
    // Predicated region
    $region42: #{tpu_custom_call.1} parent=1 // pred_check
      _
    $region43: #{tpu_custom_call.1} parent=1 // pred_check_branch
      %3185 = sbr.rel (0) target = $region45
    $region44: #{tpu_custom_call.1} parent=1 // pred_region
      %3187 = dma.done [#allocation5], 16
    $region45: #{tpu_custom_call.1} parent=1 // pred_fallthru
      _
    %3188 = vsyncpa [#allocation3], 1
    %3189 = vsyncpa [#allocation5], 1

</llo_original>
